<compile_context>
chip_gen: v7x
topology: tpu7x:2x2x1
jax: 0.10.0
libtpu: 0.0.40
codegen_flags: <defaults>
</compile_context>

<pallas_src>
import jax
import jax.numpy as jnp
from jax.experimental import pallas as pl
from jax.experimental.pallas import tpu as pltpu


def _crf_logz_kernel(score_ref, emis_ref, keep_ref, exp_trans_t_ref, eos_ref,
                     out_ref, alpha_ref):
    # score_ref:       (1, Bt)      gold-path (numerator) score, f32
    # emis_ref:        (Tt, D, Bt)  emissions, time-major, tag-on-sublane / batch-on-lane
    #                               (sos transition already folded into global step 0)
    # keep_ref:        (Tt, Bt)     1.0 where mask==True (padding -> keep previous alpha)
    # exp_trans_t_ref: (D, D)       exp(transitions).T
    # eos_ref:         (D, 1)       eos transition scores
    # out_ref:         (1, Bt)      NLL per batch element (lane-dense)
    # alpha_ref:       (D, Bt) f32  forward-algorithm state (scratch, carried across t tiles)
    t_tile = emis_ref.shape[0]
    t_idx = pl.program_id(1)

    @pl.when(t_idx == 0)
    def _init():
        # global step 0: alpha = sos + emissions[0]  (sos pre-folded in the wrapper)
        alpha_ref[...] = emis_ref[0].astype(jnp.float32)

    exp_trans_t = exp_trans_t_ref[...]            # loop-invariant: loaded once

    def step(i, carry):
        alpha = alpha_ref[...]                                    # (D, Bt)
        emis_t = emis_ref[i].astype(jnp.float32)                  # (D, Bt)
        keep_t = keep_ref[pl.ds(i, 1), :] > 0.5                   # (1, Bt)
        m = jnp.max(alpha, axis=0, keepdims=True)                 # (1, Bt)
        p = jnp.exp(alpha - m)                                    # (D, Bt)
        nxt = jnp.log(
            jnp.dot(exp_trans_t, p,
                    preferred_element_type=jnp.float32,
                    precision=jax.lax.Precision.HIGHEST)) + m + emis_t
        alpha_ref[...] = jnp.where(keep_t, alpha, nxt)
        return carry

    # keep[global step 0] is forced to 1.0 in the wrapper, so iterating the full tile is
    # correct for the first time-tile as well (the i==0 update there is a no-op).
    jax.lax.fori_loop(0, t_tile, step, 0, unroll=t_tile <= 16)

    @pl.when(t_idx == pl.num_programs(1) - 1)
    def _finalize():
        z = alpha_ref[...] + eos_ref[...]                         # (D, Bt)
        mz = jnp.max(z, axis=0, keepdims=True)                    # (1, Bt)
        log_z = jnp.log(jnp.sum(jnp.exp(z - mz), axis=0, keepdims=True)) + mz
        out_ref[...] = log_z - score_ref[...]


def _gold_path_score(emissions, tag_ids, mask, sos, trans, eos):
    """Numerator of the CRF log-likelihood. Pure gathers -> plain JAX glue (time-major)."""
    T, B, _ = emissions.shape
    barange = jnp.arange(B)
    emissions = emissions.astype(jnp.float32)
    score = sos[tag_ids[0]] + emissions[0, barange, tag_ids[0]]
    if T > 1:
        prev, cur = tag_ids[:-1], tag_ids[1:]                                 # (T-1, B)
        trans_sc = trans[prev, cur]                                           # (T-1, B)
        emit_sc = jnp.take_along_axis(emissions[1:], cur[..., None], axis=-1)[..., 0]
        score = score + jnp.sum(jnp.where(mask[1:], 0.0, trans_sc + emit_sc), axis=0)
    last_idx = T - 1 - jnp.sum(mask.astype(jnp.int32), axis=0)
    score = score + eos[tag_ids[last_idx, barange]]
    return score


def crf_nll(emissions, tag_ids, mask, sos, trans, eos, batch_first=True,
            t_tile=None, b_tile=None):
    """Negative log-likelihood of a linear-chain CRF (matches CRF.forward)."""
    if batch_first:
        emissions = jnp.transpose(emissions, (1, 0, 2))   # -> (T, B, D)
        tag_ids = tag_ids.T                               # -> (T, B)
        mask = mask.T                                     # -> (T, B)
    T, B, D = emissions.shape

    sos = sos.astype(jnp.float32)
    trans = trans.astype(jnp.float32)
    eos = eos.astype(jnp.float32)

    # ---- numerator: gold-path score (pure gathers; plain-JAX glue) ----
    score = _gold_path_score(emissions, tag_ids, mask, sos, trans, eos)       # (B,)

    # ---- kernel inputs (denominator / forward algorithm) ----
    emis = emissions.at[0].add(sos.astype(emissions.dtype))   # fold sos into step 0
    emis = jnp.transpose(emis, (0, 2, 1))                     # (T, D, B): batch on lanes
    keep = mask.astype(jnp.float32)                           # (T, B); 1.0 == padded step
    keep = keep.at[0].set(1.0)                                # step 0 handled by kernel init
    exp_trans_t = jnp.exp(trans).T                            # (D, D)
    eos_col = eos.reshape(D, 1)
    score_row = score.astype(jnp.float32).reshape(1, B)

    # ---- tiling: batch tiles ("parallel") x time tiles ("arbitrary"/sequential) ----
    itemsize = jnp.dtype(emis.dtype).itemsize
    if b_tile is None:
        b_tile = B if B <= 512 else 256
    if b_tile >= B:
        b_tile, b_pad = B, B
    else:
        b_tile = max(128, (b_tile // 128) * 128)              # sub-batch tiles: lane aligned
        b_pad = pl.cdiv(B, b_tile) * b_tile
    if t_tile is None:
        budget = 2 * 1024 * 1024                              # bytes per emissions block
        t_tile = max(1, min(T, budget // max(1, D * b_tile * itemsize)))
    if t_tile >= T:
        t_tile, t_pad = T, T
    else:
        t_tile = max(8, (t_tile // 8) * 8)                    # sub-T tiles: sublane aligned
        t_pad = pl.cdiv(T, t_tile) * t_tile

    if t_pad != T or b_pad != B:
        emis = jnp.pad(emis, ((0, t_pad - T), (0, 0), (0, b_pad - B)))
        keep = jnp.pad(keep, ((0, t_pad - T), (0, b_pad - B)), constant_values=1.0)
        score_row = jnp.pad(score_row, ((0, 0), (0, b_pad - B)))

    grid = (b_pad // b_tile, t_pad // t_tile)
    out = pl.pallas_call(
        _crf_logz_kernel,
        out_shape=jax.ShapeDtypeStruct((1, b_pad), jnp.float32),
        grid=grid,
        in_specs=[
            pl.BlockSpec((1, b_tile), lambda b, t: (0, b)),             # gold score
            pl.BlockSpec((t_tile, D, b_tile), lambda b, t: (t, 0, b)),  # emissions
            pl.BlockSpec((t_tile, b_tile), lambda b, t: (t, b)),        # keep mask
            pl.BlockSpec((D, D), lambda b, t: (0, 0)),                  # exp(trans).T
            pl.BlockSpec((D, 1), lambda b, t: (0, 0)),                  # eos
        ],
        out_specs=pl.BlockSpec((1, b_tile), lambda b, t: (0, b)),
        scratch_shapes=[pltpu.VMEM((D, b_tile), jnp.float32)],
        compiler_params=pltpu.CompilerParams(
            dimension_semantics=("parallel", "arbitrary")),
    )(score_row, emis, keep, exp_trans_t, eos_col)
    return out[0, :B]


def crf_nll_ref(emissions, tag_ids, mask, sos, trans, eos, batch_first=True):
    """Pure-JAX reference mirroring the PyTorch module line-by-line."""
    if batch_first:
        emissions = jnp.transpose(emissions, (1, 0, 2))
        tag_ids = tag_ids.T
        mask = mask.T
    T, B, D = emissions.shape
    barange = jnp.arange(B)

    # _compute_log_scores
    score = sos[tag_ids[0]] + emissions[0, barange, tag_ids[0]]
    for t in range(1, T):
        nxt = score + trans[tag_ids[t - 1], tag_ids[t]] + emissions[t, barange, tag_ids[t]]
        score = jnp.where(mask[t], score, nxt)
    last_idx = T - 1 - jnp.sum(mask, axis=0)
    score = score + eos[tag_ids[last_idx, barange]]

    # _compute_log_partitions
    alpha = sos[None, :] + emissions[0]
    for t in range(1, T):
        nxt = jax.scipy.special.logsumexp(
            alpha[:, :, None] + trans[None, :, :] + emissions[t][:, None, :], axis=1)
        alpha = jnp.where(mask[t][:, None], alpha, nxt)
    log_z = jax.scipy.special.logsumexp(alpha + eos[None, :], axis=1)
    return log_z - score


def init_crf_params(key, tag_dim, pad_idx=None):
    """Deterministic parameter init mirroring CRF.__init__ (uniform(-0.1, 0.1))."""
    k1, k2, k3 = jax.random.split(key, 3)
    sos = jax.random.uniform(k1, (tag_dim,), jnp.float32, -0.1, 0.1)
    trans = jax.random.uniform(k2, (tag_dim, tag_dim), jnp.float32, -0.1, 0.1)
    eos = jax.random.uniform(k3, (tag_dim,), jnp.float32, -0.1, 0.1)
    if pad_idx is not None:
        sos = sos.at[pad_idx].set(-10000.0)
        trans = trans.at[pad_idx, :].set(-10000.0)
        trans = trans.at[:, pad_idx].set(-10000.0)
        eos = eos.at[pad_idx].set(-10000.0)
    return sos, trans, eos


if __name__ == "__main__":
    B, T, D = 4, 8, 16  # batch, step, tag_dim
    key = jax.random.PRNGKey(0)
    kp, ke, kt = jax.random.split(key, 3)

    sos, trans, eos = init_crf_params(kp, D, pad_idx=None)

    emissions = jax.random.normal(ke, (B, T, D), jnp.float32)        # (batch, step, tag_dim)
    tag_ids = jax.random.randint(kt, (B, T), 0, D, dtype=jnp.int32)  # (batch, step)
    lengths = jnp.array([8, 5, 8, 3], dtype=jnp.int32)
    # In this module's convention, mask==True marks PADDED positions.
    mask = jnp.arange(T)[None, :] >= lengths[:, None]                # (batch, step) bool

    loss = jax.jit(crf_nll)(emissions, tag_ids, mask, sos, trans, eos)
    loss = jax.block_until_ready(loss)

    ref = crf_nll_ref(emissions, tag_ids, mask, sos, trans, eos)
    assert loss.shape == (B,)
    assert jnp.allclose(loss, ref, atol=1e-3, rtol=1e-3), (loss, ref)

    # TODO(synk): CRF.decode() (Viterbi backtracking into variable-length Python lists) is
    # host-side data-dependent control flow and is not implemented as a kernel.
    print("KERNEL_OK")
</pallas_src>

<mosaic_0001>
module attributes {stable_mosaic.version = 11 : i64} {
  func.func @_crf_logz_kernel(%arg0: i32, %arg1: i32, %arg2: memref<1x4xf32, #tpu.memory_space<vmem>>, %arg3: memref<8x16x4xf32, #tpu.memory_space<vmem>>, %arg4: memref<8x4xf32, #tpu.memory_space<vmem>>, %arg5: memref<16x16xf32, #tpu.memory_space<vmem>>, %arg6: memref<16x1xf32, #tpu.memory_space<vmem>>, %arg7: memref<1x4xf32, #tpu.memory_space<vmem>>, %arg8: memref<16x4xf32, #tpu.memory_space<vmem>>) attributes {dimension_semantics = [#tpu.dimension_semantics<parallel>, #tpu.dimension_semantics<arbitrary>], iteration_bounds = array<i64: 1, 1>, scalar_prefetch = 0 : i64, scratch_operands = 1 : i64, tpu.core_type = #tpu.core_type<tc>, window_params = [{transform_indices = @transform_0, window_bounds = array<i64: 1, 4>}, {transform_indices = @transform_1, window_bounds = array<i64: 8, 16, 4>}, {transform_indices = @transform_2, window_bounds = array<i64: 8, 4>}, {pipeline_mode = #tpu.pipeline_mode<synchronous>, transform_indices = @transform_3, window_bounds = array<i64: 16, 16>}, {pipeline_mode = #tpu.pipeline_mode<synchronous>, transform_indices = @transform_4, window_bounds = array<i64: 16, 1>}, {transform_indices = @transform_5, window_bounds = array<i64: 1, 4>}]} {
    %c0_i32 = arith.constant 0 : i32
    %0 = arith.cmpi eq, %arg1, %c0_i32 : i32
    %1 = arith.extui %0 : i1 to i32
    %c0_i32_0 = arith.constant 0 : i32
    %2 = arith.cmpi ne, %1, %c0_i32_0 : i32
    scf.if %2 {
      %c0_84 = arith.constant 0 : index
      %c0_85 = arith.constant 0 : index
      %c0_86 = arith.constant 0 : index
      %183 = vector.load %arg3[%c0_84, %c0_85, %c0_86] : memref<8x16x4xf32, #tpu.memory_space<vmem>>, vector<1x16x4xf32>
      %184 = vector.shape_cast %183 : vector<1x16x4xf32> to vector<16x4xf32>
      %c0_87 = arith.constant 0 : index
      %c0_88 = arith.constant 0 : index
      %185 = vector.load %arg8[%c0_87, %c0_88] : memref<16x4xf32, #tpu.memory_space<vmem>>, vector<16x4xf32>
      tpu.vector_store %arg8[%c0_87, %c0_88], %184 {strides = array<i32>} : memref<16x4xf32, #tpu.memory_space<vmem>>, vector<16x4xf32>,
    } else {
    }
    %c0 = arith.constant 0 : index
    %c0_1 = arith.constant 0 : index
    %3 = vector.load %arg5[%c0, %c0_1] : memref<16x16xf32, #tpu.memory_space<vmem>>, vector<16x16xf32>
    %c0_i32_2 = arith.constant 0 : i32
    %c0_3 = arith.constant 0 : index
    %c0_4 = arith.constant 0 : index
    %4 = vector.load %arg8[%c0_3, %c0_4] : memref<16x4xf32, #tpu.memory_space<vmem>>, vector<16x4xf32>
    %5 = arith.index_cast %c0_i32_2 : i32 to index
    %c0_5 = arith.constant 0 : index
    %c0_6 = arith.constant 0 : index
    %6 = vector.load %arg3[%5, %c0_5, %c0_6] : memref<8x16x4xf32, #tpu.memory_space<vmem>>, vector<1x16x4xf32>
    %7 = vector.shape_cast %6 : vector<1x16x4xf32> to vector<16x4xf32>
    %8 = arith.index_cast %c0_i32_2 : i32 to index
    %c0_7 = arith.constant 0 : index
    %9 = vector.load %arg4[%8, %c0_7] : memref<8x4xf32, #tpu.memory_space<vmem>>, vector<1x4xf32>
    %cst = arith.constant 5.000000e-01 : f32
    %10 = vector.broadcast %cst : f32 to vector<1x4xf32>
    %11 = arith.cmpf ogt, %9, %10 : vector<1x4xf32>
    %cst_8 = arith.constant dense<0xFF800000> : vector<4xf32>
    %12 = vector.multi_reduction <maximumf>, %4, %cst_8 [0] : vector<16x4xf32> to vector<4xf32>
    %13 = vector.shape_cast %12 : vector<4xf32> to vector<1x4xf32>
    %14 = vector.broadcast %13 : vector<1x4xf32> to vector<16x4xf32>
    %15 = arith.subf %4, %14 : vector<16x4xf32>
    %16 = math.exp %15 : vector<16x4xf32>
    %cst_9 = arith.constant dense<0.000000e+00> : vector<16x4xf32>
    %17 = tpu.matmul %3, %16, %cst_9 {dimension_numbers = #tpu.dot_dimension_numbers<[1], [0], [0], [1], [0, 0, 1, 1], [], []>, precision = #tpu.contract_precision<fp32>} : vector<16x16xf32>, vector<16x4xf32>, vector<16x4xf32> -> vector<16x4xf32>
    %18 = math.log %17 : vector<16x4xf32>
    %19 = vector.broadcast %13 : vector<1x4xf32> to vector<16x4xf32>
    %20 = arith.addf %18, %19 : vector<16x4xf32>
    %21 = arith.addf %20, %7 : vector<16x4xf32>
    %22 = vector.shape_cast %11 : vector<1x4xi1> to vector<1x4xi1>
    %23 = vector.broadcast %22 : vector<1x4xi1> to vector<16x4xi1>
    %24 = arith.select %23, %4, %21 : vector<16x4xi1>, vector<16x4xf32>
    %c0_10 = arith.constant 0 : index
    %c0_11 = arith.constant 0 : index
    %25 = vector.load %arg8[%c0_10, %c0_11] : memref<16x4xf32, #tpu.memory_space<vmem>>, vector<16x4xf32>
    tpu.vector_store %arg8[%c0_10, %c0_11], %24 {strides = array<i32>} : memref<16x4xf32, #tpu.memory_space<vmem>>, vector<16x4xf32>,
    %c1_i32 = arith.constant 1 : i32
    %c0_12 = arith.constant 0 : index
    %c0_13 = arith.constant 0 : index
    %26 = vector.load %arg8[%c0_12, %c0_13] : memref<16x4xf32, #tpu.memory_space<vmem>>, vector<16x4xf32>
    %27 = arith.index_cast %c1_i32 : i32 to index
    %c0_14 = arith.constant 0 : index
    %c0_15 = arith.constant 0 : index
    %28 = vector.load %arg3[%27, %c0_14, %c0_15] : memref<8x16x4xf32, #tpu.memory_space<vmem>>, vector<1x16x4xf32>
    %29 = vector.shape_cast %28 : vector<1x16x4xf32> to vector<16x4xf32>
    %30 = arith.index_cast %c1_i32 : i32 to index
    %c0_16 = arith.constant 0 : index
    %31 = vector.load %arg4[%30, %c0_16] : memref<8x4xf32, #tpu.memory_space<vmem>>, vector<1x4xf32>
    %cst_17 = arith.constant 5.000000e-01 : f32
    %32 = vector.broadcast %cst_17 : f32 to vector<1x4xf32>
    %33 = arith.cmpf ogt, %31, %32 : vector<1x4xf32>
    %cst_18 = arith.constant dense<0xFF800000> : vector<4xf32>
    %34 = vector.multi_reduction <maximumf>, %26, %cst_18 [0] : vector<16x4xf32> to vector<4xf32>
    %35 = vector.shape_cast %34 : vector<4xf32> to vector<1x4xf32>
    %36 = vector.broadcast %35 : vector<1x4xf32> to vector<16x4xf32>
    %37 = arith.subf %26, %36 : vector<16x4xf32>
    %38 = math.exp %37 : vector<16x4xf32>
    %cst_19 = arith.constant dense<0.000000e+00> : vector<16x4xf32>
    %39 = tpu.matmul %3, %38, %cst_19 {dimension_numbers = #tpu.dot_dimension_numbers<[1], [0], [0], [1], [0, 0, 1, 1], [], []>, precision = #tpu.contract_precision<fp32>} : vector<16x16xf32>, vector<16x4xf32>, vector<16x4xf32> -> vector<16x4xf32>
    %40 = math.log %39 : vector<16x4xf32>
    %41 = vector.broadcast %35 : vector<1x4xf32> to vector<16x4xf32>
    %42 = arith.addf %40, %41 : vector<16x4xf32>
    %43 = arith.addf %42, %29 : vector<16x4xf32>
    %44 = vector.shape_cast %33 : vector<1x4xi1> to vector<1x4xi1>
    %45 = vector.broadcast %44 : vector<1x4xi1> to vector<16x4xi1>
    %46 = arith.select %45, %26, %43 : vector<16x4xi1>, vector<16x4xf32>
    %c0_20 = arith.constant 0 : index
    %c0_21 = arith.constant 0 : index
    %47 = vector.load %arg8[%c0_20, %c0_21] : memref<16x4xf32, #tpu.memory_space<vmem>>, vector<16x4xf32>
    tpu.vector_store %arg8[%c0_20, %c0_21], %46 {strides = array<i32>} : memref<16x4xf32, #tpu.memory_space<vmem>>, vector<16x4xf32>,
    %c2_i32 = arith.constant 2 : i32
    %c0_22 = arith.constant 0 : index
    %c0_23 = arith.constant 0 : index
    %48 = vector.load %arg8[%c0_22, %c0_23] : memref<16x4xf32, #tpu.memory_space<vmem>>, vector<16x4xf32>
    %49 = arith.index_cast %c2_i32 : i32 to index
    %c0_24 = arith.constant 0 : index
    %c0_25 = arith.constant 0 : index
    %50 = vector.load %arg3[%49, %c0_24, %c0_25] : memref<8x16x4xf32, #tpu.memory_space<vmem>>, vector<1x16x4xf32>
    %51 = vector.shape_cast %50 : vector<1x16x4xf32> to vector<16x4xf32>
    %52 = arith.index_cast %c2_i32 : i32 to index
    %c0_26 = arith.constant 0 : index
    %53 = vector.load %arg4[%52, %c0_26] : memref<8x4xf32, #tpu.memory_space<vmem>>, vector<1x4xf32>
    %cst_27 = arith.constant 5.000000e-01 : f32
    %54 = vector.broadcast %cst_27 : f32 to vector<1x4xf32>
    %55 = arith.cmpf ogt, %53, %54 : vector<1x4xf32>
    %cst_28 = arith.constant dense<0xFF800000> : vector<4xf32>
    %56 = vector.multi_reduction <maximumf>, %48, %cst_28 [0] : vector<16x4xf32> to vector<4xf32>
    %57 = vector.shape_cast %56 : vector<4xf32> to vector<1x4xf32>
    %58 = vector.broadcast %57 : vector<1x4xf32> to vector<16x4xf32>
    %59 = arith.subf %48, %58 : vector<16x4xf32>
    %60 = math.exp %59 : vector<16x4xf32>
    %cst_29 = arith.constant dense<0.000000e+00> : vector<16x4xf32>
    %61 = tpu.matmul %3, %60, %cst_29 {dimension_numbers = #tpu.dot_dimension_numbers<[1], [0], [0], [1], [0, 0, 1, 1], [], []>, precision = #tpu.contract_precision<fp32>} : vector<16x16xf32>, vector<16x4xf32>, vector<16x4xf32> -> vector<16x4xf32>
    %62 = math.log %61 : vector<16x4xf32>
    %63 = vector.broadcast %57 : vector<1x4xf32> to vector<16x4xf32>
    %64 = arith.addf %62, %63 : vector<16x4xf32>
    %65 = arith.addf %64, %51 : vector<16x4xf32>
    %66 = vector.shape_cast %55 : vector<1x4xi1> to vector<1x4xi1>
    %67 = vector.broadcast %66 : vector<1x4xi1> to vector<16x4xi1>
    %68 = arith.select %67, %48, %65 : vector<16x4xi1>, vector<16x4xf32>
    %c0_30 = arith.constant 0 : index
    %c0_31 = arith.constant 0 : index
    %69 = vector.load %arg8[%c0_30, %c0_31] : memref<16x4xf32, #tpu.memory_space<vmem>>, vector<16x4xf32>
    tpu.vector_store %arg8[%c0_30, %c0_31], %68 {strides = array<i32>} : memref<16x4xf32, #tpu.memory_space<vmem>>, vector<16x4xf32>,
    %c3_i32 = arith.constant 3 : i32
    %c0_32 = arith.constant 0 : index
    %c0_33 = arith.constant 0 : index
    %70 = vector.load %arg8[%c0_32, %c0_33] : memref<16x4xf32, #tpu.memory_space<vmem>>, vector<16x4xf32>
    %71 = arith.index_cast %c3_i32 : i32 to index
    %c0_34 = arith.constant 0 : index
    %c0_35 = arith.constant 0 : index
    %72 = vector.load %arg3[%71, %c0_34, %c0_35] : memref<8x16x4xf32, #tpu.memory_space<vmem>>, vector<1x16x4xf32>
    %73 = vector.shape_cast %72 : vector<1x16x4xf32> to vector<16x4xf32>
    %74 = arith.index_cast %c3_i32 : i32 to index
    %c0_36 = arith.constant 0 : index
    %75 = vector.load %arg4[%74, %c0_36] : memref<8x4xf32, #tpu.memory_space<vmem>>, vector<1x4xf32>
    %cst_37 = arith.constant 5.000000e-01 : f32
    %76 = vector.broadcast %cst_37 : f32 to vector<1x4xf32>
    %77 = arith.cmpf ogt, %75, %76 : vector<1x4xf32>
    %cst_38 = arith.constant dense<0xFF800000> : vector<4xf32>
    %78 = vector.multi_reduction <maximumf>, %70, %cst_38 [0] : vector<16x4xf32> to vector<4xf32>
    %79 = vector.shape_cast %78 : vector<4xf32> to vector<1x4xf32>
    %80 = vector.broadcast %79 : vector<1x4xf32> to vector<16x4xf32>
    %81 = arith.subf %70, %80 : vector<16x4xf32>
    %82 = math.exp %81 : vector<16x4xf32>
    %cst_39 = arith.constant dense<0.000000e+00> : vector<16x4xf32>
    %83 = tpu.matmul %3, %82, %cst_39 {dimension_numbers = #tpu.dot_dimension_numbers<[1], [0], [0], [1], [0, 0, 1, 1], [], []>, precision = #tpu.contract_precision<fp32>} : vector<16x16xf32>, vector<16x4xf32>, vector<16x4xf32> -> vector<16x4xf32>
    %84 = math.log %83 : vector<16x4xf32>
    %85 = vector.broadcast %79 : vector<1x4xf32> to vector<16x4xf32>
    %86 = arith.addf %84, %85 : vector<16x4xf32>
    %87 = arith.addf %86, %73 : vector<16x4xf32>
    %88 = vector.shape_cast %77 : vector<1x4xi1> to vector<1x4xi1>
    %89 = vector.broadcast %88 : vector<1x4xi1> to vector<16x4xi1>
    %90 = arith.select %89, %70, %87 : vector<16x4xi1>, vector<16x4xf32>
    %c0_40 = arith.constant 0 : index
    %c0_41 = arith.constant 0 : index
    %91 = vector.load %arg8[%c0_40, %c0_41] : memref<16x4xf32, #tpu.memory_space<vmem>>, vector<16x4xf32>
    tpu.vector_store %arg8[%c0_40, %c0_41], %90 {strides = array<i32>} : memref<16x4xf32, #tpu.memory_space<vmem>>, vector<16x4xf32>,
    %c4_i32 = arith.constant 4 : i32
    %c0_42 = arith.constant 0 : index
    %c0_43 = arith.constant 0 : index
    %92 = vector.load %arg8[%c0_42, %c0_43] : memref<16x4xf32, #tpu.memory_space<vmem>>, vector<16x4xf32>
    %93 = arith.index_cast %c4_i32 : i32 to index
    %c0_44 = arith.constant 0 : index
    %c0_45 = arith.constant 0 : index
    %94 = vector.load %arg3[%93, %c0_44, %c0_45] : memref<8x16x4xf32, #tpu.memory_space<vmem>>, vector<1x16x4xf32>
    %95 = vector.shape_cast %94 : vector<1x16x4xf32> to vector<16x4xf32>
    %96 = arith.index_cast %c4_i32 : i32 to index
    %c0_46 = arith.constant 0 : index
    %97 = vector.load %arg4[%96, %c0_46] : memref<8x4xf32, #tpu.memory_space<vmem>>, vector<1x4xf32>
    %cst_47 = arith.constant 5.000000e-01 : f32
    %98 = vector.broadcast %cst_47 : f32 to vector<1x4xf32>
    %99 = arith.cmpf ogt, %97, %98 : vector<1x4xf32>
    %cst_48 = arith.constant dense<0xFF800000> : vector<4xf32>
    %100 = vector.multi_reduction <maximumf>, %92, %cst_48 [0] : vector<16x4xf32> to vector<4xf32>
    %101 = vector.shape_cast %100 : vector<4xf32> to vector<1x4xf32>
    %102 = vector.broadcast %101 : vector<1x4xf32> to vector<16x4xf32>
    %103 = arith.subf %92, %102 : vector<16x4xf32>
    %104 = math.exp %103 : vector<16x4xf32>
    %cst_49 = arith.constant dense<0.000000e+00> : vector<16x4xf32>
    %105 = tpu.matmul %3, %104, %cst_49 {dimension_numbers = #tpu.dot_dimension_numbers<[1], [0], [0], [1], [0, 0, 1, 1], [], []>, precision = #tpu.contract_precision<fp32>} : vector<16x16xf32>, vector<16x4xf32>, vector<16x4xf32> -> vector<16x4xf32>
    %106 = math.log %105 : vector<16x4xf32>
    %107 = vector.broadcast %101 : vector<1x4xf32> to vector<16x4xf32>
    %108 = arith.addf %106, %107 : vector<16x4xf32>
    %109 = arith.addf %108, %95 : vector<16x4xf32>
    %110 = vector.shape_cast %99 : vector<1x4xi1> to vector<1x4xi1>
    %111 = vector.broadcast %110 : vector<1x4xi1> to vector<16x4xi1>
    %112 = arith.select %111, %92, %109 : vector<16x4xi1>, vector<16x4xf32>
    %c0_50 = arith.constant 0 : index
    %c0_51 = arith.constant 0 : index
    %113 = vector.load %arg8[%c0_50, %c0_51] : memref<16x4xf32, #tpu.memory_space<vmem>>, vector<16x4xf32>
    tpu.vector_store %arg8[%c0_50, %c0_51], %112 {strides = array<i32>} : memref<16x4xf32, #tpu.memory_space<vmem>>, vector<16x4xf32>,
    %c5_i32 = arith.constant 5 : i32
    %c0_52 = arith.constant 0 : index
    %c0_53 = arith.constant 0 : index
    %114 = vector.load %arg8[%c0_52, %c0_53] : memref<16x4xf32, #tpu.memory_space<vmem>>, vector<16x4xf32>
    %115 = arith.index_cast %c5_i32 : i32 to index
    %c0_54 = arith.constant 0 : index
    %c0_55 = arith.constant 0 : index
    %116 = vector.load %arg3[%115, %c0_54, %c0_55] : memref<8x16x4xf32, #tpu.memory_space<vmem>>, vector<1x16x4xf32>
    %117 = vector.shape_cast %116 : vector<1x16x4xf32> to vector<16x4xf32>
    %118 = arith.index_cast %c5_i32 : i32 to index
    %c0_56 = arith.constant 0 : index
    %119 = vector.load %arg4[%118, %c0_56] : memref<8x4xf32, #tpu.memory_space<vmem>>, vector<1x4xf32>
    %cst_57 = arith.constant 5.000000e-01 : f32
    %120 = vector.broadcast %cst_57 : f32 to vector<1x4xf32>
    %121 = arith.cmpf ogt, %119, %120 : vector<1x4xf32>
    %cst_58 = arith.constant dense<0xFF800000> : vector<4xf32>
    %122 = vector.multi_reduction <maximumf>, %114, %cst_58 [0] : vector<16x4xf32> to vector<4xf32>
    %123 = vector.shape_cast %122 : vector<4xf32> to vector<1x4xf32>
    %124 = vector.broadcast %123 : vector<1x4xf32> to vector<16x4xf32>
    %125 = arith.subf %114, %124 : vector<16x4xf32>
    %126 = math.exp %125 : vector<16x4xf32>
    %cst_59 = arith.constant dense<0.000000e+00> : vector<16x4xf32>
    %127 = tpu.matmul %3, %126, %cst_59 {dimension_numbers = #tpu.dot_dimension_numbers<[1], [0], [0], [1], [0, 0, 1, 1], [], []>, precision = #tpu.contract_precision<fp32>} : vector<16x16xf32>, vector<16x4xf32>, vector<16x4xf32> -> vector<16x4xf32>
    %128 = math.log %127 : vector<16x4xf32>
    %129 = vector.broadcast %123 : vector<1x4xf32> to vector<16x4xf32>
    %130 = arith.addf %128, %129 : vector<16x4xf32>
    %131 = arith.addf %130, %117 : vector<16x4xf32>
    %132 = vector.shape_cast %121 : vector<1x4xi1> to vector<1x4xi1>
    %133 = vector.broadcast %132 : vector<1x4xi1> to vector<16x4xi1>
    %134 = arith.select %133, %114, %131 : vector<16x4xi1>, vector<16x4xf32>
    %c0_60 = arith.constant 0 : index
    %c0_61 = arith.constant 0 : index
    %135 = vector.load %arg8[%c0_60, %c0_61] : memref<16x4xf32, #tpu.memory_space<vmem>>, vector<16x4xf32>
    tpu.vector_store %arg8[%c0_60, %c0_61], %134 {strides = array<i32>} : memref<16x4xf32, #tpu.memory_space<vmem>>, vector<16x4xf32>,
    %c6_i32 = arith.constant 6 : i32
    %c0_62 = arith.constant 0 : index
    %c0_63 = arith.constant 0 : index
    %136 = vector.load %arg8[%c0_62, %c0_63] : memref<16x4xf32, #tpu.memory_space<vmem>>, vector<16x4xf32>
    %137 = arith.index_cast %c6_i32 : i32 to index
    %c0_64 = arith.constant 0 : index
    %c0_65 = arith.constant 0 : index
    %138 = vector.load %arg3[%137, %c0_64, %c0_65] : memref<8x16x4xf32, #tpu.memory_space<vmem>>, vector<1x16x4xf32>
    %139 = vector.shape_cast %138 : vector<1x16x4xf32> to vector<16x4xf32>
    %140 = arith.index_cast %c6_i32 : i32 to index
    %c0_66 = arith.constant 0 : index
    %141 = vector.load %arg4[%140, %c0_66] : memref<8x4xf32, #tpu.memory_space<vmem>>, vector<1x4xf32>
    %cst_67 = arith.constant 5.000000e-01 : f32
    %142 = vector.broadcast %cst_67 : f32 to vector<1x4xf32>
    %143 = arith.cmpf ogt, %141, %142 : vector<1x4xf32>
    %cst_68 = arith.constant dense<0xFF800000> : vector<4xf32>
    %144 = vector.multi_reduction <maximumf>, %136, %cst_68 [0] : vector<16x4xf32> to vector<4xf32>
    %145 = vector.shape_cast %144 : vector<4xf32> to vector<1x4xf32>
    %146 = vector.broadcast %145 : vector<1x4xf32> to vector<16x4xf32>
    %147 = arith.subf %136, %146 : vector<16x4xf32>
    %148 = math.exp %147 : vector<16x4xf32>
    %cst_69 = arith.constant dense<0.000000e+00> : vector<16x4xf32>
    %149 = tpu.matmul %3, %148, %cst_69 {dimension_numbers = #tpu.dot_dimension_numbers<[1], [0], [0], [1], [0, 0, 1, 1], [], []>, precision = #tpu.contract_precision<fp32>} : vector<16x16xf32>, vector<16x4xf32>, vector<16x4xf32> -> vector<16x4xf32>
    %150 = math.log %149 : vector<16x4xf32>
    %151 = vector.broadcast %145 : vector<1x4xf32> to vector<16x4xf32>
    %152 = arith.addf %150, %151 : vector<16x4xf32>
    %153 = arith.addf %152, %139 : vector<16x4xf32>
    %154 = vector.shape_cast %143 : vector<1x4xi1> to vector<1x4xi1>
    %155 = vector.broadcast %154 : vector<1x4xi1> to vector<16x4xi1>
    %156 = arith.select %155, %136, %153 : vector<16x4xi1>, vector<16x4xf32>
    %c0_70 = arith.constant 0 : index
    %c0_71 = arith.constant 0 : index
    %157 = vector.load %arg8[%c0_70, %c0_71] : memref<16x4xf32, #tpu.memory_space<vmem>>, vector<16x4xf32>
    tpu.vector_store %arg8[%c0_70, %c0_71], %156 {strides = array<i32>} : memref<16x4xf32, #tpu.memory_space<vmem>>, vector<16x4xf32>,
    %c7_i32 = arith.constant 7 : i32
    %c0_72 = arith.constant 0 : index
    %c0_73 = arith.constant 0 : index
    %158 = vector.load %arg8[%c0_72, %c0_73] : memref<16x4xf32, #tpu.memory_space<vmem>>, vector<16x4xf32>
    %159 = arith.index_cast %c7_i32 : i32 to index
    %c0_74 = arith.constant 0 : index
    %c0_75 = arith.constant 0 : index
    %160 = vector.load %arg3[%159, %c0_74, %c0_75] : memref<8x16x4xf32, #tpu.memory_space<vmem>>, vector<1x16x4xf32>
    %161 = vector.shape_cast %160 : vector<1x16x4xf32> to vector<16x4xf32>
    %162 = arith.index_cast %c7_i32 : i32 to index
    %c0_76 = arith.constant 0 : index
    %163 = vector.load %arg4[%162, %c0_76] : memref<8x4xf32, #tpu.memory_space<vmem>>, vector<1x4xf32>
    %cst_77 = arith.constant 5.000000e-01 : f32
    %164 = vector.broadcast %cst_77 : f32 to vector<1x4xf32>
    %165 = arith.cmpf ogt, %163, %164 : vector<1x4xf32>
    %cst_78 = arith.constant dense<0xFF800000> : vector<4xf32>
    %166 = vector.multi_reduction <maximumf>, %158, %cst_78 [0] : vector<16x4xf32> to vector<4xf32>
    %167 = vector.shape_cast %166 : vector<4xf32> to vector<1x4xf32>
    %168 = vector.broadcast %167 : vector<1x4xf32> to vector<16x4xf32>
    %169 = arith.subf %158, %168 : vector<16x4xf32>
    %170 = math.exp %169 : vector<16x4xf32>
    %cst_79 = arith.constant dense<0.000000e+00> : vector<16x4xf32>
    %171 = tpu.matmul %3, %170, %cst_79 {dimension_numbers = #tpu.dot_dimension_numbers<[1], [0], [0], [1], [0, 0, 1, 1], [], []>, precision = #tpu.contract_precision<fp32>} : vector<16x16xf32>, vector<16x4xf32>, vector<16x4xf32> -> vector<16x4xf32>
    %172 = math.log %171 : vector<16x4xf32>
    %173 = vector.broadcast %167 : vector<1x4xf32> to vector<16x4xf32>
    %174 = arith.addf %172, %173 : vector<16x4xf32>
    %175 = arith.addf %174, %161 : vector<16x4xf32>
    %176 = vector.shape_cast %165 : vector<1x4xi1> to vector<1x4xi1>
    %177 = vector.broadcast %176 : vector<1x4xi1> to vector<16x4xi1>
    %178 = arith.select %177, %158, %175 : vector<16x4xi1>, vector<16x4xf32>
    %c0_80 = arith.constant 0 : index
    %c0_81 = arith.constant 0 : index
    %179 = vector.load %arg8[%c0_80, %c0_81] : memref<16x4xf32, #tpu.memory_space<vmem>>, vector<16x4xf32>
    tpu.vector_store %arg8[%c0_80, %c0_81], %178 {strides = array<i32>} : memref<16x4xf32, #tpu.memory_space<vmem>>, vector<16x4xf32>,
    %c8_i32 = arith.constant 8 : i32
    %c0_i32_82 = arith.constant 0 : i32
    %180 = arith.cmpi eq, %arg1, %c0_i32_82 : i32
    %181 = arith.extui %180 : i1 to i32
    %c0_i32_83 = arith.constant 0 : i32
    %182 = arith.cmpi ne, %181, %c0_i32_83 : i32
    scf.if %182 {
      %c0_84 = arith.constant 0 : index
      %c0_85 = arith.constant 0 : index
      %183 = vector.load %arg8[%c0_84, %c0_85] : memref<16x4xf32, #tpu.memory_space<vmem>>, vector<16x4xf32>
      %c0_86 = arith.constant 0 : index
      %c0_87 = arith.constant 0 : index
      %184 = vector.load %arg6[%c0_86, %c0_87] : memref<16x1xf32, #tpu.memory_space<vmem>>, vector<16x1xf32>
      %185 = vector.broadcast %184 : vector<16x1xf32> to vector<16x4xf32>
      %186 = arith.addf %183, %185 : vector<16x4xf32>
      %cst_88 = arith.constant dense<0xFF800000> : vector<4xf32>
      %187 = vector.multi_reduction <maximumf>, %186, %cst_88 [0] : vector<16x4xf32> to vector<4xf32>
      %188 = vector.shape_cast %187 : vector<4xf32> to vector<1x4xf32>
      %189 = vector.broadcast %188 : vector<1x4xf32> to vector<16x4xf32>
      %190 = arith.subf %186, %189 : vector<16x4xf32>
      %191 = math.exp %190 : vector<16x4xf32>
      %cst_89 = arith.constant dense<0.000000e+00> : vector<4xf32>
      %192 = vector.multi_reduction <add>, %191, %cst_89 [0] : vector<16x4xf32> to vector<4xf32>
      %193 = vector.shape_cast %192 : vector<4xf32> to vector<1x4xf32>
      %194 = math.log %193 : vector<1x4xf32>
      %195 = arith.addf %194, %188 : vector<1x4xf32>
      %c0_90 = arith.constant 0 : index
      %c0_91 = arith.constant 0 : index
      %196 = vector.load %arg2[%c0_90, %c0_91] : memref<1x4xf32, #tpu.memory_space<vmem>>, vector<1x4xf32>
      %197 = arith.subf %195, %196 : vector<1x4xf32>
      %c0_92 = arith.constant 0 : index
      %c0_93 = arith.constant 0 : index
      %198 = vector.load %arg7[%c0_92, %c0_93] : memref<1x4xf32, #tpu.memory_space<vmem>>, vector<1x4xf32>
      tpu.vector_store %arg7[%c0_92, %c0_93], %197 {strides = array<i32>} : memref<1x4xf32, #tpu.memory_space<vmem>>, vector<1x4xf32>,
    } else {
    }
    return
  }
  func.func @transform_0(%arg0: i32, %arg1: i32) -> (i32, i32) {
    %c0_i32 = arith.constant 0 : i32
    %c0_i32_0 = arith.constant 0 : i32
    return %c0_i32, %arg0 : i32, i32
  }
  func.func @transform_1(%arg0: i32, %arg1: i32) -> (i32, i32, i32) {
    %c0_i32 = arith.constant 0 : i32
    %c0_i32_0 = arith.constant 0 : i32
    return %arg1, %c0_i32, %arg0 : i32, i32, i32
  }
  func.func @transform_2(%arg0: i32, %arg1: i32) -> (i32, i32) {
    %c0_i32 = arith.constant 0 : i32
    return %arg1, %arg0 : i32, i32
  }
  func.func @transform_3(%arg0: i32, %arg1: i32) -> (i32, i32) {
    %c0_i32 = arith.constant 0 : i32
    %c0_i32_0 = arith.constant 0 : i32
    %c0_i32_1 = arith.constant 0 : i32
    return %c0_i32, %c0_i32_0 : i32, i32
  }
  func.func @transform_4(%arg0: i32, %arg1: i32) -> (i32, i32) {
    %c0_i32 = arith.constant 0 : i32
    %c0_i32_0 = arith.constant 0 : i32
    %c0_i32_1 = arith.constant 0 : i32
    return %c0_i32, %c0_i32_0 : i32, i32
  }
  func.func @transform_5(%arg0: i32, %arg1: i32) -> (i32, i32) {
    %c0_i32 = arith.constant 0 : i32
    %c0_i32_0 = arith.constant 0 : i32
    return %c0_i32, %arg0 : i32, i32
  }
}

</mosaic_0001>

<llo_original>
// kernel: crf_nll.1
$region0: #{crf_nll.1}
  #allocation0 [shape = 'u32[]', space=smem, size = 0x4, offset = 0x4, fixed_abs, tag = 'smem constant byte address 0x4 - core index']
  #allocation1 [shape = 'u32[144,128]{1,0:T(1,128)}', space=vmem, size = 0x12000, scoped, tag = 'internal scratch']
  #allocation2 [shape = 'f32[16,4]{1,0:T(8,128)}', space=vmem, size = 0x2000, scoped, tag = 'scratch operand']
  %s0 = inlined_call_operand.vmem [shape: f32[1,4], index: 0, kind: input, shape index: {}]
  %s1 = inlined_call_operand.vmem [shape: f32[8,16,4], index: 1, kind: input, shape index: {}]
  %s2 = inlined_call_operand.vmem [shape: f32[8,4], index: 2, kind: input, shape index: {}]
  %s3 = inlined_call_operand.vmem [shape: f32[16,16], index: 3, kind: input, shape index: {}]
  %s4 = inlined_call_operand.vmem [shape: f32[16,1], index: 4, kind: input, shape index: {}]
  %s5 = inlined_call_operand.hbm [shape: f32[1,4], index: 5, kind: output, shape index: {}]
  %s6 = sld [smem:[#allocation0]]
  $region38: #{crf_nll.1} parent=0
    _
  %s8 = ssub.s32 1, %s6
  %s9 = scalar_select 0, %s8, %s6
  $region1: #{crf_nll.1} parent=0
    #allocation3 [shape = 'u8[512]{0}', space=vmem, size = 0x400, scoped, tag = 'output window, operand 0, single buffered']
    #allocation4 [shape = 's32[1]{0}', space=sflag, size = 0x4, scoped, tag = 'scoped memory for crf_nll.1']
    %10 = vsyncpa [#allocation4], 0
    // Predicated region
    $region2: #{crf_nll.1} parent=1 // pred_check
      _
    $region3: #{crf_nll.1} parent=1 // pred_check_branch
      %12 = sbr.rel (0) target = $region5
    $region4: #{crf_nll.1} parent=1 // pred_region
      _
    $region5: #{crf_nll.1} parent=1 // pred_fallthru
      _
    // Predicated region
    $region6: #{crf_nll.1} parent=1 // pred_check
      _
    $region7: #{crf_nll.1} parent=1 // pred_check_branch
      %14 = sbr.rel (0) target = $region9
    $region8: #{crf_nll.1} parent=1 // pred_region
      _
    $region9: #{crf_nll.1} parent=1 // pred_fallthru
      _
    // Predicated region
    $region10: #{crf_nll.1} parent=1 // pred_check
      _
    $region11: #{crf_nll.1} parent=1 // pred_check_branch
      %16 = sbr.rel (0) target = $region13
    $region12: #{crf_nll.1} parent=1 // pred_region
      _
    $region13: #{crf_nll.1} parent=1 // pred_fallthru
      _
    // Predicated region
    $region14: #{crf_nll.1} parent=1 // pred_check
      _
    $region15: #{crf_nll.1} parent=1 // pred_check_branch
      %18 = sbr.rel (0) target = $region17
    $region16: #{crf_nll.1} parent=1 // pred_region
      _
    $region17: #{crf_nll.1} parent=1 // pred_fallthru
      _
    // Predicated region
    $region18: #{crf_nll.1} parent=1 // pred_check
      _
    $region19: #{crf_nll.1} parent=1 // pred_check_branch
      %20 = sbr.rel (0) target = $region21
    $region20: #{crf_nll.1} parent=1 // pred_region
      _
    $region21: #{crf_nll.1} parent=1 // pred_fallthru
      _
    %p21 = scmp.eq.s32.totalorder 0, 0
    // Predicated region
    $region22: #{crf_nll.1} parent=1 // pred_check
      %p22 = pneg %p21
    $region23: #{crf_nll.1} parent=1 // pred_check_branch
      %24 = sbr.rel (%p22) target = $region25
    $region24: #{crf_nll.1} parent=1 // pred_region
      %v25 = vld [vmem:[%s1] sm:$0xff]
      %v26 = vld [vmem:[%s1 + $0x8] sm:$0xff]
      %vm27 = vcmask 31744
      %28 = vst.msk [vmem:[#allocation2] sm:$0xff] %vm27, %v25
      %29 = vst.msk [vmem:[#allocation2 + $0x8] sm:$0xff] %vm27, %v26
    $region25: #{crf_nll.1} parent=1 // pred_fallthru
      _
    %v30 = vld [vmem:[%s3] sm:$0xff]
    %v31 = vld [vmem:[%s3 + $0x8] sm:$0xff]
    %v32 = vld [vmem:[#allocation2] sm:$0xff]
    %v33 = vld [vmem:[#allocation2 + $0x8] sm:$0xff]
    %v34 = vld [vmem:[%s1] sm:$0xff]
    %v35 = vld [vmem:[%s1 + $0x8] sm:$0xff]
    %v36 = vld [vmem:[%s2] sm:$0x1]
    %vm37 = vcmp.gt.f32.partialorder %v36, 0.5
    %vm38 = vcmask 31744
    %v39 = vsel %vm38, %v32, -inf
    %v40 = vsel %vm38, %v33, -inf
    %v41 = vmax.f32 %v39, %v40
    %v42 = vrot.slane %v41, 4
    %v43 = vmax.f32 %v41, %v42
    %v44 = vrot.slane %v43, 2
    %v45 = vmax.f32 %v43, %v44
    %v46 = vrot.slane %v45, 1
    %v47 = vmax.f32 %v45, %v46
    %v48 = vsub.f32 %v32, %v47
    %v49 = vsub.f32 %v33, %v47
    %v50 = vmul.f32 %v48, 1.442695
    %v51 = vpow.pop %v50
    %v52 = vmul.f32 %v49, 1.442695
    %v53 = vpow.pop %v52
    %vm54 = vcmask 130048
    %v56 = vsel %vm54, %v30, 0
    %v59 = vsel %vm54, %v31, 0
    %61 = vmatprep.subr.mxu0 0.0
    %v62 = vand.u32 %v51, 4294901760
    %63 = vmatpush1.msra.mxu0 %v62
    %64 = vmatprep.subr.mxu0 0.0
    %v65 = vand.u32 %v53, 4294901760
    %66 = vmatpush1.msra.mxu0 %v65
    %67 = vmatprep.subr.mxu0 0.0
    %68 = vmatpush1.msra.mxu0 0.0
    %69 = vmatprep.subr.mxu0 0.0
    %70 = vmatpush1.msra.mxu0 0.0
    %71 = vmatprep.subr.mxu0 0.0
    %72 = vmatpush1.msra.mxu0 0.0
    %73 = vmatprep.subr.mxu0 0.0
    %74 = vmatpush1.msra.mxu0 0.0
    %75 = vmatprep.subr.mxu0 0.0
    %76 = vmatpush1.msra.mxu0 0.0
    %77 = vmatprep.subr.mxu0 0.0
    %78 = vmatpush1.msra.mxu0 0.0
    %79 = vmatprep.subr.mxu0 0.0
    %80 = vmatpush1.msra.mxu0 0.0
    %81 = vmatprep.subr.mxu0 0.0
    %82 = vmatpush1.msra.mxu0 0.0
    %83 = vmatprep.subr.mxu0 0.0
    %84 = vmatpush1.msra.mxu0 0.0
    %85 = vmatprep.subr.mxu0 0.0
    %86 = vmatpush1.msra.mxu0 0.0
    %87 = vmatprep.subr.mxu0 0.0
    %88 = vmatpush1.msra.mxu0 0.0
    %89 = vmatprep.subr.mxu0 0.0
    %90 = vmatpush1.msra.mxu0 0.0
    %91 = vmatprep.subr.mxu0 0.0
    %92 = vmatpush1.msra.mxu0 0.0
    %93 = vmatprep.subr.mxu0 0.0
    %94 = vmatpush1.msra.mxu0 0.0
    %95 = vmatprep.subr.mxu0 0.0
    %96 = vmatpush1.msra.mxu0 0.0
    %97 = vmatprep.subr.mxu0 0.0
    %98 = vmatpush1.msra.mxu0 0.0
    %99 = vmatprep.subr.mxu0 0.0
    %100 = vmatpush1.msra.mxu0 0.0
    %101 = vmatprep.subr.mxu0 0.0
    %102 = vmatpush1.msra.mxu0 0.0
    %103 = vmatprep.subr.mxu0 0.0
    %104 = vmatpush1.msra.mxu0 0.0
    %105 = vmatprep.subr.mxu0 0.0
    %106 = vmatpush1.msra.mxu0 0.0
    %107 = vmatprep.subr.mxu0 0.0
    %108 = vmatpush1.msra.mxu0 0.0
    %109 = vmatprep.subr.mxu0 0.0
    %110 = vmatpush1.msra.mxu0 0.0
    %111 = vmatprep.subr.mxu0 0.0
    %112 = vmatpush1.msra.mxu0 0.0
    %113 = vmatprep.subr.mxu0 0.0
    %114 = vmatpush1.msra.mxu0 0.0
    %115 = vmatprep.subr.mxu0 0.0
    %116 = vmatpush1.msra.mxu0 0.0
    %117 = vmatprep.subr.mxu0 0.0
    %118 = vmatpush1.msra.mxu0 0.0
    %119 = vmatprep.subr.mxu0 0.0
    %120 = vmatpush1.msra.mxu0 0.0
    %121 = vmatprep.subr.mxu0 0.0
    %122 = vmatpush1.msra.mxu0 0.0
    %123 = vmatprep.subr.mxu0 0.0
    %124 = vmatpush1.msra.mxu0 0.0
    %125 = vmatprep.subr.mxu0 0.0
    %126 = vmatpush1.msra.mxu0 0.0
    %127 = vmatprep.mubr.f32.mxu0 0.0
    %v128 = vand.u32 %v56, 4294901760
    %v129 = vsub.f32 %v56, %v128
    %v130 = vand.u32 %v129, 4294901760
    %v131 = vsub.f32 %v129, %v130
    %v132 = vand.u32 %v131, 4294901760
    %133 = vmatmul.mubr.f32.gmra.mrb[0].mxu0 %v132
    %v134 = vpop.f32.mrb[0].mxu0
    %v135 = vadd.f32 0.0, %v134
    %v136 = vpop.f32.mrb[0].mxu0
    %137 = vmatprep.mubr.f32.mxu0 0.0
    %v138 = vand.u32 %v59, 4294901760
    %v139 = vsub.f32 %v59, %v138
    %v140 = vand.u32 %v139, 4294901760
    %v141 = vsub.f32 %v139, %v140
    %v142 = vand.u32 %v141, 4294901760
    %143 = vmatmul.mubr.f32.gmra.mrb[0].mxu0 %v142
    %v144 = vpop.f32.mrb[0].mxu0
    %v145 = vadd.f32 0.0, %v144
    %v146 = vpop.f32.mrb[0].mxu0
    %147 = vdwg.mxu0
    %148 = vmatprep.subr.mxu0 0.0
    %v149 = vand.u32 %v51, 4294901760
    %v150 = vsub.f32 %v51, %v149
    %v151 = vand.u32 %v150, 4294901760
    %v152 = vsub.f32 %v150, %v151
    %v153 = vand.u32 %v152, 4294901760
    %154 = vmatpush1.msra.mxu0 %v153
    %155 = vmatprep.subr.mxu0 0.0
    %v156 = vand.u32 %v53, 4294901760
    %v157 = vsub.f32 %v53, %v156
    %v158 = vand.u32 %v157, 4294901760
    %v159 = vsub.f32 %v157, %v158
    %v160 = vand.u32 %v159, 4294901760
    %161 = vmatpush1.msra.mxu0 %v160
    %162 = vmatprep.subr.mxu0 0.0
    %163 = vmatpush1.msra.mxu0 0.0
    %164 = vmatprep.subr.mxu0 0.0
    %165 = vmatpush1.msra.mxu0 0.0
    %166 = vmatprep.subr.mxu0 0.0
    %167 = vmatpush1.msra.mxu0 0.0
    %168 = vmatprep.subr.mxu0 0.0
    %169 = vmatpush1.msra.mxu0 0.0
    %170 = vmatprep.subr.mxu0 0.0
    %171 = vmatpush1.msra.mxu0 0.0
    %172 = vmatprep.subr.mxu0 0.0
    %173 = vmatpush1.msra.mxu0 0.0
    %174 = vmatprep.subr.mxu0 0.0
    %175 = vmatpush1.msra.mxu0 0.0
    %176 = vmatprep.subr.mxu0 0.0
    %177 = vmatpush1.msra.mxu0 0.0
    %178 = vmatprep.subr.mxu0 0.0
    %179 = vmatpush1.msra.mxu0 0.0
    %180 = vmatprep.subr.mxu0 0.0
    %181 = vmatpush1.msra.mxu0 0.0
    %182 = vmatprep.subr.mxu0 0.0
    %183 = vmatpush1.msra.mxu0 0.0
    %184 = vmatprep.subr.mxu0 0.0
    %185 = vmatpush1.msra.mxu0 0.0
    %186 = vmatprep.subr.mxu0 0.0
    %187 = vmatpush1.msra.mxu0 0.0
    %188 = vmatprep.subr.mxu0 0.0
    %189 = vmatpush1.msra.mxu0 0.0
    %190 = vmatprep.subr.mxu0 0.0
    %191 = vmatpush1.msra.mxu0 0.0
    %192 = vmatprep.subr.mxu0 0.0
    %193 = vmatpush1.msra.mxu0 0.0
    %194 = vmatprep.subr.mxu0 0.0
    %195 = vmatpush1.msra.mxu0 0.0
    %196 = vmatprep.subr.mxu0 0.0
    %197 = vmatpush1.msra.mxu0 0.0
    %198 = vmatprep.subr.mxu0 0.0
    %199 = vmatpush1.msra.mxu0 0.0
    %200 = vmatprep.subr.mxu0 0.0
    %201 = vmatpush1.msra.mxu0 0.0
    %202 = vmatprep.subr.mxu0 0.0
    %203 = vmatpush1.msra.mxu0 0.0
    %204 = vmatprep.subr.mxu0 0.0
    %205 = vmatpush1.msra.mxu0 0.0
    %206 = vmatprep.subr.mxu0 0.0
    %207 = vmatpush1.msra.mxu0 0.0
    %208 = vmatprep.subr.mxu0 0.0
    %209 = vmatpush1.msra.mxu0 0.0
    %210 = vmatprep.subr.mxu0 0.0
    %211 = vmatpush1.msra.mxu0 0.0
    %212 = vmatprep.subr.mxu0 0.0
    %213 = vmatpush1.msra.mxu0 0.0
    %214 = vmatprep.subr.mxu0 0.0
    %215 = vmatpush1.msra.mxu0 0.0
    %216 = vmatprep.subr.mxu0 0.0
    %217 = vmatpush1.msra.mxu0 0.0
    %218 = vmatprep.subr.mxu0 0.0
    %219 = vmatpush1.msra.mxu0 0.0
    %220 = vmatprep.subr.mxu0 0.0
    %221 = vmatpush1.msra.mxu0 0.0
    %222 = vmatprep.mubr.f32.mxu0 0.0
    %v223 = vand.u32 %v56, 4294901760
    %224 = vmatmul.mubr.f32.gmra.mrb[0].mxu0 %v223
    %v225 = vpop.f32.mrb[0].mxu0
    %v226 = vadd.f32 %v135, %v225
    %v227 = vpop.f32.mrb[0].mxu0
    %228 = vmatprep.mubr.f32.mxu0 0.0
    %v229 = vand.u32 %v59, 4294901760
    %230 = vmatmul.mubr.f32.gmra.mrb[0].mxu0 %v229
    %v231 = vpop.f32.mrb[0].mxu0
    %v232 = vadd.f32 %v145, %v231
    %v233 = vpop.f32.mrb[0].mxu0
    %234 = vdwg.mxu0
    %235 = vmatprep.subr.mxu0 0.0
    %v236 = vand.u32 %v51, 4294901760
    %v237 = vsub.f32 %v51, %v236
    %238 = vmatpush1.msra.mxu0 %v237
    %239 = vmatprep.subr.mxu0 0.0
    %v240 = vand.u32 %v53, 4294901760
    %v241 = vsub.f32 %v53, %v240
    %242 = vmatpush1.msra.mxu0 %v241
    %243 = vmatprep.subr.mxu0 0.0
    %244 = vmatpush1.msra.mxu0 0.0
    %245 = vmatprep.subr.mxu0 0.0
    %246 = vmatpush1.msra.mxu0 0.0
    %247 = vmatprep.subr.mxu0 0.0
    %248 = vmatpush1.msra.mxu0 0.0
    %249 = vmatprep.subr.mxu0 0.0
    %250 = vmatpush1.msra.mxu0 0.0
    %251 = vmatprep.subr.mxu0 0.0
    %252 = vmatpush1.msra.mxu0 0.0
    %253 = vmatprep.subr.mxu0 0.0
    %254 = vmatpush1.msra.mxu0 0.0
    %255 = vmatprep.subr.mxu0 0.0
    %256 = vmatpush1.msra.mxu0 0.0
    %257 = vmatprep.subr.mxu0 0.0
    %258 = vmatpush1.msra.mxu0 0.0
    %259 = vmatprep.subr.mxu0 0.0
    %260 = vmatpush1.msra.mxu0 0.0
    %261 = vmatprep.subr.mxu0 0.0
    %262 = vmatpush1.msra.mxu0 0.0
    %263 = vmatprep.subr.mxu0 0.0
    %264 = vmatpush1.msra.mxu0 0.0
    %265 = vmatprep.subr.mxu0 0.0
    %266 = vmatpush1.msra.mxu0 0.0
    %267 = vmatprep.subr.mxu0 0.0
    %268 = vmatpush1.msra.mxu0 0.0
    %269 = vmatprep.subr.mxu0 0.0
    %270 = vmatpush1.msra.mxu0 0.0
    %271 = vmatprep.subr.mxu0 0.0
    %272 = vmatpush1.msra.mxu0 0.0
    %273 = vmatprep.subr.mxu0 0.0
    %274 = vmatpush1.msra.mxu0 0.0
    %275 = vmatprep.subr.mxu0 0.0
    %276 = vmatpush1.msra.mxu0 0.0
    %277 = vmatprep.subr.mxu0 0.0
    %278 = vmatpush1.msra.mxu0 0.0
    %279 = vmatprep.subr.mxu0 0.0
    %280 = vmatpush1.msra.mxu0 0.0
    %281 = vmatprep.subr.mxu0 0.0
    %282 = vmatpush1.msra.mxu0 0.0
    %283 = vmatprep.subr.mxu0 0.0
    %284 = vmatpush1.msra.mxu0 0.0
    %285 = vmatprep.subr.mxu0 0.0
    %286 = vmatpush1.msra.mxu0 0.0
    %287 = vmatprep.subr.mxu0 0.0
    %288 = vmatpush1.msra.mxu0 0.0
    %289 = vmatprep.subr.mxu0 0.0
    %290 = vmatpush1.msra.mxu0 0.0
    %291 = vmatprep.subr.mxu0 0.0
    %292 = vmatpush1.msra.mxu0 0.0
    %293 = vmatprep.subr.mxu0 0.0
    %294 = vmatpush1.msra.mxu0 0.0
    %295 = vmatprep.subr.mxu0 0.0
    %296 = vmatpush1.msra.mxu0 0.0
    %297 = vmatprep.subr.mxu0 0.0
    %298 = vmatpush1.msra.mxu0 0.0
    %299 = vmatprep.subr.mxu0 0.0
    %300 = vmatpush1.msra.mxu0 0.0
    %301 = vmatprep.subr.mxu0 0.0
    %302 = vmatpush1.msra.mxu0 0.0
    %303 = vmatprep.mubr.f32.mxu0 0.0
    %v304 = vand.u32 %v56, 4294901760
    %v305 = vsub.f32 %v56, %v304
    %306 = vmatmul.mubr.f32.gmra.mrb[0].mxu0 %v305
    %v307 = vpop.f32.mrb[0].mxu0
    %v308 = vadd.f32 %v226, %v307
    %v309 = vpop.f32.mrb[0].mxu0
    %310 = vmatprep.mubr.f32.mxu0 0.0
    %v311 = vand.u32 %v59, 4294901760
    %v312 = vsub.f32 %v59, %v311
    %313 = vmatmul.mubr.f32.gmra.mrb[0].mxu0 %v312
    %v314 = vpop.f32.mrb[0].mxu0
    %v315 = vadd.f32 %v232, %v314
    %v316 = vpop.f32.mrb[0].mxu0
    %317 = vdwg.mxu0
    %318 = vmatprep.subr.mxu0 0.0
    %v319 = vand.u32 %v51, 4294901760
    %320 = vmatpush1.msra.mxu0 %v319
    %321 = vmatprep.subr.mxu0 0.0
    %v322 = vand.u32 %v53, 4294901760
    %323 = vmatpush1.msra.mxu0 %v322
    %324 = vmatprep.subr.mxu0 0.0
    %325 = vmatpush1.msra.mxu0 0.0
    %326 = vmatprep.subr.mxu0 0.0
    %327 = vmatpush1.msra.mxu0 0.0
    %328 = vmatprep.subr.mxu0 0.0
    %329 = vmatpush1.msra.mxu0 0.0
    %330 = vmatprep.subr.mxu0 0.0
    %331 = vmatpush1.msra.mxu0 0.0
    %332 = vmatprep.subr.mxu0 0.0
    %333 = vmatpush1.msra.mxu0 0.0
    %334 = vmatprep.subr.mxu0 0.0
    %335 = vmatpush1.msra.mxu0 0.0
    %336 = vmatprep.subr.mxu0 0.0
    %337 = vmatpush1.msra.mxu0 0.0
    %338 = vmatprep.subr.mxu0 0.0
    %339 = vmatpush1.msra.mxu0 0.0
    %340 = vmatprep.subr.mxu0 0.0
    %341 = vmatpush1.msra.mxu0 0.0
    %342 = vmatprep.subr.mxu0 0.0
    %343 = vmatpush1.msra.mxu0 0.0
    %344 = vmatprep.subr.mxu0 0.0
    %345 = vmatpush1.msra.mxu0 0.0
    %346 = vmatprep.subr.mxu0 0.0
    %347 = vmatpush1.msra.mxu0 0.0
    %348 = vmatprep.subr.mxu0 0.0
    %349 = vmatpush1.msra.mxu0 0.0
    %350 = vmatprep.subr.mxu0 0.0
    %351 = vmatpush1.msra.mxu0 0.0
    %352 = vmatprep.subr.mxu0 0.0
    %353 = vmatpush1.msra.mxu0 0.0
    %354 = vmatprep.subr.mxu0 0.0
    %355 = vmatpush1.msra.mxu0 0.0
    %356 = vmatprep.subr.mxu0 0.0
    %357 = vmatpush1.msra.mxu0 0.0
    %358 = vmatprep.subr.mxu0 0.0
    %359 = vmatpush1.msra.mxu0 0.0
    %360 = vmatprep.subr.mxu0 0.0
    %361 = vmatpush1.msra.mxu0 0.0
    %362 = vmatprep.subr.mxu0 0.0
    %363 = vmatpush1.msra.mxu0 0.0
    %364 = vmatprep.subr.mxu0 0.0
    %365 = vmatpush1.msra.mxu0 0.0
    %366 = vmatprep.subr.mxu0 0.0
    %367 = vmatpush1.msra.mxu0 0.0
    %368 = vmatprep.subr.mxu0 0.0
    %369 = vmatpush1.msra.mxu0 0.0
    %370 = vmatprep.subr.mxu0 0.0
    %371 = vmatpush1.msra.mxu0 0.0
    %372 = vmatprep.subr.mxu0 0.0
    %373 = vmatpush1.msra.mxu0 0.0
    %374 = vmatprep.subr.mxu0 0.0
    %375 = vmatpush1.msra.mxu0 0.0
    %376 = vmatprep.subr.mxu0 0.0
    %377 = vmatpush1.msra.mxu0 0.0
    %378 = vmatprep.subr.mxu0 0.0
    %379 = vmatpush1.msra.mxu0 0.0
    %380 = vmatprep.subr.mxu0 0.0
    %381 = vmatpush1.msra.mxu0 0.0
    %382 = vmatprep.subr.mxu0 0.0
    %383 = vmatpush1.msra.mxu0 0.0
    %384 = vmatprep.mubr.f32.mxu0 0.0
    %v385 = vand.u32 %v56, 4294901760
    %v386 = vsub.f32 %v56, %v385
    %v387 = vand.u32 %v386, 4294901760
    %388 = vmatmul.mubr.f32.gmra.mrb[0].mxu0 %v387
    %v389 = vpop.f32.mrb[0].mxu0
    %v390 = vadd.f32 %v308, %v389
    %v391 = vpop.f32.mrb[0].mxu0
    %392 = vmatprep.mubr.f32.mxu0 0.0
    %v393 = vand.u32 %v59, 4294901760
    %v394 = vsub.f32 %v59, %v393
    %v395 = vand.u32 %v394, 4294901760
    %396 = vmatmul.mubr.f32.gmra.mrb[0].mxu0 %v395
    %v397 = vpop.f32.mrb[0].mxu0
    %v398 = vadd.f32 %v315, %v397
    %v399 = vpop.f32.mrb[0].mxu0
    %400 = vdwg.mxu0
    %401 = vmatprep.subr.mxu0 0.0
    %v402 = vand.u32 %v51, 4294901760
    %v403 = vsub.f32 %v51, %v402
    %v404 = vand.u32 %v403, 4294901760
    %405 = vmatpush1.msra.mxu0 %v404
    %406 = vmatprep.subr.mxu0 0.0
    %v407 = vand.u32 %v53, 4294901760
    %v408 = vsub.f32 %v53, %v407
    %v409 = vand.u32 %v408, 4294901760
    %410 = vmatpush1.msra.mxu0 %v409
    %411 = vmatprep.subr.mxu0 0.0
    %412 = vmatpush1.msra.mxu0 0.0
    %413 = vmatprep.subr.mxu0 0.0
    %414 = vmatpush1.msra.mxu0 0.0
    %415 = vmatprep.subr.mxu0 0.0
    %416 = vmatpush1.msra.mxu0 0.0
    %417 = vmatprep.subr.mxu0 0.0
    %418 = vmatpush1.msra.mxu0 0.0
    %419 = vmatprep.subr.mxu0 0.0
    %420 = vmatpush1.msra.mxu0 0.0
    %421 = vmatprep.subr.mxu0 0.0
    %422 = vmatpush1.msra.mxu0 0.0
    %423 = vmatprep.subr.mxu0 0.0
    %424 = vmatpush1.msra.mxu0 0.0
    %425 = vmatprep.subr.mxu0 0.0
    %426 = vmatpush1.msra.mxu0 0.0
    %427 = vmatprep.subr.mxu0 0.0
    %428 = vmatpush1.msra.mxu0 0.0
    %429 = vmatprep.subr.mxu0 0.0
    %430 = vmatpush1.msra.mxu0 0.0
    %431 = vmatprep.subr.mxu0 0.0
    %432 = vmatpush1.msra.mxu0 0.0
    %433 = vmatprep.subr.mxu0 0.0
    %434 = vmatpush1.msra.mxu0 0.0
    %435 = vmatprep.subr.mxu0 0.0
    %436 = vmatpush1.msra.mxu0 0.0
    %437 = vmatprep.subr.mxu0 0.0
    %438 = vmatpush1.msra.mxu0 0.0
    %439 = vmatprep.subr.mxu0 0.0
    %440 = vmatpush1.msra.mxu0 0.0
    %441 = vmatprep.subr.mxu0 0.0
    %442 = vmatpush1.msra.mxu0 0.0
    %443 = vmatprep.subr.mxu0 0.0
    %444 = vmatpush1.msra.mxu0 0.0
    %445 = vmatprep.subr.mxu0 0.0
    %446 = vmatpush1.msra.mxu0 0.0
    %447 = vmatprep.subr.mxu0 0.0
    %448 = vmatpush1.msra.mxu0 0.0
    %449 = vmatprep.subr.mxu0 0.0
    %450 = vmatpush1.msra.mxu0 0.0
    %451 = vmatprep.subr.mxu0 0.0
    %452 = vmatpush1.msra.mxu0 0.0
    %453 = vmatprep.subr.mxu0 0.0
    %454 = vmatpush1.msra.mxu0 0.0
    %455 = vmatprep.subr.mxu0 0.0
    %456 = vmatpush1.msra.mxu0 0.0
    %457 = vmatprep.subr.mxu0 0.0
    %458 = vmatpush1.msra.mxu0 0.0
    %459 = vmatprep.subr.mxu0 0.0
    %460 = vmatpush1.msra.mxu0 0.0
    %461 = vmatprep.subr.mxu0 0.0
    %462 = vmatpush1.msra.mxu0 0.0
    %463 = vmatprep.subr.mxu0 0.0
    %464 = vmatpush1.msra.mxu0 0.0
    %465 = vmatprep.subr.mxu0 0.0
    %466 = vmatpush1.msra.mxu0 0.0
    %467 = vmatprep.subr.mxu0 0.0
    %468 = vmatpush1.msra.mxu0 0.0
    %469 = vmatprep.subr.mxu0 0.0
    %470 = vmatpush1.msra.mxu0 0.0
    %471 = vmatprep.mubr.f32.mxu0 0.0
    %v472 = vand.u32 %v56, 4294901760
    %473 = vmatmul.mubr.f32.gmra.mrb[0].mxu0 %v472
    %v474 = vpop.f32.mrb[0].mxu0
    %v475 = vadd.f32 %v390, %v474
    %v476 = vpop.f32.mrb[0].mxu0
    %477 = vmatprep.mubr.f32.mxu0 0.0
    %v478 = vand.u32 %v59, 4294901760
    %479 = vmatmul.mubr.f32.gmra.mrb[0].mxu0 %v478
    %v480 = vpop.f32.mrb[0].mxu0
    %v481 = vadd.f32 %v398, %v480
    %v482 = vpop.f32.mrb[0].mxu0
    %483 = vdwg.mxu0
    %484 = vmatprep.subr.mxu0 0.0
    %v485 = vand.u32 %v51, 4294901760
    %486 = vmatpush1.msra.mxu0 %v485
    %487 = vmatprep.subr.mxu0 0.0
    %v488 = vand.u32 %v53, 4294901760
    %489 = vmatpush1.msra.mxu0 %v488
    %490 = vmatprep.subr.mxu0 0.0
    %491 = vmatpush1.msra.mxu0 0.0
    %492 = vmatprep.subr.mxu0 0.0
    %493 = vmatpush1.msra.mxu0 0.0
    %494 = vmatprep.subr.mxu0 0.0
    %495 = vmatpush1.msra.mxu0 0.0
    %496 = vmatprep.subr.mxu0 0.0
    %497 = vmatpush1.msra.mxu0 0.0
    %498 = vmatprep.subr.mxu0 0.0
    %499 = vmatpush1.msra.mxu0 0.0
    %500 = vmatprep.subr.mxu0 0.0
    %501 = vmatpush1.msra.mxu0 0.0
    %502 = vmatprep.subr.mxu0 0.0
    %503 = vmatpush1.msra.mxu0 0.0
    %504 = vmatprep.subr.mxu0 0.0
    %505 = vmatpush1.msra.mxu0 0.0
    %506 = vmatprep.subr.mxu0 0.0
    %507 = vmatpush1.msra.mxu0 0.0
    %508 = vmatprep.subr.mxu0 0.0
    %509 = vmatpush1.msra.mxu0 0.0
    %510 = vmatprep.subr.mxu0 0.0
    %511 = vmatpush1.msra.mxu0 0.0
    %512 = vmatprep.subr.mxu0 0.0
    %513 = vmatpush1.msra.mxu0 0.0
    %514 = vmatprep.subr.mxu0 0.0
    %515 = vmatpush1.msra.mxu0 0.0
    %516 = vmatprep.subr.mxu0 0.0
    %517 = vmatpush1.msra.mxu0 0.0
    %518 = vmatprep.subr.mxu0 0.0
    %519 = vmatpush1.msra.mxu0 0.0
    %520 = vmatprep.subr.mxu0 0.0
    %521 = vmatpush1.msra.mxu0 0.0
    %522 = vmatprep.subr.mxu0 0.0
    %523 = vmatpush1.msra.mxu0 0.0
    %524 = vmatprep.subr.mxu0 0.0
    %525 = vmatpush1.msra.mxu0 0.0
    %526 = vmatprep.subr.mxu0 0.0
    %527 = vmatpush1.msra.mxu0 0.0
    %528 = vmatprep.subr.mxu0 0.0
    %529 = vmatpush1.msra.mxu0 0.0
    %530 = vmatprep.subr.mxu0 0.0
    %531 = vmatpush1.msra.mxu0 0.0
    %532 = vmatprep.subr.mxu0 0.0
    %533 = vmatpush1.msra.mxu0 0.0
    %534 = vmatprep.subr.mxu0 0.0
    %535 = vmatpush1.msra.mxu0 0.0
    %536 = vmatprep.subr.mxu0 0.0
    %537 = vmatpush1.msra.mxu0 0.0
    %538 = vmatprep.subr.mxu0 0.0
    %539 = vmatpush1.msra.mxu0 0.0
    %540 = vmatprep.subr.mxu0 0.0
    %541 = vmatpush1.msra.mxu0 0.0
    %542 = vmatprep.subr.mxu0 0.0
    %543 = vmatpush1.msra.mxu0 0.0
    %544 = vmatprep.subr.mxu0 0.0
    %545 = vmatpush1.msra.mxu0 0.0
    %546 = vmatprep.subr.mxu0 0.0
    %547 = vmatpush1.msra.mxu0 0.0
    %548 = vmatprep.subr.mxu0 0.0
    %549 = vmatpush1.msra.mxu0 0.0
    %550 = vmatprep.mubr.f32.mxu0 0.0
    %v551 = vand.u32 %v56, 4294901760
    %552 = vmatmul.mubr.f32.gmra.mrb[0].mxu0 %v551
    %v553 = vpop.f32.mrb[0].mxu0
    %v554 = vadd.f32 %v475, %v553
    %v555 = vpop.f32.mrb[0].mxu0
    %556 = vmatprep.mubr.f32.mxu0 0.0
    %v557 = vand.u32 %v59, 4294901760
    %558 = vmatmul.mubr.f32.gmra.mrb[0].mxu0 %v557
    %v559 = vpop.f32.mrb[0].mxu0
    %v560 = vadd.f32 %v481, %v559
    %v561 = vpop.f32.mrb[0].mxu0
    %562 = vdwg.mxu0
    %v563 = vlog2.pop %v554
    %v564 = vmul.f32 %v563, 0.6931472
    %v565 = vlog2.pop %v560
    %v566 = vmul.f32 %v565, 0.6931472
    %v567 = vadd.f32 %v564, %v47
    %v568 = vadd.f32 %v566, %v47
    %v569 = vadd.f32 %v567, %v34
    %v570 = vadd.f32 %v568, %v35
    %v571 = vsel %vm37, 1, 0
    %v572 = vlaneseq
    %v573 = vshrl.u32 %v572, 7
    %v574 = vsub.s32 0, %v573
    %v575 = vrot.slane %v571, %v574
    %vm576 = vcmp.eq.s32.totalorder %v575, 1
    %v577 = vsel %vm576, %v32, %v569
    %v578 = vsel %vm576, %v33, %v570
    %579 = vst.msk [vmem:[#allocation2] sm:$0xff] %vm38, %v577
    %580 = vst.msk [vmem:[#allocation2 + $0x8] sm:$0xff] %vm38, %v578
    %v581 = vld [vmem:[#allocation2] sm:$0xff]
    %v582 = vld [vmem:[#allocation2 + $0x8] sm:$0xff]
    %s583 = scalar_lea.vmem %s1, 16
    %v584 = vld [vmem:[%s583] sm:$0xff]
    %v585 = vld [vmem:[%s583 + $0x8] sm:$0xff]
    %v586 = vld [vmem:[%s2 + $0x1] sm:$0x1]
    %vm587 = vcmp.gt.f32.partialorder %v586, 0.5
    %v588 = vsel %vm38, %v581, -inf
    %v589 = vsel %vm38, %v582, -inf
    %v590 = vmax.f32 %v588, %v589
    %v591 = vrot.slane %v590, 4
    %v592 = vmax.f32 %v590, %v591
    %v593 = vrot.slane %v592, 2
    %v594 = vmax.f32 %v592, %v593
    %v595 = vrot.slane %v594, 1
    %v596 = vmax.f32 %v594, %v595
    %v597 = vsub.f32 %v581, %v596
    %v598 = vsub.f32 %v582, %v596
    %v599 = vmul.f32 %v597, 1.442695
    %v600 = vpow.pop %v599
    %v601 = vmul.f32 %v598, 1.442695
    %v602 = vpow.pop %v601
    %603 = vmatprep.subr.mxu0 0.0
    %v604 = vand.u32 %v600, 4294901760
    %605 = vmatpush1.msra.mxu0 %v604
    %606 = vmatprep.subr.mxu0 0.0
    %v607 = vand.u32 %v602, 4294901760
    %608 = vmatpush1.msra.mxu0 %v607
    %609 = vmatprep.subr.mxu0 0.0
    %610 = vmatpush1.msra.mxu0 0.0
    %611 = vmatprep.subr.mxu0 0.0
    %612 = vmatpush1.msra.mxu0 0.0
    %613 = vmatprep.subr.mxu0 0.0
    %614 = vmatpush1.msra.mxu0 0.0
    %615 = vmatprep.subr.mxu0 0.0
    %616 = vmatpush1.msra.mxu0 0.0
    %617 = vmatprep.subr.mxu0 0.0
    %618 = vmatpush1.msra.mxu0 0.0
    %619 = vmatprep.subr.mxu0 0.0
    %620 = vmatpush1.msra.mxu0 0.0
    %621 = vmatprep.subr.mxu0 0.0
    %622 = vmatpush1.msra.mxu0 0.0
    %623 = vmatprep.subr.mxu0 0.0
    %624 = vmatpush1.msra.mxu0 0.0
    %625 = vmatprep.subr.mxu0 0.0
    %626 = vmatpush1.msra.mxu0 0.0
    %627 = vmatprep.subr.mxu0 0.0
    %628 = vmatpush1.msra.mxu0 0.0
    %629 = vmatprep.subr.mxu0 0.0
    %630 = vmatpush1.msra.mxu0 0.0
    %631 = vmatprep.subr.mxu0 0.0
    %632 = vmatpush1.msra.mxu0 0.0
    %633 = vmatprep.subr.mxu0 0.0
    %634 = vmatpush1.msra.mxu0 0.0
    %635 = vmatprep.subr.mxu0 0.0
    %636 = vmatpush1.msra.mxu0 0.0
    %637 = vmatprep.subr.mxu0 0.0
    %638 = vmatpush1.msra.mxu0 0.0
    %639 = vmatprep.subr.mxu0 0.0
    %640 = vmatpush1.msra.mxu0 0.0
    %641 = vmatprep.subr.mxu0 0.0
    %642 = vmatpush1.msra.mxu0 0.0
    %643 = vmatprep.subr.mxu0 0.0
    %644 = vmatpush1.msra.mxu0 0.0
    %645 = vmatprep.subr.mxu0 0.0
    %646 = vmatpush1.msra.mxu0 0.0
    %647 = vmatprep.subr.mxu0 0.0
    %648 = vmatpush1.msra.mxu0 0.0
    %649 = vmatprep.subr.mxu0 0.0
    %650 = vmatpush1.msra.mxu0 0.0
    %651 = vmatprep.subr.mxu0 0.0
    %652 = vmatpush1.msra.mxu0 0.0
    %653 = vmatprep.subr.mxu0 0.0
    %654 = vmatpush1.msra.mxu0 0.0
    %655 = vmatprep.subr.mxu0 0.0
    %656 = vmatpush1.msra.mxu0 0.0
    %657 = vmatprep.subr.mxu0 0.0
    %658 = vmatpush1.msra.mxu0 0.0
    %659 = vmatprep.subr.mxu0 0.0
    %660 = vmatpush1.msra.mxu0 0.0
    %661 = vmatprep.subr.mxu0 0.0
    %662 = vmatpush1.msra.mxu0 0.0
    %663 = vmatprep.subr.mxu0 0.0
    %664 = vmatpush1.msra.mxu0 0.0
    %665 = vmatprep.subr.mxu0 0.0
    %666 = vmatpush1.msra.mxu0 0.0
    %667 = vmatprep.subr.mxu0 0.0
    %668 = vmatpush1.msra.mxu0 0.0
    %669 = vmatprep.mubr.f32.mxu0 0.0
    %v670 = vand.u32 %v56, 4294901760
    %v671 = vsub.f32 %v56, %v670
    %v672 = vand.u32 %v671, 4294901760
    %v673 = vsub.f32 %v671, %v672
    %v674 = vand.u32 %v673, 4294901760
    %675 = vmatmul.mubr.f32.gmra.mrb[0].mxu0 %v674
    %v676 = vpop.f32.mrb[0].mxu0
    %v677 = vadd.f32 0.0, %v676
    %v678 = vpop.f32.mrb[0].mxu0
    %679 = vmatprep.mubr.f32.mxu0 0.0
    %v680 = vand.u32 %v59, 4294901760
    %v681 = vsub.f32 %v59, %v680
    %v682 = vand.u32 %v681, 4294901760
    %v683 = vsub.f32 %v681, %v682
    %v684 = vand.u32 %v683, 4294901760
    %685 = vmatmul.mubr.f32.gmra.mrb[0].mxu0 %v684
    %v686 = vpop.f32.mrb[0].mxu0
    %v687 = vadd.f32 0.0, %v686
    %v688 = vpop.f32.mrb[0].mxu0
    %689 = vdwg.mxu0
    %690 = vmatprep.subr.mxu0 0.0
    %v691 = vand.u32 %v600, 4294901760
    %v692 = vsub.f32 %v600, %v691
    %v693 = vand.u32 %v692, 4294901760
    %v694 = vsub.f32 %v692, %v693
    %v695 = vand.u32 %v694, 4294901760
    %696 = vmatpush1.msra.mxu0 %v695
    %697 = vmatprep.subr.mxu0 0.0
    %v698 = vand.u32 %v602, 4294901760
    %v699 = vsub.f32 %v602, %v698
    %v700 = vand.u32 %v699, 4294901760
    %v701 = vsub.f32 %v699, %v700
    %v702 = vand.u32 %v701, 4294901760
    %703 = vmatpush1.msra.mxu0 %v702
    %704 = vmatprep.subr.mxu0 0.0
    %705 = vmatpush1.msra.mxu0 0.0
    %706 = vmatprep.subr.mxu0 0.0
    %707 = vmatpush1.msra.mxu0 0.0
    %708 = vmatprep.subr.mxu0 0.0
    %709 = vmatpush1.msra.mxu0 0.0
    %710 = vmatprep.subr.mxu0 0.0
    %711 = vmatpush1.msra.mxu0 0.0
    %712 = vmatprep.subr.mxu0 0.0
    %713 = vmatpush1.msra.mxu0 0.0
    %714 = vmatprep.subr.mxu0 0.0
    %715 = vmatpush1.msra.mxu0 0.0
    %716 = vmatprep.subr.mxu0 0.0
    %717 = vmatpush1.msra.mxu0 0.0
    %718 = vmatprep.subr.mxu0 0.0
    %719 = vmatpush1.msra.mxu0 0.0
    %720 = vmatprep.subr.mxu0 0.0
    %721 = vmatpush1.msra.mxu0 0.0
    %722 = vmatprep.subr.mxu0 0.0
    %723 = vmatpush1.msra.mxu0 0.0
    %724 = vmatprep.subr.mxu0 0.0
    %725 = vmatpush1.msra.mxu0 0.0
    %726 = vmatprep.subr.mxu0 0.0
    %727 = vmatpush1.msra.mxu0 0.0
    %728 = vmatprep.subr.mxu0 0.0
    %729 = vmatpush1.msra.mxu0 0.0
    %730 = vmatprep.subr.mxu0 0.0
    %731 = vmatpush1.msra.mxu0 0.0
    %732 = vmatprep.subr.mxu0 0.0
    %733 = vmatpush1.msra.mxu0 0.0
    %734 = vmatprep.subr.mxu0 0.0
    %735 = vmatpush1.msra.mxu0 0.0
    %736 = vmatprep.subr.mxu0 0.0
    %737 = vmatpush1.msra.mxu0 0.0
    %738 = vmatprep.subr.mxu0 0.0
    %739 = vmatpush1.msra.mxu0 0.0
    %740 = vmatprep.subr.mxu0 0.0
    %741 = vmatpush1.msra.mxu0 0.0
    %742 = vmatprep.subr.mxu0 0.0
    %743 = vmatpush1.msra.mxu0 0.0
    %744 = vmatprep.subr.mxu0 0.0
    %745 = vmatpush1.msra.mxu0 0.0
    %746 = vmatprep.subr.mxu0 0.0
    %747 = vmatpush1.msra.mxu0 0.0
    %748 = vmatprep.subr.mxu0 0.0
    %749 = vmatpush1.msra.mxu0 0.0
    %750 = vmatprep.subr.mxu0 0.0
    %751 = vmatpush1.msra.mxu0 0.0
    %752 = vmatprep.subr.mxu0 0.0
    %753 = vmatpush1.msra.mxu0 0.0
    %754 = vmatprep.subr.mxu0 0.0
    %755 = vmatpush1.msra.mxu0 0.0
    %756 = vmatprep.subr.mxu0 0.0
    %757 = vmatpush1.msra.mxu0 0.0
    %758 = vmatprep.subr.mxu0 0.0
    %759 = vmatpush1.msra.mxu0 0.0
    %760 = vmatprep.subr.mxu0 0.0
    %761 = vmatpush1.msra.mxu0 0.0
    %762 = vmatprep.subr.mxu0 0.0
    %763 = vmatpush1.msra.mxu0 0.0
    %764 = vmatprep.mubr.f32.mxu0 0.0
    %v765 = vand.u32 %v56, 4294901760
    %766 = vmatmul.mubr.f32.gmra.mrb[0].mxu0 %v765
    %v767 = vpop.f32.mrb[0].mxu0
    %v768 = vadd.f32 %v677, %v767
    %v769 = vpop.f32.mrb[0].mxu0
    %770 = vmatprep.mubr.f32.mxu0 0.0
    %v771 = vand.u32 %v59, 4294901760
    %772 = vmatmul.mubr.f32.gmra.mrb[0].mxu0 %v771
    %v773 = vpop.f32.mrb[0].mxu0
    %v774 = vadd.f32 %v687, %v773
    %v775 = vpop.f32.mrb[0].mxu0
    %776 = vdwg.mxu0
    %777 = vmatprep.subr.mxu0 0.0
    %v778 = vand.u32 %v600, 4294901760
    %v779 = vsub.f32 %v600, %v778
    %780 = vmatpush1.msra.mxu0 %v779
    %781 = vmatprep.subr.mxu0 0.0
    %v782 = vand.u32 %v602, 4294901760
    %v783 = vsub.f32 %v602, %v782
    %784 = vmatpush1.msra.mxu0 %v783
    %785 = vmatprep.subr.mxu0 0.0
    %786 = vmatpush1.msra.mxu0 0.0
    %787 = vmatprep.subr.mxu0 0.0
    %788 = vmatpush1.msra.mxu0 0.0
    %789 = vmatprep.subr.mxu0 0.0
    %790 = vmatpush1.msra.mxu0 0.0
    %791 = vmatprep.subr.mxu0 0.0
    %792 = vmatpush1.msra.mxu0 0.0
    %793 = vmatprep.subr.mxu0 0.0
    %794 = vmatpush1.msra.mxu0 0.0
    %795 = vmatprep.subr.mxu0 0.0
    %796 = vmatpush1.msra.mxu0 0.0
    %797 = vmatprep.subr.mxu0 0.0
    %798 = vmatpush1.msra.mxu0 0.0
    %799 = vmatprep.subr.mxu0 0.0
    %800 = vmatpush1.msra.mxu0 0.0
    %801 = vmatprep.subr.mxu0 0.0
    %802 = vmatpush1.msra.mxu0 0.0
    %803 = vmatprep.subr.mxu0 0.0
    %804 = vmatpush1.msra.mxu0 0.0
    %805 = vmatprep.subr.mxu0 0.0
    %806 = vmatpush1.msra.mxu0 0.0
    %807 = vmatprep.subr.mxu0 0.0
    %808 = vmatpush1.msra.mxu0 0.0
    %809 = vmatprep.subr.mxu0 0.0
    %810 = vmatpush1.msra.mxu0 0.0
    %811 = vmatprep.subr.mxu0 0.0
    %812 = vmatpush1.msra.mxu0 0.0
    %813 = vmatprep.subr.mxu0 0.0
    %814 = vmatpush1.msra.mxu0 0.0
    %815 = vmatprep.subr.mxu0 0.0
    %816 = vmatpush1.msra.mxu0 0.0
    %817 = vmatprep.subr.mxu0 0.0
    %818 = vmatpush1.msra.mxu0 0.0
    %819 = vmatprep.subr.mxu0 0.0
    %820 = vmatpush1.msra.mxu0 0.0
    %821 = vmatprep.subr.mxu0 0.0
    %822 = vmatpush1.msra.mxu0 0.0
    %823 = vmatprep.subr.mxu0 0.0
    %824 = vmatpush1.msra.mxu0 0.0
    %825 = vmatprep.subr.mxu0 0.0
    %826 = vmatpush1.msra.mxu0 0.0
    %827 = vmatprep.subr.mxu0 0.0
    %828 = vmatpush1.msra.mxu0 0.0
    %829 = vmatprep.subr.mxu0 0.0
    %830 = vmatpush1.msra.mxu0 0.0
    %831 = vmatprep.subr.mxu0 0.0
    %832 = vmatpush1.msra.mxu0 0.0
    %833 = vmatprep.subr.mxu0 0.0
    %834 = vmatpush1.msra.mxu0 0.0
    %835 = vmatprep.subr.mxu0 0.0
    %836 = vmatpush1.msra.mxu0 0.0
    %837 = vmatprep.subr.mxu0 0.0
    %838 = vmatpush1.msra.mxu0 0.0
    %839 = vmatprep.subr.mxu0 0.0
    %840 = vmatpush1.msra.mxu0 0.0
    %841 = vmatprep.subr.mxu0 0.0
    %842 = vmatpush1.msra.mxu0 0.0
    %843 = vmatprep.subr.mxu0 0.0
    %844 = vmatpush1.msra.mxu0 0.0
    %845 = vmatprep.mubr.f32.mxu0 0.0
    %v846 = vand.u32 %v56, 4294901760
    %v847 = vsub.f32 %v56, %v846
    %848 = vmatmul.mubr.f32.gmra.mrb[0].mxu0 %v847
    %v849 = vpop.f32.mrb[0].mxu0
    %v850 = vadd.f32 %v768, %v849
    %v851 = vpop.f32.mrb[0].mxu0
    %852 = vmatprep.mubr.f32.mxu0 0.0
    %v853 = vand.u32 %v59, 4294901760
    %v854 = vsub.f32 %v59, %v853
    %855 = vmatmul.mubr.f32.gmra.mrb[0].mxu0 %v854
    %v856 = vpop.f32.mrb[0].mxu0
    %v857 = vadd.f32 %v774, %v856
    %v858 = vpop.f32.mrb[0].mxu0
    %859 = vdwg.mxu0
    %860 = vmatprep.subr.mxu0 0.0
    %v861 = vand.u32 %v600, 4294901760
    %862 = vmatpush1.msra.mxu0 %v861
    %863 = vmatprep.subr.mxu0 0.0
    %v864 = vand.u32 %v602, 4294901760
    %865 = vmatpush1.msra.mxu0 %v864
    %866 = vmatprep.subr.mxu0 0.0
    %867 = vmatpush1.msra.mxu0 0.0
    %868 = vmatprep.subr.mxu0 0.0
    %869 = vmatpush1.msra.mxu0 0.0
    %870 = vmatprep.subr.mxu0 0.0
    %871 = vmatpush1.msra.mxu0 0.0
    %872 = vmatprep.subr.mxu0 0.0
    %873 = vmatpush1.msra.mxu0 0.0
    %874 = vmatprep.subr.mxu0 0.0
    %875 = vmatpush1.msra.mxu0 0.0
    %876 = vmatprep.subr.mxu0 0.0
    %877 = vmatpush1.msra.mxu0 0.0
    %878 = vmatprep.subr.mxu0 0.0
    %879 = vmatpush1.msra.mxu0 0.0
    %880 = vmatprep.subr.mxu0 0.0
    %881 = vmatpush1.msra.mxu0 0.0
    %882 = vmatprep.subr.mxu0 0.0
    %883 = vmatpush1.msra.mxu0 0.0
    %884 = vmatprep.subr.mxu0 0.0
    %885 = vmatpush1.msra.mxu0 0.0
    %886 = vmatprep.subr.mxu0 0.0
    %887 = vmatpush1.msra.mxu0 0.0
    %888 = vmatprep.subr.mxu0 0.0
    %889 = vmatpush1.msra.mxu0 0.0
    %890 = vmatprep.subr.mxu0 0.0
    %891 = vmatpush1.msra.mxu0 0.0
    %892 = vmatprep.subr.mxu0 0.0
    %893 = vmatpush1.msra.mxu0 0.0
    %894 = vmatprep.subr.mxu0 0.0
    %895 = vmatpush1.msra.mxu0 0.0
    %896 = vmatprep.subr.mxu0 0.0
    %897 = vmatpush1.msra.mxu0 0.0
    %898 = vmatprep.subr.mxu0 0.0
    %899 = vmatpush1.msra.mxu0 0.0
    %900 = vmatprep.subr.mxu0 0.0
    %901 = vmatpush1.msra.mxu0 0.0
    %902 = vmatprep.subr.mxu0 0.0
    %903 = vmatpush1.msra.mxu0 0.0
    %904 = vmatprep.subr.mxu0 0.0
    %905 = vmatpush1.msra.mxu0 0.0
    %906 = vmatprep.subr.mxu0 0.0
    %907 = vmatpush1.msra.mxu0 0.0
    %908 = vmatprep.subr.mxu0 0.0
    %909 = vmatpush1.msra.mxu0 0.0
    %910 = vmatprep.subr.mxu0 0.0
    %911 = vmatpush1.msra.mxu0 0.0
    %912 = vmatprep.subr.mxu0 0.0
    %913 = vmatpush1.msra.mxu0 0.0
    %914 = vmatprep.subr.mxu0 0.0
    %915 = vmatpush1.msra.mxu0 0.0
    %916 = vmatprep.subr.mxu0 0.0
    %917 = vmatpush1.msra.mxu0 0.0
    %918 = vmatprep.subr.mxu0 0.0
    %919 = vmatpush1.msra.mxu0 0.0
    %920 = vmatprep.subr.mxu0 0.0
    %921 = vmatpush1.msra.mxu0 0.0
    %922 = vmatprep.subr.mxu0 0.0
    %923 = vmatpush1.msra.mxu0 0.0
    %924 = vmatprep.subr.mxu0 0.0
    %925 = vmatpush1.msra.mxu0 0.0
    %926 = vmatprep.mubr.f32.mxu0 0.0
    %v927 = vand.u32 %v56, 4294901760
    %v928 = vsub.f32 %v56, %v927
    %v929 = vand.u32 %v928, 4294901760
    %930 = vmatmul.mubr.f32.gmra.mrb[0].mxu0 %v929
    %v931 = vpop.f32.mrb[0].mxu0
    %v932 = vadd.f32 %v850, %v931
    %v933 = vpop.f32.mrb[0].mxu0
    %934 = vmatprep.mubr.f32.mxu0 0.0
    %v935 = vand.u32 %v59, 4294901760
    %v936 = vsub.f32 %v59, %v935
    %v937 = vand.u32 %v936, 4294901760
    %938 = vmatmul.mubr.f32.gmra.mrb[0].mxu0 %v937
    %v939 = vpop.f32.mrb[0].mxu0
    %v940 = vadd.f32 %v857, %v939
    %v941 = vpop.f32.mrb[0].mxu0
    %942 = vdwg.mxu0
    %943 = vmatprep.subr.mxu0 0.0
    %v944 = vand.u32 %v600, 4294901760
    %v945 = vsub.f32 %v600, %v944
    %v946 = vand.u32 %v945, 4294901760
    %947 = vmatpush1.msra.mxu0 %v946
    %948 = vmatprep.subr.mxu0 0.0
    %v949 = vand.u32 %v602, 4294901760
    %v950 = vsub.f32 %v602, %v949
    %v951 = vand.u32 %v950, 4294901760
    %952 = vmatpush1.msra.mxu0 %v951
    %953 = vmatprep.subr.mxu0 0.0
    %954 = vmatpush1.msra.mxu0 0.0
    %955 = vmatprep.subr.mxu0 0.0
    %956 = vmatpush1.msra.mxu0 0.0
    %957 = vmatprep.subr.mxu0 0.0
    %958 = vmatpush1.msra.mxu0 0.0
    %959 = vmatprep.subr.mxu0 0.0
    %960 = vmatpush1.msra.mxu0 0.0
    %961 = vmatprep.subr.mxu0 0.0
    %962 = vmatpush1.msra.mxu0 0.0
    %963 = vmatprep.subr.mxu0 0.0
    %964 = vmatpush1.msra.mxu0 0.0
    %965 = vmatprep.subr.mxu0 0.0
    %966 = vmatpush1.msra.mxu0 0.0
    %967 = vmatprep.subr.mxu0 0.0
    %968 = vmatpush1.msra.mxu0 0.0
    %969 = vmatprep.subr.mxu0 0.0
    %970 = vmatpush1.msra.mxu0 0.0
    %971 = vmatprep.subr.mxu0 0.0
    %972 = vmatpush1.msra.mxu0 0.0
    %973 = vmatprep.subr.mxu0 0.0
    %974 = vmatpush1.msra.mxu0 0.0
    %975 = vmatprep.subr.mxu0 0.0
    %976 = vmatpush1.msra.mxu0 0.0
    %977 = vmatprep.subr.mxu0 0.0
    %978 = vmatpush1.msra.mxu0 0.0
    %979 = vmatprep.subr.mxu0 0.0
    %980 = vmatpush1.msra.mxu0 0.0
    %981 = vmatprep.subr.mxu0 0.0
    %982 = vmatpush1.msra.mxu0 0.0
    %983 = vmatprep.subr.mxu0 0.0
    %984 = vmatpush1.msra.mxu0 0.0
    %985 = vmatprep.subr.mxu0 0.0
    %986 = vmatpush1.msra.mxu0 0.0
    %987 = vmatprep.subr.mxu0 0.0
    %988 = vmatpush1.msra.mxu0 0.0
    %989 = vmatprep.subr.mxu0 0.0
    %990 = vmatpush1.msra.mxu0 0.0
    %991 = vmatprep.subr.mxu0 0.0
    %992 = vmatpush1.msra.mxu0 0.0
    %993 = vmatprep.subr.mxu0 0.0
    %994 = vmatpush1.msra.mxu0 0.0
    %995 = vmatprep.subr.mxu0 0.0
    %996 = vmatpush1.msra.mxu0 0.0
    %997 = vmatprep.subr.mxu0 0.0
    %998 = vmatpush1.msra.mxu0 0.0
    %999 = vmatprep.subr.mxu0 0.0
    %1000 = vmatpush1.msra.mxu0 0.0
    %1001 = vmatprep.subr.mxu0 0.0
    %1002 = vmatpush1.msra.mxu0 0.0
    %1003 = vmatprep.subr.mxu0 0.0
    %1004 = vmatpush1.msra.mxu0 0.0
    %1005 = vmatprep.subr.mxu0 0.0
    %1006 = vmatpush1.msra.mxu0 0.0
    %1007 = vmatprep.subr.mxu0 0.0
    %1008 = vmatpush1.msra.mxu0 0.0
    %1009 = vmatprep.subr.mxu0 0.0
    %1010 = vmatpush1.msra.mxu0 0.0
    %1011 = vmatprep.subr.mxu0 0.0
    %1012 = vmatpush1.msra.mxu0 0.0
    %1013 = vmatprep.mubr.f32.mxu0 0.0
    %v1014 = vand.u32 %v56, 4294901760
    %1015 = vmatmul.mubr.f32.gmra.mrb[0].mxu0 %v1014
    %v1016 = vpop.f32.mrb[0].mxu0
    %v1017 = vadd.f32 %v932, %v1016
    %v1018 = vpop.f32.mrb[0].mxu0
    %1019 = vmatprep.mubr.f32.mxu0 0.0
    %v1020 = vand.u32 %v59, 4294901760
    %1021 = vmatmul.mubr.f32.gmra.mrb[0].mxu0 %v1020
    %v1022 = vpop.f32.mrb[0].mxu0
    %v1023 = vadd.f32 %v940, %v1022
    %v1024 = vpop.f32.mrb[0].mxu0
    %1025 = vdwg.mxu0
    %1026 = vmatprep.subr.mxu0 0.0
    %v1027 = vand.u32 %v600, 4294901760
    %1028 = vmatpush1.msra.mxu0 %v1027
    %1029 = vmatprep.subr.mxu0 0.0
    %v1030 = vand.u32 %v602, 4294901760
    %1031 = vmatpush1.msra.mxu0 %v1030
    %1032 = vmatprep.subr.mxu0 0.0
    %1033 = vmatpush1.msra.mxu0 0.0
    %1034 = vmatprep.subr.mxu0 0.0
    %1035 = vmatpush1.msra.mxu0 0.0
    %1036 = vmatprep.subr.mxu0 0.0
    %1037 = vmatpush1.msra.mxu0 0.0
    %1038 = vmatprep.subr.mxu0 0.0
    %1039 = vmatpush1.msra.mxu0 0.0
    %1040 = vmatprep.subr.mxu0 0.0
    %1041 = vmatpush1.msra.mxu0 0.0
    %1042 = vmatprep.subr.mxu0 0.0
    %1043 = vmatpush1.msra.mxu0 0.0
    %1044 = vmatprep.subr.mxu0 0.0
    %1045 = vmatpush1.msra.mxu0 0.0
    %1046 = vmatprep.subr.mxu0 0.0
    %1047 = vmatpush1.msra.mxu0 0.0
    %1048 = vmatprep.subr.mxu0 0.0
    %1049 = vmatpush1.msra.mxu0 0.0
    %1050 = vmatprep.subr.mxu0 0.0
    %1051 = vmatpush1.msra.mxu0 0.0
    %1052 = vmatprep.subr.mxu0 0.0
    %1053 = vmatpush1.msra.mxu0 0.0
    %1054 = vmatprep.subr.mxu0 0.0
    %1055 = vmatpush1.msra.mxu0 0.0
    %1056 = vmatprep.subr.mxu0 0.0
    %1057 = vmatpush1.msra.mxu0 0.0
    %1058 = vmatprep.subr.mxu0 0.0
    %1059 = vmatpush1.msra.mxu0 0.0
    %1060 = vmatprep.subr.mxu0 0.0
    %1061 = vmatpush1.msra.mxu0 0.0
    %1062 = vmatprep.subr.mxu0 0.0
    %1063 = vmatpush1.msra.mxu0 0.0
    %1064 = vmatprep.subr.mxu0 0.0
    %1065 = vmatpush1.msra.mxu0 0.0
    %1066 = vmatprep.subr.mxu0 0.0
    %1067 = vmatpush1.msra.mxu0 0.0
    %1068 = vmatprep.subr.mxu0 0.0
    %1069 = vmatpush1.msra.mxu0 0.0
    %1070 = vmatprep.subr.mxu0 0.0
    %1071 = vmatpush1.msra.mxu0 0.0
    %1072 = vmatprep.subr.mxu0 0.0
    %1073 = vmatpush1.msra.mxu0 0.0
    %1074 = vmatprep.subr.mxu0 0.0
    %1075 = vmatpush1.msra.mxu0 0.0
    %1076 = vmatprep.subr.mxu0 0.0
    %1077 = vmatpush1.msra.mxu0 0.0
    %1078 = vmatprep.subr.mxu0 0.0
    %1079 = vmatpush1.msra.mxu0 0.0
    %1080 = vmatprep.subr.mxu0 0.0
    %1081 = vmatpush1.msra.mxu0 0.0
    %1082 = vmatprep.subr.mxu0 0.0
    %1083 = vmatpush1.msra.mxu0 0.0
    %1084 = vmatprep.subr.mxu0 0.0
    %1085 = vmatpush1.msra.mxu0 0.0
    %1086 = vmatprep.subr.mxu0 0.0
    %1087 = vmatpush1.msra.mxu0 0.0
    %1088 = vmatprep.subr.mxu0 0.0
    %1089 = vmatpush1.msra.mxu0 0.0
    %1090 = vmatprep.subr.mxu0 0.0
    %1091 = vmatpush1.msra.mxu0 0.0
    %1092 = vmatprep.mubr.f32.mxu0 0.0
    %v1093 = vand.u32 %v56, 4294901760
    %1094 = vmatmul.mubr.f32.gmra.mrb[0].mxu0 %v1093
    %v1095 = vpop.f32.mrb[0].mxu0
    %v1096 = vadd.f32 %v1017, %v1095
    %v1097 = vpop.f32.mrb[0].mxu0
    %1098 = vmatprep.mubr.f32.mxu0 0.0
    %v1099 = vand.u32 %v59, 4294901760
    %1100 = vmatmul.mubr.f32.gmra.mrb[0].mxu0 %v1099
    %v1101 = vpop.f32.mrb[0].mxu0
    %v1102 = vadd.f32 %v1023, %v1101
    %v1103 = vpop.f32.mrb[0].mxu0
    %1104 = vdwg.mxu0
    %v1105 = vlog2.pop %v1096
    %v1106 = vmul.f32 %v1105, 0.6931472
    %v1107 = vlog2.pop %v1102
    %v1108 = vmul.f32 %v1107, 0.6931472
    %v1109 = vadd.f32 %v1106, %v596
    %v1110 = vadd.f32 %v1108, %v596
    %v1111 = vadd.f32 %v1109, %v584
    %v1112 = vadd.f32 %v1110, %v585
    %v1113 = vsel %vm587, 1, 0
    %v1114 = vlaneseq
    %v1115 = vshrl.u32 %v1114, 7
    %v1116 = vsub.s32 0, %v1115
    %v1117 = vrot.slane %v1113, %v1116
    %vm1118 = vcmp.eq.s32.totalorder %v1117, 1
    %v1119 = vsel %vm1118, %v581, %v1111
    %v1120 = vsel %vm1118, %v582, %v1112
    %1121 = vst.msk [vmem:[#allocation2] sm:$0xff] %vm38, %v1119
    %1122 = vst.msk [vmem:[#allocation2 + $0x8] sm:$0xff] %vm38, %v1120
    %v1123 = vld [vmem:[#allocation2] sm:$0xff]
    %v1124 = vld [vmem:[#allocation2 + $0x8] sm:$0xff]
    %s1125 = scalar_lea.vmem %s1, 32
    %v1126 = vld [vmem:[%s1125] sm:$0xff]
    %v1127 = vld [vmem:[%s1125 + $0x8] sm:$0xff]
    %v1128 = vld [vmem:[%s2 + $0x2] sm:$0x1]
    %vm1129 = vcmp.gt.f32.partialorder %v1128, 0.5
    %v1130 = vsel %vm38, %v1123, -inf
    %v1131 = vsel %vm38, %v1124, -inf
    %v1132 = vmax.f32 %v1130, %v1131
    %v1133 = vrot.slane %v1132, 4
    %v1134 = vmax.f32 %v1132, %v1133
    %v1135 = vrot.slane %v1134, 2
    %v1136 = vmax.f32 %v1134, %v1135
    %v1137 = vrot.slane %v1136, 1
    %v1138 = vmax.f32 %v1136, %v1137
    %v1139 = vsub.f32 %v1123, %v1138
    %v1140 = vsub.f32 %v1124, %v1138
    %v1141 = vmul.f32 %v1139, 1.442695
    %v1142 = vpow.pop %v1141
    %v1143 = vmul.f32 %v1140, 1.442695
    %v1144 = vpow.pop %v1143
    %1145 = vmatprep.subr.mxu0 0.0
    %v1146 = vand.u32 %v1142, 4294901760
    %1147 = vmatpush1.msra.mxu0 %v1146
    %1148 = vmatprep.subr.mxu0 0.0
    %v1149 = vand.u32 %v1144, 4294901760
    %1150 = vmatpush1.msra.mxu0 %v1149
    %1151 = vmatprep.subr.mxu0 0.0
    %1152 = vmatpush1.msra.mxu0 0.0
    %1153 = vmatprep.subr.mxu0 0.0
    %1154 = vmatpush1.msra.mxu0 0.0
    %1155 = vmatprep.subr.mxu0 0.0
    %1156 = vmatpush1.msra.mxu0 0.0
    %1157 = vmatprep.subr.mxu0 0.0
    %1158 = vmatpush1.msra.mxu0 0.0
    %1159 = vmatprep.subr.mxu0 0.0
    %1160 = vmatpush1.msra.mxu0 0.0
    %1161 = vmatprep.subr.mxu0 0.0
    %1162 = vmatpush1.msra.mxu0 0.0
    %1163 = vmatprep.subr.mxu0 0.0
    %1164 = vmatpush1.msra.mxu0 0.0
    %1165 = vmatprep.subr.mxu0 0.0
    %1166 = vmatpush1.msra.mxu0 0.0
    %1167 = vmatprep.subr.mxu0 0.0
    %1168 = vmatpush1.msra.mxu0 0.0
    %1169 = vmatprep.subr.mxu0 0.0
    %1170 = vmatpush1.msra.mxu0 0.0
    %1171 = vmatprep.subr.mxu0 0.0
    %1172 = vmatpush1.msra.mxu0 0.0
    %1173 = vmatprep.subr.mxu0 0.0
    %1174 = vmatpush1.msra.mxu0 0.0
    %1175 = vmatprep.subr.mxu0 0.0
    %1176 = vmatpush1.msra.mxu0 0.0
    %1177 = vmatprep.subr.mxu0 0.0
    %1178 = vmatpush1.msra.mxu0 0.0
    %1179 = vmatprep.subr.mxu0 0.0
    %1180 = vmatpush1.msra.mxu0 0.0
    %1181 = vmatprep.subr.mxu0 0.0
    %1182 = vmatpush1.msra.mxu0 0.0
    %1183 = vmatprep.subr.mxu0 0.0
    %1184 = vmatpush1.msra.mxu0 0.0
    %1185 = vmatprep.subr.mxu0 0.0
    %1186 = vmatpush1.msra.mxu0 0.0
    %1187 = vmatprep.subr.mxu0 0.0
    %1188 = vmatpush1.msra.mxu0 0.0
    %1189 = vmatprep.subr.mxu0 0.0
    %1190 = vmatpush1.msra.mxu0 0.0
    %1191 = vmatprep.subr.mxu0 0.0
    %1192 = vmatpush1.msra.mxu0 0.0
    %1193 = vmatprep.subr.mxu0 0.0
    %1194 = vmatpush1.msra.mxu0 0.0
    %1195 = vmatprep.subr.mxu0 0.0
    %1196 = vmatpush1.msra.mxu0 0.0
    %1197 = vmatprep.subr.mxu0 0.0
    %1198 = vmatpush1.msra.mxu0 0.0
    %1199 = vmatprep.subr.mxu0 0.0
    %1200 = vmatpush1.msra.mxu0 0.0
    %1201 = vmatprep.subr.mxu0 0.0
    %1202 = vmatpush1.msra.mxu0 0.0
    %1203 = vmatprep.subr.mxu0 0.0
    %1204 = vmatpush1.msra.mxu0 0.0
    %1205 = vmatprep.subr.mxu0 0.0
    %1206 = vmatpush1.msra.mxu0 0.0
    %1207 = vmatprep.subr.mxu0 0.0
    %1208 = vmatpush1.msra.mxu0 0.0
    %1209 = vmatprep.subr.mxu0 0.0
    %1210 = vmatpush1.msra.mxu0 0.0
    %1211 = vmatprep.mubr.f32.mxu0 0.0
    %v1212 = vand.u32 %v56, 4294901760
    %v1213 = vsub.f32 %v56, %v1212
    %v1214 = vand.u32 %v1213, 4294901760
    %v1215 = vsub.f32 %v1213, %v1214
    %v1216 = vand.u32 %v1215, 4294901760
    %1217 = vmatmul.mubr.f32.gmra.mrb[0].mxu0 %v1216
    %v1218 = vpop.f32.mrb[0].mxu0
    %v1219 = vadd.f32 0.0, %v1218
    %v1220 = vpop.f32.mrb[0].mxu0
    %1221 = vmatprep.mubr.f32.mxu0 0.0
    %v1222 = vand.u32 %v59, 4294901760
    %v1223 = vsub.f32 %v59, %v1222
    %v1224 = vand.u32 %v1223, 4294901760
    %v1225 = vsub.f32 %v1223, %v1224
    %v1226 = vand.u32 %v1225, 4294901760
    %1227 = vmatmul.mubr.f32.gmra.mrb[0].mxu0 %v1226
    %v1228 = vpop.f32.mrb[0].mxu0
    %v1229 = vadd.f32 0.0, %v1228
    %v1230 = vpop.f32.mrb[0].mxu0
    %1231 = vdwg.mxu0
    %1232 = vmatprep.subr.mxu0 0.0
    %v1233 = vand.u32 %v1142, 4294901760
    %v1234 = vsub.f32 %v1142, %v1233
    %v1235 = vand.u32 %v1234, 4294901760
    %v1236 = vsub.f32 %v1234, %v1235
    %v1237 = vand.u32 %v1236, 4294901760
    %1238 = vmatpush1.msra.mxu0 %v1237
    %1239 = vmatprep.subr.mxu0 0.0
    %v1240 = vand.u32 %v1144, 4294901760
    %v1241 = vsub.f32 %v1144, %v1240
    %v1242 = vand.u32 %v1241, 4294901760
    %v1243 = vsub.f32 %v1241, %v1242
    %v1244 = vand.u32 %v1243, 4294901760
    %1245 = vmatpush1.msra.mxu0 %v1244
    %1246 = vmatprep.subr.mxu0 0.0
    %1247 = vmatpush1.msra.mxu0 0.0
    %1248 = vmatprep.subr.mxu0 0.0
    %1249 = vmatpush1.msra.mxu0 0.0
    %1250 = vmatprep.subr.mxu0 0.0
    %1251 = vmatpush1.msra.mxu0 0.0
    %1252 = vmatprep.subr.mxu0 0.0
    %1253 = vmatpush1.msra.mxu0 0.0
    %1254 = vmatprep.subr.mxu0 0.0
    %1255 = vmatpush1.msra.mxu0 0.0
    %1256 = vmatprep.subr.mxu0 0.0
    %1257 = vmatpush1.msra.mxu0 0.0
    %1258 = vmatprep.subr.mxu0 0.0
    %1259 = vmatpush1.msra.mxu0 0.0
    %1260 = vmatprep.subr.mxu0 0.0
    %1261 = vmatpush1.msra.mxu0 0.0
    %1262 = vmatprep.subr.mxu0 0.0
    %1263 = vmatpush1.msra.mxu0 0.0
    %1264 = vmatprep.subr.mxu0 0.0
    %1265 = vmatpush1.msra.mxu0 0.0
    %1266 = vmatprep.subr.mxu0 0.0
    %1267 = vmatpush1.msra.mxu0 0.0
    %1268 = vmatprep.subr.mxu0 0.0
    %1269 = vmatpush1.msra.mxu0 0.0
    %1270 = vmatprep.subr.mxu0 0.0
    %1271 = vmatpush1.msra.mxu0 0.0
    %1272 = vmatprep.subr.mxu0 0.0
    %1273 = vmatpush1.msra.mxu0 0.0
    %1274 = vmatprep.subr.mxu0 0.0
    %1275 = vmatpush1.msra.mxu0 0.0
    %1276 = vmatprep.subr.mxu0 0.0
    %1277 = vmatpush1.msra.mxu0 0.0
    %1278 = vmatprep.subr.mxu0 0.0
    %1279 = vmatpush1.msra.mxu0 0.0
    %1280 = vmatprep.subr.mxu0 0.0
    %1281 = vmatpush1.msra.mxu0 0.0
    %1282 = vmatprep.subr.mxu0 0.0
    %1283 = vmatpush1.msra.mxu0 0.0
    %1284 = vmatprep.subr.mxu0 0.0
    %1285 = vmatpush1.msra.mxu0 0.0
    %1286 = vmatprep.subr.mxu0 0.0
    %1287 = vmatpush1.msra.mxu0 0.0
    %1288 = vmatprep.subr.mxu0 0.0
    %1289 = vmatpush1.msra.mxu0 0.0
    %1290 = vmatprep.subr.mxu0 0.0
    %1291 = vmatpush1.msra.mxu0 0.0
    %1292 = vmatprep.subr.mxu0 0.0
    %1293 = vmatpush1.msra.mxu0 0.0
    %1294 = vmatprep.subr.mxu0 0.0
    %1295 = vmatpush1.msra.mxu0 0.0
    %1296 = vmatprep.subr.mxu0 0.0
    %1297 = vmatpush1.msra.mxu0 0.0
    %1298 = vmatprep.subr.mxu0 0.0
    %1299 = vmatpush1.msra.mxu0 0.0
    %1300 = vmatprep.subr.mxu0 0.0
    %1301 = vmatpush1.msra.mxu0 0.0
    %1302 = vmatprep.subr.mxu0 0.0
    %1303 = vmatpush1.msra.mxu0 0.0
    %1304 = vmatprep.subr.mxu0 0.0
    %1305 = vmatpush1.msra.mxu0 0.0
    %1306 = vmatprep.mubr.f32.mxu0 0.0
    %v1307 = vand.u32 %v56, 4294901760
    %1308 = vmatmul.mubr.f32.gmra.mrb[0].mxu0 %v1307
    %v1309 = vpop.f32.mrb[0].mxu0
    %v1310 = vadd.f32 %v1219, %v1309
    %v1311 = vpop.f32.mrb[0].mxu0
    %1312 = vmatprep.mubr.f32.mxu0 0.0
    %v1313 = vand.u32 %v59, 4294901760
    %1314 = vmatmul.mubr.f32.gmra.mrb[0].mxu0 %v1313
    %v1315 = vpop.f32.mrb[0].mxu0
    %v1316 = vadd.f32 %v1229, %v1315
    %v1317 = vpop.f32.mrb[0].mxu0
    %1318 = vdwg.mxu0
    %1319 = vmatprep.subr.mxu0 0.0
    %v1320 = vand.u32 %v1142, 4294901760
    %v1321 = vsub.f32 %v1142, %v1320
    %1322 = vmatpush1.msra.mxu0 %v1321
    %1323 = vmatprep.subr.mxu0 0.0
    %v1324 = vand.u32 %v1144, 4294901760
    %v1325 = vsub.f32 %v1144, %v1324
    %1326 = vmatpush1.msra.mxu0 %v1325
    %1327 = vmatprep.subr.mxu0 0.0
    %1328 = vmatpush1.msra.mxu0 0.0
    %1329 = vmatprep.subr.mxu0 0.0
    %1330 = vmatpush1.msra.mxu0 0.0
    %1331 = vmatprep.subr.mxu0 0.0
    %1332 = vmatpush1.msra.mxu0 0.0
    %1333 = vmatprep.subr.mxu0 0.0
    %1334 = vmatpush1.msra.mxu0 0.0
    %1335 = vmatprep.subr.mxu0 0.0
    %1336 = vmatpush1.msra.mxu0 0.0
    %1337 = vmatprep.subr.mxu0 0.0
    %1338 = vmatpush1.msra.mxu0 0.0
    %1339 = vmatprep.subr.mxu0 0.0
    %1340 = vmatpush1.msra.mxu0 0.0
    %1341 = vmatprep.subr.mxu0 0.0
    %1342 = vmatpush1.msra.mxu0 0.0
    %1343 = vmatprep.subr.mxu0 0.0
    %1344 = vmatpush1.msra.mxu0 0.0
    %1345 = vmatprep.subr.mxu0 0.0
    %1346 = vmatpush1.msra.mxu0 0.0
    %1347 = vmatprep.subr.mxu0 0.0
    %1348 = vmatpush1.msra.mxu0 0.0
    %1349 = vmatprep.subr.mxu0 0.0
    %1350 = vmatpush1.msra.mxu0 0.0
    %1351 = vmatprep.subr.mxu0 0.0
    %1352 = vmatpush1.msra.mxu0 0.0
    %1353 = vmatprep.subr.mxu0 0.0
    %1354 = vmatpush1.msra.mxu0 0.0
    %1355 = vmatprep.subr.mxu0 0.0
    %1356 = vmatpush1.msra.mxu0 0.0
    %1357 = vmatprep.subr.mxu0 0.0
    %1358 = vmatpush1.msra.mxu0 0.0
    %1359 = vmatprep.subr.mxu0 0.0
    %1360 = vmatpush1.msra.mxu0 0.0
    %1361 = vmatprep.subr.mxu0 0.0
    %1362 = vmatpush1.msra.mxu0 0.0
    %1363 = vmatprep.subr.mxu0 0.0
    %1364 = vmatpush1.msra.mxu0 0.0
    %1365 = vmatprep.subr.mxu0 0.0
    %1366 = vmatpush1.msra.mxu0 0.0
    %1367 = vmatprep.subr.mxu0 0.0
    %1368 = vmatpush1.msra.mxu0 0.0
    %1369 = vmatprep.subr.mxu0 0.0
    %1370 = vmatpush1.msra.mxu0 0.0
    %1371 = vmatprep.subr.mxu0 0.0
    %1372 = vmatpush1.msra.mxu0 0.0
    %1373 = vmatprep.subr.mxu0 0.0
    %1374 = vmatpush1.msra.mxu0 0.0
    %1375 = vmatprep.subr.mxu0 0.0
    %1376 = vmatpush1.msra.mxu0 0.0
    %1377 = vmatprep.subr.mxu0 0.0
    %1378 = vmatpush1.msra.mxu0 0.0
    %1379 = vmatprep.subr.mxu0 0.0
    %1380 = vmatpush1.msra.mxu0 0.0
    %1381 = vmatprep.subr.mxu0 0.0
    %1382 = vmatpush1.msra.mxu0 0.0
    %1383 = vmatprep.subr.mxu0 0.0
    %1384 = vmatpush1.msra.mxu0 0.0
    %1385 = vmatprep.subr.mxu0 0.0
    %1386 = vmatpush1.msra.mxu0 0.0
    %1387 = vmatprep.mubr.f32.mxu0 0.0
    %v1388 = vand.u32 %v56, 4294901760
    %v1389 = vsub.f32 %v56, %v1388
    %1390 = vmatmul.mubr.f32.gmra.mrb[0].mxu0 %v1389
    %v1391 = vpop.f32.mrb[0].mxu0
    %v1392 = vadd.f32 %v1310, %v1391
    %v1393 = vpop.f32.mrb[0].mxu0
    %1394 = vmatprep.mubr.f32.mxu0 0.0
    %v1395 = vand.u32 %v59, 4294901760
    %v1396 = vsub.f32 %v59, %v1395
    %1397 = vmatmul.mubr.f32.gmra.mrb[0].mxu0 %v1396
    %v1398 = vpop.f32.mrb[0].mxu0
    %v1399 = vadd.f32 %v1316, %v1398
    %v1400 = vpop.f32.mrb[0].mxu0
    %1401 = vdwg.mxu0
    %1402 = vmatprep.subr.mxu0 0.0
    %v1403 = vand.u32 %v1142, 4294901760
    %1404 = vmatpush1.msra.mxu0 %v1403
    %1405 = vmatprep.subr.mxu0 0.0
    %v1406 = vand.u32 %v1144, 4294901760
    %1407 = vmatpush1.msra.mxu0 %v1406
    %1408 = vmatprep.subr.mxu0 0.0
    %1409 = vmatpush1.msra.mxu0 0.0
    %1410 = vmatprep.subr.mxu0 0.0
    %1411 = vmatpush1.msra.mxu0 0.0
    %1412 = vmatprep.subr.mxu0 0.0
    %1413 = vmatpush1.msra.mxu0 0.0
    %1414 = vmatprep.subr.mxu0 0.0
    %1415 = vmatpush1.msra.mxu0 0.0
    %1416 = vmatprep.subr.mxu0 0.0
    %1417 = vmatpush1.msra.mxu0 0.0
    %1418 = vmatprep.subr.mxu0 0.0
    %1419 = vmatpush1.msra.mxu0 0.0
    %1420 = vmatprep.subr.mxu0 0.0
    %1421 = vmatpush1.msra.mxu0 0.0
    %1422 = vmatprep.subr.mxu0 0.0
    %1423 = vmatpush1.msra.mxu0 0.0
    %1424 = vmatprep.subr.mxu0 0.0
    %1425 = vmatpush1.msra.mxu0 0.0
    %1426 = vmatprep.subr.mxu0 0.0
    %1427 = vmatpush1.msra.mxu0 0.0
    %1428 = vmatprep.subr.mxu0 0.0
    %1429 = vmatpush1.msra.mxu0 0.0
    %1430 = vmatprep.subr.mxu0 0.0
    %1431 = vmatpush1.msra.mxu0 0.0
    %1432 = vmatprep.subr.mxu0 0.0
    %1433 = vmatpush1.msra.mxu0 0.0
    %1434 = vmatprep.subr.mxu0 0.0
    %1435 = vmatpush1.msra.mxu0 0.0
    %1436 = vmatprep.subr.mxu0 0.0
    %1437 = vmatpush1.msra.mxu0 0.0
    %1438 = vmatprep.subr.mxu0 0.0
    %1439 = vmatpush1.msra.mxu0 0.0
    %1440 = vmatprep.subr.mxu0 0.0
    %1441 = vmatpush1.msra.mxu0 0.0
    %1442 = vmatprep.subr.mxu0 0.0
    %1443 = vmatpush1.msra.mxu0 0.0
    %1444 = vmatprep.subr.mxu0 0.0
    %1445 = vmatpush1.msra.mxu0 0.0
    %1446 = vmatprep.subr.mxu0 0.0
    %1447 = vmatpush1.msra.mxu0 0.0
    %1448 = vmatprep.subr.mxu0 0.0
    %1449 = vmatpush1.msra.mxu0 0.0
    %1450 = vmatprep.subr.mxu0 0.0
    %1451 = vmatpush1.msra.mxu0 0.0
    %1452 = vmatprep.subr.mxu0 0.0
    %1453 = vmatpush1.msra.mxu0 0.0
    %1454 = vmatprep.subr.mxu0 0.0
    %1455 = vmatpush1.msra.mxu0 0.0
    %1456 = vmatprep.subr.mxu0 0.0
    %1457 = vmatpush1.msra.mxu0 0.0
    %1458 = vmatprep.subr.mxu0 0.0
    %1459 = vmatpush1.msra.mxu0 0.0
    %1460 = vmatprep.subr.mxu0 0.0
    %1461 = vmatpush1.msra.mxu0 0.0
    %1462 = vmatprep.subr.mxu0 0.0
    %1463 = vmatpush1.msra.mxu0 0.0
    %1464 = vmatprep.subr.mxu0 0.0
    %1465 = vmatpush1.msra.mxu0 0.0
    %1466 = vmatprep.subr.mxu0 0.0
    %1467 = vmatpush1.msra.mxu0 0.0
    %1468 = vmatprep.mubr.f32.mxu0 0.0
    %v1469 = vand.u32 %v56, 4294901760
    %v1470 = vsub.f32 %v56, %v1469
    %v1471 = vand.u32 %v1470, 4294901760
    %1472 = vmatmul.mubr.f32.gmra.mrb[0].mxu0 %v1471
    %v1473 = vpop.f32.mrb[0].mxu0
    %v1474 = vadd.f32 %v1392, %v1473
    %v1475 = vpop.f32.mrb[0].mxu0
    %1476 = vmatprep.mubr.f32.mxu0 0.0
    %v1477 = vand.u32 %v59, 4294901760
    %v1478 = vsub.f32 %v59, %v1477
    %v1479 = vand.u32 %v1478, 4294901760
    %1480 = vmatmul.mubr.f32.gmra.mrb[0].mxu0 %v1479
    %v1481 = vpop.f32.mrb[0].mxu0
    %v1482 = vadd.f32 %v1399, %v1481
    %v1483 = vpop.f32.mrb[0].mxu0
    %1484 = vdwg.mxu0
    %1485 = vmatprep.subr.mxu0 0.0
    %v1486 = vand.u32 %v1142, 4294901760
    %v1487 = vsub.f32 %v1142, %v1486
    %v1488 = vand.u32 %v1487, 4294901760
    %1489 = vmatpush1.msra.mxu0 %v1488
    %1490 = vmatprep.subr.mxu0 0.0
    %v1491 = vand.u32 %v1144, 4294901760
    %v1492 = vsub.f32 %v1144, %v1491
    %v1493 = vand.u32 %v1492, 4294901760
    %1494 = vmatpush1.msra.mxu0 %v1493
    %1495 = vmatprep.subr.mxu0 0.0
    %1496 = vmatpush1.msra.mxu0 0.0
    %1497 = vmatprep.subr.mxu0 0.0
    %1498 = vmatpush1.msra.mxu0 0.0
    %1499 = vmatprep.subr.mxu0 0.0
    %1500 = vmatpush1.msra.mxu0 0.0
    %1501 = vmatprep.subr.mxu0 0.0
    %1502 = vmatpush1.msra.mxu0 0.0
    %1503 = vmatprep.subr.mxu0 0.0
    %1504 = vmatpush1.msra.mxu0 0.0
    %1505 = vmatprep.subr.mxu0 0.0
    %1506 = vmatpush1.msra.mxu0 0.0
    %1507 = vmatprep.subr.mxu0 0.0
    %1508 = vmatpush1.msra.mxu0 0.0
    %1509 = vmatprep.subr.mxu0 0.0
    %1510 = vmatpush1.msra.mxu0 0.0
    %1511 = vmatprep.subr.mxu0 0.0
    %1512 = vmatpush1.msra.mxu0 0.0
    %1513 = vmatprep.subr.mxu0 0.0
    %1514 = vmatpush1.msra.mxu0 0.0
    %1515 = vmatprep.subr.mxu0 0.0
    %1516 = vmatpush1.msra.mxu0 0.0
    %1517 = vmatprep.subr.mxu0 0.0
    %1518 = vmatpush1.msra.mxu0 0.0
    %1519 = vmatprep.subr.mxu0 0.0
    %1520 = vmatpush1.msra.mxu0 0.0
    %1521 = vmatprep.subr.mxu0 0.0
    %1522 = vmatpush1.msra.mxu0 0.0
    %1523 = vmatprep.subr.mxu0 0.0
    %1524 = vmatpush1.msra.mxu0 0.0
    %1525 = vmatprep.subr.mxu0 0.0
    %1526 = vmatpush1.msra.mxu0 0.0
    %1527 = vmatprep.subr.mxu0 0.0
    %1528 = vmatpush1.msra.mxu0 0.0
    %1529 = vmatprep.subr.mxu0 0.0
    %1530 = vmatpush1.msra.mxu0 0.0
    %1531 = vmatprep.subr.mxu0 0.0
    %1532 = vmatpush1.msra.mxu0 0.0
    %1533 = vmatprep.subr.mxu0 0.0
    %1534 = vmatpush1.msra.mxu0 0.0
    %1535 = vmatprep.subr.mxu0 0.0
    %1536 = vmatpush1.msra.mxu0 0.0
    %1537 = vmatprep.subr.mxu0 0.0
    %1538 = vmatpush1.msra.mxu0 0.0
    %1539 = vmatprep.subr.mxu0 0.0
    %1540 = vmatpush1.msra.mxu0 0.0
    %1541 = vmatprep.subr.mxu0 0.0
    %1542 = vmatpush1.msra.mxu0 0.0
    %1543 = vmatprep.subr.mxu0 0.0
    %1544 = vmatpush1.msra.mxu0 0.0
    %1545 = vmatprep.subr.mxu0 0.0
    %1546 = vmatpush1.msra.mxu0 0.0
    %1547 = vmatprep.subr.mxu0 0.0
    %1548 = vmatpush1.msra.mxu0 0.0
    %1549 = vmatprep.subr.mxu0 0.0
    %1550 = vmatpush1.msra.mxu0 0.0
    %1551 = vmatprep.subr.mxu0 0.0
    %1552 = vmatpush1.msra.mxu0 0.0
    %1553 = vmatprep.subr.mxu0 0.0
    %1554 = vmatpush1.msra.mxu0 0.0
    %1555 = vmatprep.mubr.f32.mxu0 0.0
    %v1556 = vand.u32 %v56, 4294901760
    %1557 = vmatmul.mubr.f32.gmra.mrb[0].mxu0 %v1556
    %v1558 = vpop.f32.mrb[0].mxu0
    %v1559 = vadd.f32 %v1474, %v1558
    %v1560 = vpop.f32.mrb[0].mxu0
    %1561 = vmatprep.mubr.f32.mxu0 0.0
    %v1562 = vand.u32 %v59, 4294901760
    %1563 = vmatmul.mubr.f32.gmra.mrb[0].mxu0 %v1562
    %v1564 = vpop.f32.mrb[0].mxu0
    %v1565 = vadd.f32 %v1482, %v1564
    %v1566 = vpop.f32.mrb[0].mxu0
    %1567 = vdwg.mxu0
    %1568 = vmatprep.subr.mxu0 0.0
    %v1569 = vand.u32 %v1142, 4294901760
    %1570 = vmatpush1.msra.mxu0 %v1569
    %1571 = vmatprep.subr.mxu0 0.0
    %v1572 = vand.u32 %v1144, 4294901760
    %1573 = vmatpush1.msra.mxu0 %v1572
    %1574 = vmatprep.subr.mxu0 0.0
    %1575 = vmatpush1.msra.mxu0 0.0
    %1576 = vmatprep.subr.mxu0 0.0
    %1577 = vmatpush1.msra.mxu0 0.0
    %1578 = vmatprep.subr.mxu0 0.0
    %1579 = vmatpush1.msra.mxu0 0.0
    %1580 = vmatprep.subr.mxu0 0.0
    %1581 = vmatpush1.msra.mxu0 0.0
    %1582 = vmatprep.subr.mxu0 0.0
    %1583 = vmatpush1.msra.mxu0 0.0
    %1584 = vmatprep.subr.mxu0 0.0
    %1585 = vmatpush1.msra.mxu0 0.0
    %1586 = vmatprep.subr.mxu0 0.0
    %1587 = vmatpush1.msra.mxu0 0.0
    %1588 = vmatprep.subr.mxu0 0.0
    %1589 = vmatpush1.msra.mxu0 0.0
    %1590 = vmatprep.subr.mxu0 0.0
    %1591 = vmatpush1.msra.mxu0 0.0
    %1592 = vmatprep.subr.mxu0 0.0
    %1593 = vmatpush1.msra.mxu0 0.0
    %1594 = vmatprep.subr.mxu0 0.0
    %1595 = vmatpush1.msra.mxu0 0.0
    %1596 = vmatprep.subr.mxu0 0.0
    %1597 = vmatpush1.msra.mxu0 0.0
    %1598 = vmatprep.subr.mxu0 0.0
    %1599 = vmatpush1.msra.mxu0 0.0
    %1600 = vmatprep.subr.mxu0 0.0
    %1601 = vmatpush1.msra.mxu0 0.0
    %1602 = vmatprep.subr.mxu0 0.0
    %1603 = vmatpush1.msra.mxu0 0.0
    %1604 = vmatprep.subr.mxu0 0.0
    %1605 = vmatpush1.msra.mxu0 0.0
    %1606 = vmatprep.subr.mxu0 0.0
    %1607 = vmatpush1.msra.mxu0 0.0
    %1608 = vmatprep.subr.mxu0 0.0
    %1609 = vmatpush1.msra.mxu0 0.0
    %1610 = vmatprep.subr.mxu0 0.0
    %1611 = vmatpush1.msra.mxu0 0.0
    %1612 = vmatprep.subr.mxu0 0.0
    %1613 = vmatpush1.msra.mxu0 0.0
    %1614 = vmatprep.subr.mxu0 0.0
    %1615 = vmatpush1.msra.mxu0 0.0
    %1616 = vmatprep.subr.mxu0 0.0
    %1617 = vmatpush1.msra.mxu0 0.0
    %1618 = vmatprep.subr.mxu0 0.0
    %1619 = vmatpush1.msra.mxu0 0.0
    %1620 = vmatprep.subr.mxu0 0.0
    %1621 = vmatpush1.msra.mxu0 0.0
    %1622 = vmatprep.subr.mxu0 0.0
    %1623 = vmatpush1.msra.mxu0 0.0
    %1624 = vmatprep.subr.mxu0 0.0
    %1625 = vmatpush1.msra.mxu0 0.0
    %1626 = vmatprep.subr.mxu0 0.0
    %1627 = vmatpush1.msra.mxu0 0.0
    %1628 = vmatprep.subr.mxu0 0.0
    %1629 = vmatpush1.msra.mxu0 0.0
    %1630 = vmatprep.subr.mxu0 0.0
    %1631 = vmatpush1.msra.mxu0 0.0
    %1632 = vmatprep.subr.mxu0 0.0
    %1633 = vmatpush1.msra.mxu0 0.0
    %1634 = vmatprep.mubr.f32.mxu0 0.0
    %v1635 = vand.u32 %v56, 4294901760
    %1636 = vmatmul.mubr.f32.gmra.mrb[0].mxu0 %v1635
    %v1637 = vpop.f32.mrb[0].mxu0
    %v1638 = vadd.f32 %v1559, %v1637
    %v1639 = vpop.f32.mrb[0].mxu0
    %1640 = vmatprep.mubr.f32.mxu0 0.0
    %v1641 = vand.u32 %v59, 4294901760
    %1642 = vmatmul.mubr.f32.gmra.mrb[0].mxu0 %v1641
    %v1643 = vpop.f32.mrb[0].mxu0
    %v1644 = vadd.f32 %v1565, %v1643
    %v1645 = vpop.f32.mrb[0].mxu0
    %1646 = vdwg.mxu0
    %v1647 = vlog2.pop %v1638
    %v1648 = vmul.f32 %v1647, 0.6931472
    %v1649 = vlog2.pop %v1644
    %v1650 = vmul.f32 %v1649, 0.6931472
    %v1651 = vadd.f32 %v1648, %v1138
    %v1652 = vadd.f32 %v1650, %v1138
    %v1653 = vadd.f32 %v1651, %v1126
    %v1654 = vadd.f32 %v1652, %v1127
    %v1655 = vsel %vm1129, 1, 0
    %v1656 = vlaneseq
    %v1657 = vshrl.u32 %v1656, 7
    %v1658 = vsub.s32 0, %v1657
    %v1659 = vrot.slane %v1655, %v1658
    %vm1660 = vcmp.eq.s32.totalorder %v1659, 1
    %v1661 = vsel %vm1660, %v1123, %v1653
    %v1662 = vsel %vm1660, %v1124, %v1654
    %1663 = vst.msk [vmem:[#allocation2] sm:$0xff] %vm38, %v1661
    %1664 = vst.msk [vmem:[#allocation2 + $0x8] sm:$0xff] %vm38, %v1662
    %v1665 = vld [vmem:[#allocation2] sm:$0xff]
    %v1666 = vld [vmem:[#allocation2 + $0x8] sm:$0xff]
    %s1667 = scalar_lea.vmem %s1, 48
    %v1668 = vld [vmem:[%s1667] sm:$0xff]
    %v1669 = vld [vmem:[%s1667 + $0x8] sm:$0xff]
    %v1670 = vld [vmem:[%s2 + $0x3] sm:$0x1]
    %vm1671 = vcmp.gt.f32.partialorder %v1670, 0.5
    %v1672 = vsel %vm38, %v1665, -inf
    %v1673 = vsel %vm38, %v1666, -inf
    %v1674 = vmax.f32 %v1672, %v1673
    %v1675 = vrot.slane %v1674, 4
    %v1676 = vmax.f32 %v1674, %v1675
    %v1677 = vrot.slane %v1676, 2
    %v1678 = vmax.f32 %v1676, %v1677
    %v1679 = vrot.slane %v1678, 1
    %v1680 = vmax.f32 %v1678, %v1679
    %v1681 = vsub.f32 %v1665, %v1680
    %v1682 = vsub.f32 %v1666, %v1680
    %v1683 = vmul.f32 %v1681, 1.442695
    %v1684 = vpow.pop %v1683
    %v1685 = vmul.f32 %v1682, 1.442695
    %v1686 = vpow.pop %v1685
    %1687 = vmatprep.subr.mxu0 0.0
    %v1688 = vand.u32 %v1684, 4294901760
    %1689 = vmatpush1.msra.mxu0 %v1688
    %1690 = vmatprep.subr.mxu0 0.0
    %v1691 = vand.u32 %v1686, 4294901760
    %1692 = vmatpush1.msra.mxu0 %v1691
    %1693 = vmatprep.subr.mxu0 0.0
    %1694 = vmatpush1.msra.mxu0 0.0
    %1695 = vmatprep.subr.mxu0 0.0
    %1696 = vmatpush1.msra.mxu0 0.0
    %1697 = vmatprep.subr.mxu0 0.0
    %1698 = vmatpush1.msra.mxu0 0.0
    %1699 = vmatprep.subr.mxu0 0.0
    %1700 = vmatpush1.msra.mxu0 0.0
    %1701 = vmatprep.subr.mxu0 0.0
    %1702 = vmatpush1.msra.mxu0 0.0
    %1703 = vmatprep.subr.mxu0 0.0
    %1704 = vmatpush1.msra.mxu0 0.0
    %1705 = vmatprep.subr.mxu0 0.0
    %1706 = vmatpush1.msra.mxu0 0.0
    %1707 = vmatprep.subr.mxu0 0.0
    %1708 = vmatpush1.msra.mxu0 0.0
    %1709 = vmatprep.subr.mxu0 0.0
    %1710 = vmatpush1.msra.mxu0 0.0
    %1711 = vmatprep.subr.mxu0 0.0
    %1712 = vmatpush1.msra.mxu0 0.0
    %1713 = vmatprep.subr.mxu0 0.0
    %1714 = vmatpush1.msra.mxu0 0.0
    %1715 = vmatprep.subr.mxu0 0.0
    %1716 = vmatpush1.msra.mxu0 0.0
    %1717 = vmatprep.subr.mxu0 0.0
    %1718 = vmatpush1.msra.mxu0 0.0
    %1719 = vmatprep.subr.mxu0 0.0
    %1720 = vmatpush1.msra.mxu0 0.0
    %1721 = vmatprep.subr.mxu0 0.0
    %1722 = vmatpush1.msra.mxu0 0.0
    %1723 = vmatprep.subr.mxu0 0.0
    %1724 = vmatpush1.msra.mxu0 0.0
    %1725 = vmatprep.subr.mxu0 0.0
    %1726 = vmatpush1.msra.mxu0 0.0
    %1727 = vmatprep.subr.mxu0 0.0
    %1728 = vmatpush1.msra.mxu0 0.0
    %1729 = vmatprep.subr.mxu0 0.0
    %1730 = vmatpush1.msra.mxu0 0.0
    %1731 = vmatprep.subr.mxu0 0.0
    %1732 = vmatpush1.msra.mxu0 0.0
    %1733 = vmatprep.subr.mxu0 0.0
    %1734 = vmatpush1.msra.mxu0 0.0
    %1735 = vmatprep.subr.mxu0 0.0
    %1736 = vmatpush1.msra.mxu0 0.0
    %1737 = vmatprep.subr.mxu0 0.0
    %1738 = vmatpush1.msra.mxu0 0.0
    %1739 = vmatprep.subr.mxu0 0.0
    %1740 = vmatpush1.msra.mxu0 0.0
    %1741 = vmatprep.subr.mxu0 0.0
    %1742 = vmatpush1.msra.mxu0 0.0
    %1743 = vmatprep.subr.mxu0 0.0
    %1744 = vmatpush1.msra.mxu0 0.0
    %1745 = vmatprep.subr.mxu0 0.0
    %1746 = vmatpush1.msra.mxu0 0.0
    %1747 = vmatprep.subr.mxu0 0.0
    %1748 = vmatpush1.msra.mxu0 0.0
    %1749 = vmatprep.subr.mxu0 0.0
    %1750 = vmatpush1.msra.mxu0 0.0
    %1751 = vmatprep.subr.mxu0 0.0
    %1752 = vmatpush1.msra.mxu0 0.0
    %1753 = vmatprep.mubr.f32.mxu0 0.0
    %v1754 = vand.u32 %v56, 4294901760
    %v1755 = vsub.f32 %v56, %v1754
    %v1756 = vand.u32 %v1755, 4294901760
    %v1757 = vsub.f32 %v1755, %v1756
    %v1758 = vand.u32 %v1757, 4294901760
    %1759 = vmatmul.mubr.f32.gmra.mrb[0].mxu0 %v1758
    %v1760 = vpop.f32.mrb[0].mxu0
    %v1761 = vadd.f32 0.0, %v1760
    %v1762 = vpop.f32.mrb[0].mxu0
    %1763 = vmatprep.mubr.f32.mxu0 0.0
    %v1764 = vand.u32 %v59, 4294901760
    %v1765 = vsub.f32 %v59, %v1764
    %v1766 = vand.u32 %v1765, 4294901760
    %v1767 = vsub.f32 %v1765, %v1766
    %v1768 = vand.u32 %v1767, 4294901760
    %1769 = vmatmul.mubr.f32.gmra.mrb[0].mxu0 %v1768
    %v1770 = vpop.f32.mrb[0].mxu0
    %v1771 = vadd.f32 0.0, %v1770
    %v1772 = vpop.f32.mrb[0].mxu0
    %1773 = vdwg.mxu0
    %1774 = vmatprep.subr.mxu0 0.0
    %v1775 = vand.u32 %v1684, 4294901760
    %v1776 = vsub.f32 %v1684, %v1775
    %v1777 = vand.u32 %v1776, 4294901760
    %v1778 = vsub.f32 %v1776, %v1777
    %v1779 = vand.u32 %v1778, 4294901760
    %1780 = vmatpush1.msra.mxu0 %v1779
    %1781 = vmatprep.subr.mxu0 0.0
    %v1782 = vand.u32 %v1686, 4294901760
    %v1783 = vsub.f32 %v1686, %v1782
    %v1784 = vand.u32 %v1783, 4294901760
    %v1785 = vsub.f32 %v1783, %v1784
    %v1786 = vand.u32 %v1785, 4294901760
    %1787 = vmatpush1.msra.mxu0 %v1786
    %1788 = vmatprep.subr.mxu0 0.0
    %1789 = vmatpush1.msra.mxu0 0.0
    %1790 = vmatprep.subr.mxu0 0.0
    %1791 = vmatpush1.msra.mxu0 0.0
    %1792 = vmatprep.subr.mxu0 0.0
    %1793 = vmatpush1.msra.mxu0 0.0
    %1794 = vmatprep.subr.mxu0 0.0
    %1795 = vmatpush1.msra.mxu0 0.0
    %1796 = vmatprep.subr.mxu0 0.0
    %1797 = vmatpush1.msra.mxu0 0.0
    %1798 = vmatprep.subr.mxu0 0.0
    %1799 = vmatpush1.msra.mxu0 0.0
    %1800 = vmatprep.subr.mxu0 0.0
    %1801 = vmatpush1.msra.mxu0 0.0
    %1802 = vmatprep.subr.mxu0 0.0
    %1803 = vmatpush1.msra.mxu0 0.0
    %1804 = vmatprep.subr.mxu0 0.0
    %1805 = vmatpush1.msra.mxu0 0.0
    %1806 = vmatprep.subr.mxu0 0.0
    %1807 = vmatpush1.msra.mxu0 0.0
    %1808 = vmatprep.subr.mxu0 0.0
    %1809 = vmatpush1.msra.mxu0 0.0
    %1810 = vmatprep.subr.mxu0 0.0
    %1811 = vmatpush1.msra.mxu0 0.0
    %1812 = vmatprep.subr.mxu0 0.0
    %1813 = vmatpush1.msra.mxu0 0.0
    %1814 = vmatprep.subr.mxu0 0.0
    %1815 = vmatpush1.msra.mxu0 0.0
    %1816 = vmatprep.subr.mxu0 0.0
    %1817 = vmatpush1.msra.mxu0 0.0
    %1818 = vmatprep.subr.mxu0 0.0
    %1819 = vmatpush1.msra.mxu0 0.0
    %1820 = vmatprep.subr.mxu0 0.0
    %1821 = vmatpush1.msra.mxu0 0.0
    %1822 = vmatprep.subr.mxu0 0.0
    %1823 = vmatpush1.msra.mxu0 0.0
    %1824 = vmatprep.subr.mxu0 0.0
    %1825 = vmatpush1.msra.mxu0 0.0
    %1826 = vmatprep.subr.mxu0 0.0
    %1827 = vmatpush1.msra.mxu0 0.0
    %1828 = vmatprep.subr.mxu0 0.0
    %1829 = vmatpush1.msra.mxu0 0.0
    %1830 = vmatprep.subr.mxu0 0.0
    %1831 = vmatpush1.msra.mxu0 0.0
    %1832 = vmatprep.subr.mxu0 0.0
    %1833 = vmatpush1.msra.mxu0 0.0
    %1834 = vmatprep.subr.mxu0 0.0
    %1835 = vmatpush1.msra.mxu0 0.0
    %1836 = vmatprep.subr.mxu0 0.0
    %1837 = vmatpush1.msra.mxu0 0.0
    %1838 = vmatprep.subr.mxu0 0.0
    %1839 = vmatpush1.msra.mxu0 0.0
    %1840 = vmatprep.subr.mxu0 0.0
    %1841 = vmatpush1.msra.mxu0 0.0
    %1842 = vmatprep.subr.mxu0 0.0
    %1843 = vmatpush1.msra.mxu0 0.0
    %1844 = vmatprep.subr.mxu0 0.0
    %1845 = vmatpush1.msra.mxu0 0.0
    %1846 = vmatprep.subr.mxu0 0.0
    %1847 = vmatpush1.msra.mxu0 0.0
    %1848 = vmatprep.mubr.f32.mxu0 0.0
    %v1849 = vand.u32 %v56, 4294901760
    %1850 = vmatmul.mubr.f32.gmra.mrb[0].mxu0 %v1849
    %v1851 = vpop.f32.mrb[0].mxu0
    %v1852 = vadd.f32 %v1761, %v1851
    %v1853 = vpop.f32.mrb[0].mxu0
    %1854 = vmatprep.mubr.f32.mxu0 0.0
    %v1855 = vand.u32 %v59, 4294901760
    %1856 = vmatmul.mubr.f32.gmra.mrb[0].mxu0 %v1855
    %v1857 = vpop.f32.mrb[0].mxu0
    %v1858 = vadd.f32 %v1771, %v1857
    %v1859 = vpop.f32.mrb[0].mxu0
    %1860 = vdwg.mxu0
    %1861 = vmatprep.subr.mxu0 0.0
    %v1862 = vand.u32 %v1684, 4294901760
    %v1863 = vsub.f32 %v1684, %v1862
    %1864 = vmatpush1.msra.mxu0 %v1863
    %1865 = vmatprep.subr.mxu0 0.0
    %v1866 = vand.u32 %v1686, 4294901760
    %v1867 = vsub.f32 %v1686, %v1866
    %1868 = vmatpush1.msra.mxu0 %v1867
    %1869 = vmatprep.subr.mxu0 0.0
    %1870 = vmatpush1.msra.mxu0 0.0
    %1871 = vmatprep.subr.mxu0 0.0
    %1872 = vmatpush1.msra.mxu0 0.0
    %1873 = vmatprep.subr.mxu0 0.0
    %1874 = vmatpush1.msra.mxu0 0.0
    %1875 = vmatprep.subr.mxu0 0.0
    %1876 = vmatpush1.msra.mxu0 0.0
    %1877 = vmatprep.subr.mxu0 0.0
    %1878 = vmatpush1.msra.mxu0 0.0
    %1879 = vmatprep.subr.mxu0 0.0
    %1880 = vmatpush1.msra.mxu0 0.0
    %1881 = vmatprep.subr.mxu0 0.0
    %1882 = vmatpush1.msra.mxu0 0.0
    %1883 = vmatprep.subr.mxu0 0.0
    %1884 = vmatpush1.msra.mxu0 0.0
    %1885 = vmatprep.subr.mxu0 0.0
    %1886 = vmatpush1.msra.mxu0 0.0
    %1887 = vmatprep.subr.mxu0 0.0
    %1888 = vmatpush1.msra.mxu0 0.0
    %1889 = vmatprep.subr.mxu0 0.0
    %1890 = vmatpush1.msra.mxu0 0.0
    %1891 = vmatprep.subr.mxu0 0.0
    %1892 = vmatpush1.msra.mxu0 0.0
    %1893 = vmatprep.subr.mxu0 0.0
    %1894 = vmatpush1.msra.mxu0 0.0
    %1895 = vmatprep.subr.mxu0 0.0
    %1896 = vmatpush1.msra.mxu0 0.0
    %1897 = vmatprep.subr.mxu0 0.0
    %1898 = vmatpush1.msra.mxu0 0.0
    %1899 = vmatprep.subr.mxu0 0.0
    %1900 = vmatpush1.msra.mxu0 0.0
    %1901 = vmatprep.subr.mxu0 0.0
    %1902 = vmatpush1.msra.mxu0 0.0
    %1903 = vmatprep.subr.mxu0 0.0
    %1904 = vmatpush1.msra.mxu0 0.0
    %1905 = vmatprep.subr.mxu0 0.0
    %1906 = vmatpush1.msra.mxu0 0.0
    %1907 = vmatprep.subr.mxu0 0.0
    %1908 = vmatpush1.msra.mxu0 0.0
    %1909 = vmatprep.subr.mxu0 0.0
    %1910 = vmatpush1.msra.mxu0 0.0
    %1911 = vmatprep.subr.mxu0 0.0
    %1912 = vmatpush1.msra.mxu0 0.0
    %1913 = vmatprep.subr.mxu0 0.0
    %1914 = vmatpush1.msra.mxu0 0.0
    %1915 = vmatprep.subr.mxu0 0.0
    %1916 = vmatpush1.msra.mxu0 0.0
    %1917 = vmatprep.subr.mxu0 0.0
    %1918 = vmatpush1.msra.mxu0 0.0
    %1919 = vmatprep.subr.mxu0 0.0
    %1920 = vmatpush1.msra.mxu0 0.0
    %1921 = vmatprep.subr.mxu0 0.0
    %1922 = vmatpush1.msra.mxu0 0.0
    %1923 = vmatprep.subr.mxu0 0.0
    %1924 = vmatpush1.msra.mxu0 0.0
    %1925 = vmatprep.subr.mxu0 0.0
    %1926 = vmatpush1.msra.mxu0 0.0
    %1927 = vmatprep.subr.mxu0 0.0
    %1928 = vmatpush1.msra.mxu0 0.0
    %1929 = vmatprep.mubr.f32.mxu0 0.0
    %v1930 = vand.u32 %v56, 4294901760
    %v1931 = vsub.f32 %v56, %v1930
    %1932 = vmatmul.mubr.f32.gmra.mrb[0].mxu0 %v1931
    %v1933 = vpop.f32.mrb[0].mxu0
    %v1934 = vadd.f32 %v1852, %v1933
    %v1935 = vpop.f32.mrb[0].mxu0
    %1936 = vmatprep.mubr.f32.mxu0 0.0
    %v1937 = vand.u32 %v59, 4294901760
    %v1938 = vsub.f32 %v59, %v1937
    %1939 = vmatmul.mubr.f32.gmra.mrb[0].mxu0 %v1938
    %v1940 = vpop.f32.mrb[0].mxu0
    %v1941 = vadd.f32 %v1858, %v1940
    %v1942 = vpop.f32.mrb[0].mxu0
    %1943 = vdwg.mxu0
    %1944 = vmatprep.subr.mxu0 0.0
    %v1945 = vand.u32 %v1684, 4294901760
    %1946 = vmatpush1.msra.mxu0 %v1945
    %1947 = vmatprep.subr.mxu0 0.0
    %v1948 = vand.u32 %v1686, 4294901760
    %1949 = vmatpush1.msra.mxu0 %v1948
    %1950 = vmatprep.subr.mxu0 0.0
    %1951 = vmatpush1.msra.mxu0 0.0
    %1952 = vmatprep.subr.mxu0 0.0
    %1953 = vmatpush1.msra.mxu0 0.0
    %1954 = vmatprep.subr.mxu0 0.0
    %1955 = vmatpush1.msra.mxu0 0.0
    %1956 = vmatprep.subr.mxu0 0.0
    %1957 = vmatpush1.msra.mxu0 0.0
    %1958 = vmatprep.subr.mxu0 0.0
    %1959 = vmatpush1.msra.mxu0 0.0
    %1960 = vmatprep.subr.mxu0 0.0
    %1961 = vmatpush1.msra.mxu0 0.0
    %1962 = vmatprep.subr.mxu0 0.0
    %1963 = vmatpush1.msra.mxu0 0.0
    %1964 = vmatprep.subr.mxu0 0.0
    %1965 = vmatpush1.msra.mxu0 0.0
    %1966 = vmatprep.subr.mxu0 0.0
    %1967 = vmatpush1.msra.mxu0 0.0
    %1968 = vmatprep.subr.mxu0 0.0
    %1969 = vmatpush1.msra.mxu0 0.0
    %1970 = vmatprep.subr.mxu0 0.0
    %1971 = vmatpush1.msra.mxu0 0.0
    %1972 = vmatprep.subr.mxu0 0.0
    %1973 = vmatpush1.msra.mxu0 0.0
    %1974 = vmatprep.subr.mxu0 0.0
    %1975 = vmatpush1.msra.mxu0 0.0
    %1976 = vmatprep.subr.mxu0 0.0
    %1977 = vmatpush1.msra.mxu0 0.0
    %1978 = vmatprep.subr.mxu0 0.0
    %1979 = vmatpush1.msra.mxu0 0.0
    %1980 = vmatprep.subr.mxu0 0.0
    %1981 = vmatpush1.msra.mxu0 0.0
    %1982 = vmatprep.subr.mxu0 0.0
    %1983 = vmatpush1.msra.mxu0 0.0
    %1984 = vmatprep.subr.mxu0 0.0
    %1985 = vmatpush1.msra.mxu0 0.0
    %1986 = vmatprep.subr.mxu0 0.0
    %1987 = vmatpush1.msra.mxu0 0.0
    %1988 = vmatprep.subr.mxu0 0.0
    %1989 = vmatpush1.msra.mxu0 0.0
    %1990 = vmatprep.subr.mxu0 0.0
    %1991 = vmatpush1.msra.mxu0 0.0
    %1992 = vmatprep.subr.mxu0 0.0
    %1993 = vmatpush1.msra.mxu0 0.0
    %1994 = vmatprep.subr.mxu0 0.0
    %1995 = vmatpush1.msra.mxu0 0.0
    %1996 = vmatprep.subr.mxu0 0.0
    %1997 = vmatpush1.msra.mxu0 0.0
    %1998 = vmatprep.subr.mxu0 0.0
    %1999 = vmatpush1.msra.mxu0 0.0
    %2000 = vmatprep.subr.mxu0 0.0
    %2001 = vmatpush1.msra.mxu0 0.0
    %2002 = vmatprep.subr.mxu0 0.0
    %2003 = vmatpush1.msra.mxu0 0.0
    %2004 = vmatprep.subr.mxu0 0.0
    %2005 = vmatpush1.msra.mxu0 0.0
    %2006 = vmatprep.subr.mxu0 0.0
    %2007 = vmatpush1.msra.mxu0 0.0
    %2008 = vmatprep.subr.mxu0 0.0
    %2009 = vmatpush1.msra.mxu0 0.0
    %2010 = vmatprep.mubr.f32.mxu0 0.0
    %v2011 = vand.u32 %v56, 4294901760
    %v2012 = vsub.f32 %v56, %v2011
    %v2013 = vand.u32 %v2012, 4294901760
    %2014 = vmatmul.mubr.f32.gmra.mrb[0].mxu0 %v2013
    %v2015 = vpop.f32.mrb[0].mxu0
    %v2016 = vadd.f32 %v1934, %v2015
    %v2017 = vpop.f32.mrb[0].mxu0
    %2018 = vmatprep.mubr.f32.mxu0 0.0
    %v2019 = vand.u32 %v59, 4294901760
    %v2020 = vsub.f32 %v59, %v2019
    %v2021 = vand.u32 %v2020, 4294901760
    %2022 = vmatmul.mubr.f32.gmra.mrb[0].mxu0 %v2021
    %v2023 = vpop.f32.mrb[0].mxu0
    %v2024 = vadd.f32 %v1941, %v2023
    %v2025 = vpop.f32.mrb[0].mxu0
    %2026 = vdwg.mxu0
    %2027 = vmatprep.subr.mxu0 0.0
    %v2028 = vand.u32 %v1684, 4294901760
    %v2029 = vsub.f32 %v1684, %v2028
    %v2030 = vand.u32 %v2029, 4294901760
    %2031 = vmatpush1.msra.mxu0 %v2030
    %2032 = vmatprep.subr.mxu0 0.0
    %v2033 = vand.u32 %v1686, 4294901760
    %v2034 = vsub.f32 %v1686, %v2033
    %v2035 = vand.u32 %v2034, 4294901760
    %2036 = vmatpush1.msra.mxu0 %v2035
    %2037 = vmatprep.subr.mxu0 0.0
    %2038 = vmatpush1.msra.mxu0 0.0
    %2039 = vmatprep.subr.mxu0 0.0
    %2040 = vmatpush1.msra.mxu0 0.0
    %2041 = vmatprep.subr.mxu0 0.0
    %2042 = vmatpush1.msra.mxu0 0.0
    %2043 = vmatprep.subr.mxu0 0.0
    %2044 = vmatpush1.msra.mxu0 0.0
    %2045 = vmatprep.subr.mxu0 0.0
    %2046 = vmatpush1.msra.mxu0 0.0
    %2047 = vmatprep.subr.mxu0 0.0
    %2048 = vmatpush1.msra.mxu0 0.0
    %2049 = vmatprep.subr.mxu0 0.0
    %2050 = vmatpush1.msra.mxu0 0.0
    %2051 = vmatprep.subr.mxu0 0.0
    %2052 = vmatpush1.msra.mxu0 0.0
    %2053 = vmatprep.subr.mxu0 0.0
    %2054 = vmatpush1.msra.mxu0 0.0
    %2055 = vmatprep.subr.mxu0 0.0
    %2056 = vmatpush1.msra.mxu0 0.0
    %2057 = vmatprep.subr.mxu0 0.0
    %2058 = vmatpush1.msra.mxu0 0.0
    %2059 = vmatprep.subr.mxu0 0.0
    %2060 = vmatpush1.msra.mxu0 0.0
    %2061 = vmatprep.subr.mxu0 0.0
    %2062 = vmatpush1.msra.mxu0 0.0
    %2063 = vmatprep.subr.mxu0 0.0
    %2064 = vmatpush1.msra.mxu0 0.0
    %2065 = vmatprep.subr.mxu0 0.0
    %2066 = vmatpush1.msra.mxu0 0.0
    %2067 = vmatprep.subr.mxu0 0.0
    %2068 = vmatpush1.msra.mxu0 0.0
    %2069 = vmatprep.subr.mxu0 0.0
    %2070 = vmatpush1.msra.mxu0 0.0
    %2071 = vmatprep.subr.mxu0 0.0
    %2072 = vmatpush1.msra.mxu0 0.0
    %2073 = vmatprep.subr.mxu0 0.0
    %2074 = vmatpush1.msra.mxu0 0.0
    %2075 = vmatprep.subr.mxu0 0.0
    %2076 = vmatpush1.msra.mxu0 0.0
    %2077 = vmatprep.subr.mxu0 0.0
    %2078 = vmatpush1.msra.mxu0 0.0
    %2079 = vmatprep.subr.mxu0 0.0
    %2080 = vmatpush1.msra.mxu0 0.0
    %2081 = vmatprep.subr.mxu0 0.0
    %2082 = vmatpush1.msra.mxu0 0.0
    %2083 = vmatprep.subr.mxu0 0.0
    %2084 = vmatpush1.msra.mxu0 0.0
    %2085 = vmatprep.subr.mxu0 0.0
    %2086 = vmatpush1.msra.mxu0 0.0
    %2087 = vmatprep.subr.mxu0 0.0
    %2088 = vmatpush1.msra.mxu0 0.0
    %2089 = vmatprep.subr.mxu0 0.0
    %2090 = vmatpush1.msra.mxu0 0.0
    %2091 = vmatprep.subr.mxu0 0.0
    %2092 = vmatpush1.msra.mxu0 0.0
    %2093 = vmatprep.subr.mxu0 0.0
    %2094 = vmatpush1.msra.mxu0 0.0
    %2095 = vmatprep.subr.mxu0 0.0
    %2096 = vmatpush1.msra.mxu0 0.0
    %2097 = vmatprep.mubr.f32.mxu0 0.0
    %v2098 = vand.u32 %v56, 4294901760
    %2099 = vmatmul.mubr.f32.gmra.mrb[0].mxu0 %v2098
    %v2100 = vpop.f32.mrb[0].mxu0
    %v2101 = vadd.f32 %v2016, %v2100
    %v2102 = vpop.f32.mrb[0].mxu0
    %2103 = vmatprep.mubr.f32.mxu0 0.0
    %v2104 = vand.u32 %v59, 4294901760
    %2105 = vmatmul.mubr.f32.gmra.mrb[0].mxu0 %v2104
    %v2106 = vpop.f32.mrb[0].mxu0
    %v2107 = vadd.f32 %v2024, %v2106
    %v2108 = vpop.f32.mrb[0].mxu0
    %2109 = vdwg.mxu0
    %2110 = vmatprep.subr.mxu0 0.0
    %v2111 = vand.u32 %v1684, 4294901760
    %2112 = vmatpush1.msra.mxu0 %v2111
    %2113 = vmatprep.subr.mxu0 0.0
    %v2114 = vand.u32 %v1686, 4294901760
    %2115 = vmatpush1.msra.mxu0 %v2114
    %2116 = vmatprep.subr.mxu0 0.0
    %2117 = vmatpush1.msra.mxu0 0.0
    %2118 = vmatprep.subr.mxu0 0.0
    %2119 = vmatpush1.msra.mxu0 0.0
    %2120 = vmatprep.subr.mxu0 0.0
    %2121 = vmatpush1.msra.mxu0 0.0
    %2122 = vmatprep.subr.mxu0 0.0
    %2123 = vmatpush1.msra.mxu0 0.0
    %2124 = vmatprep.subr.mxu0 0.0
    %2125 = vmatpush1.msra.mxu0 0.0
    %2126 = vmatprep.subr.mxu0 0.0
    %2127 = vmatpush1.msra.mxu0 0.0
    %2128 = vmatprep.subr.mxu0 0.0
    %2129 = vmatpush1.msra.mxu0 0.0
    %2130 = vmatprep.subr.mxu0 0.0
    %2131 = vmatpush1.msra.mxu0 0.0
    %2132 = vmatprep.subr.mxu0 0.0
    %2133 = vmatpush1.msra.mxu0 0.0
    %2134 = vmatprep.subr.mxu0 0.0
    %2135 = vmatpush1.msra.mxu0 0.0
    %2136 = vmatprep.subr.mxu0 0.0
    %2137 = vmatpush1.msra.mxu0 0.0
    %2138 = vmatprep.subr.mxu0 0.0
    %2139 = vmatpush1.msra.mxu0 0.0
    %2140 = vmatprep.subr.mxu0 0.0
    %2141 = vmatpush1.msra.mxu0 0.0
    %2142 = vmatprep.subr.mxu0 0.0
    %2143 = vmatpush1.msra.mxu0 0.0
    %2144 = vmatprep.subr.mxu0 0.0
    %2145 = vmatpush1.msra.mxu0 0.0
    %2146 = vmatprep.subr.mxu0 0.0
    %2147 = vmatpush1.msra.mxu0 0.0
    %2148 = vmatprep.subr.mxu0 0.0
    %2149 = vmatpush1.msra.mxu0 0.0
    %2150 = vmatprep.subr.mxu0 0.0
    %2151 = vmatpush1.msra.mxu0 0.0
    %2152 = vmatprep.subr.mxu0 0.0
    %2153 = vmatpush1.msra.mxu0 0.0
    %2154 = vmatprep.subr.mxu0 0.0
    %2155 = vmatpush1.msra.mxu0 0.0
    %2156 = vmatprep.subr.mxu0 0.0
    %2157 = vmatpush1.msra.mxu0 0.0
    %2158 = vmatprep.subr.mxu0 0.0
    %2159 = vmatpush1.msra.mxu0 0.0
    %2160 = vmatprep.subr.mxu0 0.0
    %2161 = vmatpush1.msra.mxu0 0.0
    %2162 = vmatprep.subr.mxu0 0.0
    %2163 = vmatpush1.msra.mxu0 0.0
    %2164 = vmatprep.subr.mxu0 0.0
    %2165 = vmatpush1.msra.mxu0 0.0
    %2166 = vmatprep.subr.mxu0 0.0
    %2167 = vmatpush1.msra.mxu0 0.0
    %2168 = vmatprep.subr.mxu0 0.0
    %2169 = vmatpush1.msra.mxu0 0.0
    %2170 = vmatprep.subr.mxu0 0.0
    %2171 = vmatpush1.msra.mxu0 0.0
    %2172 = vmatprep.subr.mxu0 0.0
    %2173 = vmatpush1.msra.mxu0 0.0
    %2174 = vmatprep.subr.mxu0 0.0
    %2175 = vmatpush1.msra.mxu0 0.0
    %2176 = vmatprep.mubr.f32.mxu0 0.0
    %v2177 = vand.u32 %v56, 4294901760
    %2178 = vmatmul.mubr.f32.gmra.mrb[0].mxu0 %v2177
    %v2179 = vpop.f32.mrb[0].mxu0
    %v2180 = vadd.f32 %v2101, %v2179
    %v2181 = vpop.f32.mrb[0].mxu0
    %2182 = vmatprep.mubr.f32.mxu0 0.0
    %v2183 = vand.u32 %v59, 4294901760
    %2184 = vmatmul.mubr.f32.gmra.mrb[0].mxu0 %v2183
    %v2185 = vpop.f32.mrb[0].mxu0
    %v2186 = vadd.f32 %v2107, %v2185
    %v2187 = vpop.f32.mrb[0].mxu0
    %2188 = vdwg.mxu0
    %v2189 = vlog2.pop %v2180
    %v2190 = vmul.f32 %v2189, 0.6931472
    %v2191 = vlog2.pop %v2186
    %v2192 = vmul.f32 %v2191, 0.6931472
    %v2193 = vadd.f32 %v2190, %v1680
    %v2194 = vadd.f32 %v2192, %v1680
    %v2195 = vadd.f32 %v2193, %v1668
    %v2196 = vadd.f32 %v2194, %v1669
    %v2197 = vsel %vm1671, 1, 0
    %v2198 = vlaneseq
    %v2199 = vshrl.u32 %v2198, 7
    %v2200 = vsub.s32 0, %v2199
    %v2201 = vrot.slane %v2197, %v2200
    %vm2202 = vcmp.eq.s32.totalorder %v2201, 1
    %v2203 = vsel %vm2202, %v1665, %v2195
    %v2204 = vsel %vm2202, %v1666, %v2196
    %2205 = vst.msk [vmem:[#allocation2] sm:$0xff] %vm38, %v2203
    %2206 = vst.msk [vmem:[#allocation2 + $0x8] sm:$0xff] %vm38, %v2204
    %v2207 = vld [vmem:[#allocation2] sm:$0xff]
    %v2208 = vld [vmem:[#allocation2 + $0x8] sm:$0xff]
    %s2209 = scalar_lea.vmem %s1, 64
    %v2210 = vld [vmem:[%s2209] sm:$0xff]
    %v2211 = vld [vmem:[%s2209 + $0x8] sm:$0xff]
    %v2212 = vld [vmem:[%s2 + $0x4] sm:$0x1]
    %vm2213 = vcmp.gt.f32.partialorder %v2212, 0.5
    %v2214 = vsel %vm38, %v2207, -inf
    %v2215 = vsel %vm38, %v2208, -inf
    %v2216 = vmax.f32 %v2214, %v2215
    %v2217 = vrot.slane %v2216, 4
    %v2218 = vmax.f32 %v2216, %v2217
    %v2219 = vrot.slane %v2218, 2
    %v2220 = vmax.f32 %v2218, %v2219
    %v2221 = vrot.slane %v2220, 1
    %v2222 = vmax.f32 %v2220, %v2221
    %v2223 = vsub.f32 %v2207, %v2222
    %v2224 = vsub.f32 %v2208, %v2222
    %v2225 = vmul.f32 %v2223, 1.442695
    %v2226 = vpow.pop %v2225
    %v2227 = vmul.f32 %v2224, 1.442695
    %v2228 = vpow.pop %v2227
    %2229 = vmatprep.subr.mxu0 0.0
    %v2230 = vand.u32 %v2226, 4294901760
    %2231 = vmatpush1.msra.mxu0 %v2230
    %2232 = vmatprep.subr.mxu0 0.0
    %v2233 = vand.u32 %v2228, 4294901760
    %2234 = vmatpush1.msra.mxu0 %v2233
    %2235 = vmatprep.subr.mxu0 0.0
    %2236 = vmatpush1.msra.mxu0 0.0
    %2237 = vmatprep.subr.mxu0 0.0
    %2238 = vmatpush1.msra.mxu0 0.0
    %2239 = vmatprep.subr.mxu0 0.0
    %2240 = vmatpush1.msra.mxu0 0.0
    %2241 = vmatprep.subr.mxu0 0.0
    %2242 = vmatpush1.msra.mxu0 0.0
    %2243 = vmatprep.subr.mxu0 0.0
    %2244 = vmatpush1.msra.mxu0 0.0
    %2245 = vmatprep.subr.mxu0 0.0
    %2246 = vmatpush1.msra.mxu0 0.0
    %2247 = vmatprep.subr.mxu0 0.0
    %2248 = vmatpush1.msra.mxu0 0.0
    %2249 = vmatprep.subr.mxu0 0.0
    %2250 = vmatpush1.msra.mxu0 0.0
    %2251 = vmatprep.subr.mxu0 0.0
    %2252 = vmatpush1.msra.mxu0 0.0
    %2253 = vmatprep.subr.mxu0 0.0
    %2254 = vmatpush1.msra.mxu0 0.0
    %2255 = vmatprep.subr.mxu0 0.0
    %2256 = vmatpush1.msra.mxu0 0.0
    %2257 = vmatprep.subr.mxu0 0.0
    %2258 = vmatpush1.msra.mxu0 0.0
    %2259 = vmatprep.subr.mxu0 0.0
    %2260 = vmatpush1.msra.mxu0 0.0
    %2261 = vmatprep.subr.mxu0 0.0
    %2262 = vmatpush1.msra.mxu0 0.0
    %2263 = vmatprep.subr.mxu0 0.0
    %2264 = vmatpush1.msra.mxu0 0.0
    %2265 = vmatprep.subr.mxu0 0.0
    %2266 = vmatpush1.msra.mxu0 0.0
    %2267 = vmatprep.subr.mxu0 0.0
    %2268 = vmatpush1.msra.mxu0 0.0
    %2269 = vmatprep.subr.mxu0 0.0
    %2270 = vmatpush1.msra.mxu0 0.0
    %2271 = vmatprep.subr.mxu0 0.0
    %2272 = vmatpush1.msra.mxu0 0.0
    %2273 = vmatprep.subr.mxu0 0.0
    %2274 = vmatpush1.msra.mxu0 0.0
    %2275 = vmatprep.subr.mxu0 0.0
    %2276 = vmatpush1.msra.mxu0 0.0
    %2277 = vmatprep.subr.mxu0 0.0
    %2278 = vmatpush1.msra.mxu0 0.0
    %2279 = vmatprep.subr.mxu0 0.0
    %2280 = vmatpush1.msra.mxu0 0.0
    %2281 = vmatprep.subr.mxu0 0.0
    %2282 = vmatpush1.msra.mxu0 0.0
    %2283 = vmatprep.subr.mxu0 0.0
    %2284 = vmatpush1.msra.mxu0 0.0
    %2285 = vmatprep.subr.mxu0 0.0
    %2286 = vmatpush1.msra.mxu0 0.0
    %2287 = vmatprep.subr.mxu0 0.0
    %2288 = vmatpush1.msra.mxu0 0.0
    %2289 = vmatprep.subr.mxu0 0.0
    %2290 = vmatpush1.msra.mxu0 0.0
    %2291 = vmatprep.subr.mxu0 0.0
    %2292 = vmatpush1.msra.mxu0 0.0
    %2293 = vmatprep.subr.mxu0 0.0
    %2294 = vmatpush1.msra.mxu0 0.0
    %2295 = vmatprep.mubr.f32.mxu0 0.0
    %v2296 = vand.u32 %v56, 4294901760
    %v2297 = vsub.f32 %v56, %v2296
    %v2298 = vand.u32 %v2297, 4294901760
    %v2299 = vsub.f32 %v2297, %v2298
    %v2300 = vand.u32 %v2299, 4294901760
    %2301 = vmatmul.mubr.f32.gmra.mrb[0].mxu0 %v2300
    %v2302 = vpop.f32.mrb[0].mxu0
    %v2303 = vadd.f32 0.0, %v2302
    %v2304 = vpop.f32.mrb[0].mxu0
    %2305 = vmatprep.mubr.f32.mxu0 0.0
    %v2306 = vand.u32 %v59, 4294901760
    %v2307 = vsub.f32 %v59, %v2306
    %v2308 = vand.u32 %v2307, 4294901760
    %v2309 = vsub.f32 %v2307, %v2308
    %v2310 = vand.u32 %v2309, 4294901760
    %2311 = vmatmul.mubr.f32.gmra.mrb[0].mxu0 %v2310
    %v2312 = vpop.f32.mrb[0].mxu0
    %v2313 = vadd.f32 0.0, %v2312
    %v2314 = vpop.f32.mrb[0].mxu0
    %2315 = vdwg.mxu0
    %2316 = vmatprep.subr.mxu0 0.0
    %v2317 = vand.u32 %v2226, 4294901760
    %v2318 = vsub.f32 %v2226, %v2317
    %v2319 = vand.u32 %v2318, 4294901760
    %v2320 = vsub.f32 %v2318, %v2319
    %v2321 = vand.u32 %v2320, 4294901760
    %2322 = vmatpush1.msra.mxu0 %v2321
    %2323 = vmatprep.subr.mxu0 0.0
    %v2324 = vand.u32 %v2228, 4294901760
    %v2325 = vsub.f32 %v2228, %v2324
    %v2326 = vand.u32 %v2325, 4294901760
    %v2327 = vsub.f32 %v2325, %v2326
    %v2328 = vand.u32 %v2327, 4294901760
    %2329 = vmatpush1.msra.mxu0 %v2328
    %2330 = vmatprep.subr.mxu0 0.0
    %2331 = vmatpush1.msra.mxu0 0.0
    %2332 = vmatprep.subr.mxu0 0.0
    %2333 = vmatpush1.msra.mxu0 0.0
    %2334 = vmatprep.subr.mxu0 0.0
    %2335 = vmatpush1.msra.mxu0 0.0
    %2336 = vmatprep.subr.mxu0 0.0
    %2337 = vmatpush1.msra.mxu0 0.0
    %2338 = vmatprep.subr.mxu0 0.0
    %2339 = vmatpush1.msra.mxu0 0.0
    %2340 = vmatprep.subr.mxu0 0.0
    %2341 = vmatpush1.msra.mxu0 0.0
    %2342 = vmatprep.subr.mxu0 0.0
    %2343 = vmatpush1.msra.mxu0 0.0
    %2344 = vmatprep.subr.mxu0 0.0
    %2345 = vmatpush1.msra.mxu0 0.0
    %2346 = vmatprep.subr.mxu0 0.0
    %2347 = vmatpush1.msra.mxu0 0.0
    %2348 = vmatprep.subr.mxu0 0.0
    %2349 = vmatpush1.msra.mxu0 0.0
    %2350 = vmatprep.subr.mxu0 0.0
    %2351 = vmatpush1.msra.mxu0 0.0
    %2352 = vmatprep.subr.mxu0 0.0
    %2353 = vmatpush1.msra.mxu0 0.0
    %2354 = vmatprep.subr.mxu0 0.0
    %2355 = vmatpush1.msra.mxu0 0.0
    %2356 = vmatprep.subr.mxu0 0.0
    %2357 = vmatpush1.msra.mxu0 0.0
    %2358 = vmatprep.subr.mxu0 0.0
    %2359 = vmatpush1.msra.mxu0 0.0
    %2360 = vmatprep.subr.mxu0 0.0
    %2361 = vmatpush1.msra.mxu0 0.0
    %2362 = vmatprep.subr.mxu0 0.0
    %2363 = vmatpush1.msra.mxu0 0.0
    %2364 = vmatprep.subr.mxu0 0.0
    %2365 = vmatpush1.msra.mxu0 0.0
    %2366 = vmatprep.subr.mxu0 0.0
    %2367 = vmatpush1.msra.mxu0 0.0
    %2368 = vmatprep.subr.mxu0 0.0
    %2369 = vmatpush1.msra.mxu0 0.0
    %2370 = vmatprep.subr.mxu0 0.0
    %2371 = vmatpush1.msra.mxu0 0.0
    %2372 = vmatprep.subr.mxu0 0.0
    %2373 = vmatpush1.msra.mxu0 0.0
    %2374 = vmatprep.subr.mxu0 0.0
    %2375 = vmatpush1.msra.mxu0 0.0
    %2376 = vmatprep.subr.mxu0 0.0
    %2377 = vmatpush1.msra.mxu0 0.0
    %2378 = vmatprep.subr.mxu0 0.0
    %2379 = vmatpush1.msra.mxu0 0.0
    %2380 = vmatprep.subr.mxu0 0.0
    %2381 = vmatpush1.msra.mxu0 0.0
    %2382 = vmatprep.subr.mxu0 0.0
    %2383 = vmatpush1.msra.mxu0 0.0
    %2384 = vmatprep.subr.mxu0 0.0
    %2385 = vmatpush1.msra.mxu0 0.0
    %2386 = vmatprep.subr.mxu0 0.0
    %2387 = vmatpush1.msra.mxu0 0.0
    %2388 = vmatprep.subr.mxu0 0.0
    %2389 = vmatpush1.msra.mxu0 0.0
    %2390 = vmatprep.mubr.f32.mxu0 0.0
    %v2391 = vand.u32 %v56, 4294901760
    %2392 = vmatmul.mubr.f32.gmra.mrb[0].mxu0 %v2391
    %v2393 = vpop.f32.mrb[0].mxu0
    %v2394 = vadd.f32 %v2303, %v2393
    %v2395 = vpop.f32.mrb[0].mxu0
    %2396 = vmatprep.mubr.f32.mxu0 0.0
    %v2397 = vand.u32 %v59, 4294901760
    %2398 = vmatmul.mubr.f32.gmra.mrb[0].mxu0 %v2397
    %v2399 = vpop.f32.mrb[0].mxu0
    %v2400 = vadd.f32 %v2313, %v2399
    %v2401 = vpop.f32.mrb[0].mxu0
    %2402 = vdwg.mxu0
    %2403 = vmatprep.subr.mxu0 0.0
    %v2404 = vand.u32 %v2226, 4294901760
    %v2405 = vsub.f32 %v2226, %v2404
    %2406 = vmatpush1.msra.mxu0 %v2405
    %2407 = vmatprep.subr.mxu0 0.0
    %v2408 = vand.u32 %v2228, 4294901760
    %v2409 = vsub.f32 %v2228, %v2408
    %2410 = vmatpush1.msra.mxu0 %v2409
    %2411 = vmatprep.subr.mxu0 0.0
    %2412 = vmatpush1.msra.mxu0 0.0
    %2413 = vmatprep.subr.mxu0 0.0
    %2414 = vmatpush1.msra.mxu0 0.0
    %2415 = vmatprep.subr.mxu0 0.0
    %2416 = vmatpush1.msra.mxu0 0.0
    %2417 = vmatprep.subr.mxu0 0.0
    %2418 = vmatpush1.msra.mxu0 0.0
    %2419 = vmatprep.subr.mxu0 0.0
    %2420 = vmatpush1.msra.mxu0 0.0
    %2421 = vmatprep.subr.mxu0 0.0
    %2422 = vmatpush1.msra.mxu0 0.0
    %2423 = vmatprep.subr.mxu0 0.0
    %2424 = vmatpush1.msra.mxu0 0.0
    %2425 = vmatprep.subr.mxu0 0.0
    %2426 = vmatpush1.msra.mxu0 0.0
    %2427 = vmatprep.subr.mxu0 0.0
    %2428 = vmatpush1.msra.mxu0 0.0
    %2429 = vmatprep.subr.mxu0 0.0
    %2430 = vmatpush1.msra.mxu0 0.0
    %2431 = vmatprep.subr.mxu0 0.0
    %2432 = vmatpush1.msra.mxu0 0.0
    %2433 = vmatprep.subr.mxu0 0.0
    %2434 = vmatpush1.msra.mxu0 0.0
    %2435 = vmatprep.subr.mxu0 0.0
    %2436 = vmatpush1.msra.mxu0 0.0
    %2437 = vmatprep.subr.mxu0 0.0
    %2438 = vmatpush1.msra.mxu0 0.0
    %2439 = vmatprep.subr.mxu0 0.0
    %2440 = vmatpush1.msra.mxu0 0.0
    %2441 = vmatprep.subr.mxu0 0.0
    %2442 = vmatpush1.msra.mxu0 0.0
    %2443 = vmatprep.subr.mxu0 0.0
    %2444 = vmatpush1.msra.mxu0 0.0
    %2445 = vmatprep.subr.mxu0 0.0
    %2446 = vmatpush1.msra.mxu0 0.0
    %2447 = vmatprep.subr.mxu0 0.0
    %2448 = vmatpush1.msra.mxu0 0.0
    %2449 = vmatprep.subr.mxu0 0.0
    %2450 = vmatpush1.msra.mxu0 0.0
    %2451 = vmatprep.subr.mxu0 0.0
    %2452 = vmatpush1.msra.mxu0 0.0
    %2453 = vmatprep.subr.mxu0 0.0
    %2454 = vmatpush1.msra.mxu0 0.0
    %2455 = vmatprep.subr.mxu0 0.0
    %2456 = vmatpush1.msra.mxu0 0.0
    %2457 = vmatprep.subr.mxu0 0.0
    %2458 = vmatpush1.msra.mxu0 0.0
    %2459 = vmatprep.subr.mxu0 0.0
    %2460 = vmatpush1.msra.mxu0 0.0
    %2461 = vmatprep.subr.mxu0 0.0
    %2462 = vmatpush1.msra.mxu0 0.0
    %2463 = vmatprep.subr.mxu0 0.0
    %2464 = vmatpush1.msra.mxu0 0.0
    %2465 = vmatprep.subr.mxu0 0.0
    %2466 = vmatpush1.msra.mxu0 0.0
    %2467 = vmatprep.subr.mxu0 0.0
    %2468 = vmatpush1.msra.mxu0 0.0
    %2469 = vmatprep.subr.mxu0 0.0
    %2470 = vmatpush1.msra.mxu0 0.0
    %2471 = vmatprep.mubr.f32.mxu0 0.0
    %v2472 = vand.u32 %v56, 4294901760
    %v2473 = vsub.f32 %v56, %v2472
    %2474 = vmatmul.mubr.f32.gmra.mrb[0].mxu0 %v2473
    %v2475 = vpop.f32.mrb[0].mxu0
    %v2476 = vadd.f32 %v2394, %v2475
    %v2477 = vpop.f32.mrb[0].mxu0
    %2478 = vmatprep.mubr.f32.mxu0 0.0
    %v2479 = vand.u32 %v59, 4294901760
    %v2480 = vsub.f32 %v59, %v2479
    %2481 = vmatmul.mubr.f32.gmra.mrb[0].mxu0 %v2480
    %v2482 = vpop.f32.mrb[0].mxu0
    %v2483 = vadd.f32 %v2400, %v2482
    %v2484 = vpop.f32.mrb[0].mxu0
    %2485 = vdwg.mxu0
    %2486 = vmatprep.subr.mxu0 0.0
    %v2487 = vand.u32 %v2226, 4294901760
    %2488 = vmatpush1.msra.mxu0 %v2487
    %2489 = vmatprep.subr.mxu0 0.0
    %v2490 = vand.u32 %v2228, 4294901760
    %2491 = vmatpush1.msra.mxu0 %v2490
    %2492 = vmatprep.subr.mxu0 0.0
    %2493 = vmatpush1.msra.mxu0 0.0
    %2494 = vmatprep.subr.mxu0 0.0
    %2495 = vmatpush1.msra.mxu0 0.0
    %2496 = vmatprep.subr.mxu0 0.0
    %2497 = vmatpush1.msra.mxu0 0.0
    %2498 = vmatprep.subr.mxu0 0.0
    %2499 = vmatpush1.msra.mxu0 0.0
    %2500 = vmatprep.subr.mxu0 0.0
    %2501 = vmatpush1.msra.mxu0 0.0
    %2502 = vmatprep.subr.mxu0 0.0
    %2503 = vmatpush1.msra.mxu0 0.0
    %2504 = vmatprep.subr.mxu0 0.0
    %2505 = vmatpush1.msra.mxu0 0.0
    %2506 = vmatprep.subr.mxu0 0.0
    %2507 = vmatpush1.msra.mxu0 0.0
    %2508 = vmatprep.subr.mxu0 0.0
    %2509 = vmatpush1.msra.mxu0 0.0
    %2510 = vmatprep.subr.mxu0 0.0
    %2511 = vmatpush1.msra.mxu0 0.0
    %2512 = vmatprep.subr.mxu0 0.0
    %2513 = vmatpush1.msra.mxu0 0.0
    %2514 = vmatprep.subr.mxu0 0.0
    %2515 = vmatpush1.msra.mxu0 0.0
    %2516 = vmatprep.subr.mxu0 0.0
    %2517 = vmatpush1.msra.mxu0 0.0
    %2518 = vmatprep.subr.mxu0 0.0
    %2519 = vmatpush1.msra.mxu0 0.0
    %2520 = vmatprep.subr.mxu0 0.0
    %2521 = vmatpush1.msra.mxu0 0.0
    %2522 = vmatprep.subr.mxu0 0.0
    %2523 = vmatpush1.msra.mxu0 0.0
    %2524 = vmatprep.subr.mxu0 0.0
    %2525 = vmatpush1.msra.mxu0 0.0
    %2526 = vmatprep.subr.mxu0 0.0
    %2527 = vmatpush1.msra.mxu0 0.0
    %2528 = vmatprep.subr.mxu0 0.0
    %2529 = vmatpush1.msra.mxu0 0.0
    %2530 = vmatprep.subr.mxu0 0.0
    %2531 = vmatpush1.msra.mxu0 0.0
    %2532 = vmatprep.subr.mxu0 0.0
    %2533 = vmatpush1.msra.mxu0 0.0
    %2534 = vmatprep.subr.mxu0 0.0
    %2535 = vmatpush1.msra.mxu0 0.0
    %2536 = vmatprep.subr.mxu0 0.0
    %2537 = vmatpush1.msra.mxu0 0.0
    %2538 = vmatprep.subr.mxu0 0.0
    %2539 = vmatpush1.msra.mxu0 0.0
    %2540 = vmatprep.subr.mxu0 0.0
    %2541 = vmatpush1.msra.mxu0 0.0
    %2542 = vmatprep.subr.mxu0 0.0
    %2543 = vmatpush1.msra.mxu0 0.0
    %2544 = vmatprep.subr.mxu0 0.0
    %2545 = vmatpush1.msra.mxu0 0.0
    %2546 = vmatprep.subr.mxu0 0.0
    %2547 = vmatpush1.msra.mxu0 0.0
    %2548 = vmatprep.subr.mxu0 0.0
    %2549 = vmatpush1.msra.mxu0 0.0
    %2550 = vmatprep.subr.mxu0 0.0
    %2551 = vmatpush1.msra.mxu0 0.0
    %2552 = vmatprep.mubr.f32.mxu0 0.0
    %v2553 = vand.u32 %v56, 4294901760
    %v2554 = vsub.f32 %v56, %v2553
    %v2555 = vand.u32 %v2554, 4294901760
    %2556 = vmatmul.mubr.f32.gmra.mrb[0].mxu0 %v2555
    %v2557 = vpop.f32.mrb[0].mxu0
    %v2558 = vadd.f32 %v2476, %v2557
    %v2559 = vpop.f32.mrb[0].mxu0
    %2560 = vmatprep.mubr.f32.mxu0 0.0
    %v2561 = vand.u32 %v59, 4294901760
    %v2562 = vsub.f32 %v59, %v2561
    %v2563 = vand.u32 %v2562, 4294901760
    %2564 = vmatmul.mubr.f32.gmra.mrb[0].mxu0 %v2563
    %v2565 = vpop.f32.mrb[0].mxu0
    %v2566 = vadd.f32 %v2483, %v2565
    %v2567 = vpop.f32.mrb[0].mxu0
    %2568 = vdwg.mxu0
    %2569 = vmatprep.subr.mxu0 0.0
    %v2570 = vand.u32 %v2226, 4294901760
    %v2571 = vsub.f32 %v2226, %v2570
    %v2572 = vand.u32 %v2571, 4294901760
    %2573 = vmatpush1.msra.mxu0 %v2572
    %2574 = vmatprep.subr.mxu0 0.0
    %v2575 = vand.u32 %v2228, 4294901760
    %v2576 = vsub.f32 %v2228, %v2575
    %v2577 = vand.u32 %v2576, 4294901760
    %2578 = vmatpush1.msra.mxu0 %v2577
    %2579 = vmatprep.subr.mxu0 0.0
    %2580 = vmatpush1.msra.mxu0 0.0
    %2581 = vmatprep.subr.mxu0 0.0
    %2582 = vmatpush1.msra.mxu0 0.0
    %2583 = vmatprep.subr.mxu0 0.0
    %2584 = vmatpush1.msra.mxu0 0.0
    %2585 = vmatprep.subr.mxu0 0.0
    %2586 = vmatpush1.msra.mxu0 0.0
    %2587 = vmatprep.subr.mxu0 0.0
    %2588 = vmatpush1.msra.mxu0 0.0
    %2589 = vmatprep.subr.mxu0 0.0
    %2590 = vmatpush1.msra.mxu0 0.0
    %2591 = vmatprep.subr.mxu0 0.0
    %2592 = vmatpush1.msra.mxu0 0.0
    %2593 = vmatprep.subr.mxu0 0.0
    %2594 = vmatpush1.msra.mxu0 0.0
    %2595 = vmatprep.subr.mxu0 0.0
    %2596 = vmatpush1.msra.mxu0 0.0
    %2597 = vmatprep.subr.mxu0 0.0
    %2598 = vmatpush1.msra.mxu0 0.0
    %2599 = vmatprep.subr.mxu0 0.0
    %2600 = vmatpush1.msra.mxu0 0.0
    %2601 = vmatprep.subr.mxu0 0.0
    %2602 = vmatpush1.msra.mxu0 0.0
    %2603 = vmatprep.subr.mxu0 0.0
    %2604 = vmatpush1.msra.mxu0 0.0
    %2605 = vmatprep.subr.mxu0 0.0
    %2606 = vmatpush1.msra.mxu0 0.0
    %2607 = vmatprep.subr.mxu0 0.0
    %2608 = vmatpush1.msra.mxu0 0.0
    %2609 = vmatprep.subr.mxu0 0.0
    %2610 = vmatpush1.msra.mxu0 0.0
    %2611 = vmatprep.subr.mxu0 0.0
    %2612 = vmatpush1.msra.mxu0 0.0
    %2613 = vmatprep.subr.mxu0 0.0
    %2614 = vmatpush1.msra.mxu0 0.0
    %2615 = vmatprep.subr.mxu0 0.0
    %2616 = vmatpush1.msra.mxu0 0.0
    %2617 = vmatprep.subr.mxu0 0.0
    %2618 = vmatpush1.msra.mxu0 0.0
    %2619 = vmatprep.subr.mxu0 0.0
    %2620 = vmatpush1.msra.mxu0 0.0
    %2621 = vmatprep.subr.mxu0 0.0
    %2622 = vmatpush1.msra.mxu0 0.0
    %2623 = vmatprep.subr.mxu0 0.0
    %2624 = vmatpush1.msra.mxu0 0.0
    %2625 = vmatprep.subr.mxu0 0.0
    %2626 = vmatpush1.msra.mxu0 0.0
    %2627 = vmatprep.subr.mxu0 0.0
    %2628 = vmatpush1.msra.mxu0 0.0
    %2629 = vmatprep.subr.mxu0 0.0
    %2630 = vmatpush1.msra.mxu0 0.0
    %2631 = vmatprep.subr.mxu0 0.0
    %2632 = vmatpush1.msra.mxu0 0.0
    %2633 = vmatprep.subr.mxu0 0.0
    %2634 = vmatpush1.msra.mxu0 0.0
    %2635 = vmatprep.subr.mxu0 0.0
    %2636 = vmatpush1.msra.mxu0 0.0
    %2637 = vmatprep.subr.mxu0 0.0
    %2638 = vmatpush1.msra.mxu0 0.0
    %2639 = vmatprep.mubr.f32.mxu0 0.0
    %v2640 = vand.u32 %v56, 4294901760
    %2641 = vmatmul.mubr.f32.gmra.mrb[0].mxu0 %v2640
    %v2642 = vpop.f32.mrb[0].mxu0
    %v2643 = vadd.f32 %v2558, %v2642
    %v2644 = vpop.f32.mrb[0].mxu0
    %2645 = vmatprep.mubr.f32.mxu0 0.0
    %v2646 = vand.u32 %v59, 4294901760
    %2647 = vmatmul.mubr.f32.gmra.mrb[0].mxu0 %v2646
    %v2648 = vpop.f32.mrb[0].mxu0
    %v2649 = vadd.f32 %v2566, %v2648
    %v2650 = vpop.f32.mrb[0].mxu0
    %2651 = vdwg.mxu0
    %2652 = vmatprep.subr.mxu0 0.0
    %v2653 = vand.u32 %v2226, 4294901760
    %2654 = vmatpush1.msra.mxu0 %v2653
    %2655 = vmatprep.subr.mxu0 0.0
    %v2656 = vand.u32 %v2228, 4294901760
    %2657 = vmatpush1.msra.mxu0 %v2656
    %2658 = vmatprep.subr.mxu0 0.0
    %2659 = vmatpush1.msra.mxu0 0.0
    %2660 = vmatprep.subr.mxu0 0.0
    %2661 = vmatpush1.msra.mxu0 0.0
    %2662 = vmatprep.subr.mxu0 0.0
    %2663 = vmatpush1.msra.mxu0 0.0
    %2664 = vmatprep.subr.mxu0 0.0
    %2665 = vmatpush1.msra.mxu0 0.0
    %2666 = vmatprep.subr.mxu0 0.0
    %2667 = vmatpush1.msra.mxu0 0.0
    %2668 = vmatprep.subr.mxu0 0.0
    %2669 = vmatpush1.msra.mxu0 0.0
    %2670 = vmatprep.subr.mxu0 0.0
    %2671 = vmatpush1.msra.mxu0 0.0
    %2672 = vmatprep.subr.mxu0 0.0
    %2673 = vmatpush1.msra.mxu0 0.0
    %2674 = vmatprep.subr.mxu0 0.0
    %2675 = vmatpush1.msra.mxu0 0.0
    %2676 = vmatprep.subr.mxu0 0.0
    %2677 = vmatpush1.msra.mxu0 0.0
    %2678 = vmatprep.subr.mxu0 0.0
    %2679 = vmatpush1.msra.mxu0 0.0
    %2680 = vmatprep.subr.mxu0 0.0
    %2681 = vmatpush1.msra.mxu0 0.0
    %2682 = vmatprep.subr.mxu0 0.0
    %2683 = vmatpush1.msra.mxu0 0.0
    %2684 = vmatprep.subr.mxu0 0.0
    %2685 = vmatpush1.msra.mxu0 0.0
    %2686 = vmatprep.subr.mxu0 0.0
    %2687 = vmatpush1.msra.mxu0 0.0
    %2688 = vmatprep.subr.mxu0 0.0
    %2689 = vmatpush1.msra.mxu0 0.0
    %2690 = vmatprep.subr.mxu0 0.0
    %2691 = vmatpush1.msra.mxu0 0.0
    %2692 = vmatprep.subr.mxu0 0.0
    %2693 = vmatpush1.msra.mxu0 0.0
    %2694 = vmatprep.subr.mxu0 0.0
    %2695 = vmatpush1.msra.mxu0 0.0
    %2696 = vmatprep.subr.mxu0 0.0
    %2697 = vmatpush1.msra.mxu0 0.0
    %2698 = vmatprep.subr.mxu0 0.0
    %2699 = vmatpush1.msra.mxu0 0.0
    %2700 = vmatprep.subr.mxu0 0.0
    %2701 = vmatpush1.msra.mxu0 0.0
    %2702 = vmatprep.subr.mxu0 0.0
    %2703 = vmatpush1.msra.mxu0 0.0
    %2704 = vmatprep.subr.mxu0 0.0
    %2705 = vmatpush1.msra.mxu0 0.0
    %2706 = vmatprep.subr.mxu0 0.0
    %2707 = vmatpush1.msra.mxu0 0.0
    %2708 = vmatprep.subr.mxu0 0.0
    %2709 = vmatpush1.msra.mxu0 0.0
    %2710 = vmatprep.subr.mxu0 0.0
    %2711 = vmatpush1.msra.mxu0 0.0
    %2712 = vmatprep.subr.mxu0 0.0
    %2713 = vmatpush1.msra.mxu0 0.0
    %2714 = vmatprep.subr.mxu0 0.0
    %2715 = vmatpush1.msra.mxu0 0.0
    %2716 = vmatprep.subr.mxu0 0.0
    %2717 = vmatpush1.msra.mxu0 0.0
    %2718 = vmatprep.mubr.f32.mxu0 0.0
    %v2719 = vand.u32 %v56, 4294901760
    %2720 = vmatmul.mubr.f32.gmra.mrb[0].mxu0 %v2719
    %v2721 = vpop.f32.mrb[0].mxu0
    %v2722 = vadd.f32 %v2643, %v2721
    %v2723 = vpop.f32.mrb[0].mxu0
    %2724 = vmatprep.mubr.f32.mxu0 0.0
    %v2725 = vand.u32 %v59, 4294901760
    %2726 = vmatmul.mubr.f32.gmra.mrb[0].mxu0 %v2725
    %v2727 = vpop.f32.mrb[0].mxu0
    %v2728 = vadd.f32 %v2649, %v2727
    %v2729 = vpop.f32.mrb[0].mxu0
    %2730 = vdwg.mxu0
    %v2731 = vlog2.pop %v2722
    %v2732 = vmul.f32 %v2731, 0.6931472
    %v2733 = vlog2.pop %v2728
    %v2734 = vmul.f32 %v2733, 0.6931472
    %v2735 = vadd.f32 %v2732, %v2222
    %v2736 = vadd.f32 %v2734, %v2222
    %v2737 = vadd.f32 %v2735, %v2210
    %v2738 = vadd.f32 %v2736, %v2211
    %v2739 = vsel %vm2213, 1, 0
    %v2740 = vlaneseq
    %v2741 = vshrl.u32 %v2740, 7
    %v2742 = vsub.s32 0, %v2741
    %v2743 = vrot.slane %v2739, %v2742
    %vm2744 = vcmp.eq.s32.totalorder %v2743, 1
    %v2745 = vsel %vm2744, %v2207, %v2737
    %v2746 = vsel %vm2744, %v2208, %v2738
    %2747 = vst.msk [vmem:[#allocation2] sm:$0xff] %vm38, %v2745
    %2748 = vst.msk [vmem:[#allocation2 + $0x8] sm:$0xff] %vm38, %v2746
    %v2749 = vld [vmem:[#allocation2] sm:$0xff]
    %v2750 = vld [vmem:[#allocation2 + $0x8] sm:$0xff]
    %s2751 = scalar_lea.vmem %s1, 80
    %v2752 = vld [vmem:[%s2751] sm:$0xff]
    %v2753 = vld [vmem:[%s2751 + $0x8] sm:$0xff]
    %v2754 = vld [vmem:[%s2 + $0x5] sm:$0x1]
    %vm2755 = vcmp.gt.f32.partialorder %v2754, 0.5
    %v2756 = vsel %vm38, %v2749, -inf
    %v2757 = vsel %vm38, %v2750, -inf
    %v2758 = vmax.f32 %v2756, %v2757
    %v2759 = vrot.slane %v2758, 4
    %v2760 = vmax.f32 %v2758, %v2759
    %v2761 = vrot.slane %v2760, 2
    %v2762 = vmax.f32 %v2760, %v2761
    %v2763 = vrot.slane %v2762, 1
    %v2764 = vmax.f32 %v2762, %v2763
    %v2765 = vsub.f32 %v2749, %v2764
    %v2766 = vsub.f32 %v2750, %v2764
    %v2767 = vmul.f32 %v2765, 1.442695
    %v2768 = vpow.pop %v2767
    %v2769 = vmul.f32 %v2766, 1.442695
    %v2770 = vpow.pop %v2769
    %2771 = vmatprep.subr.mxu0 0.0
    %v2772 = vand.u32 %v2768, 4294901760
    %2773 = vmatpush1.msra.mxu0 %v2772
    %2774 = vmatprep.subr.mxu0 0.0
    %v2775 = vand.u32 %v2770, 4294901760
    %2776 = vmatpush1.msra.mxu0 %v2775
    %2777 = vmatprep.subr.mxu0 0.0
    %2778 = vmatpush1.msra.mxu0 0.0
    %2779 = vmatprep.subr.mxu0 0.0
    %2780 = vmatpush1.msra.mxu0 0.0
    %2781 = vmatprep.subr.mxu0 0.0
    %2782 = vmatpush1.msra.mxu0 0.0
    %2783 = vmatprep.subr.mxu0 0.0
    %2784 = vmatpush1.msra.mxu0 0.0
    %2785 = vmatprep.subr.mxu0 0.0
    %2786 = vmatpush1.msra.mxu0 0.0
    %2787 = vmatprep.subr.mxu0 0.0
    %2788 = vmatpush1.msra.mxu0 0.0
    %2789 = vmatprep.subr.mxu0 0.0
    %2790 = vmatpush1.msra.mxu0 0.0
    %2791 = vmatprep.subr.mxu0 0.0
    %2792 = vmatpush1.msra.mxu0 0.0
    %2793 = vmatprep.subr.mxu0 0.0
    %2794 = vmatpush1.msra.mxu0 0.0
    %2795 = vmatprep.subr.mxu0 0.0
    %2796 = vmatpush1.msra.mxu0 0.0
    %2797 = vmatprep.subr.mxu0 0.0
    %2798 = vmatpush1.msra.mxu0 0.0
    %2799 = vmatprep.subr.mxu0 0.0
    %2800 = vmatpush1.msra.mxu0 0.0
    %2801 = vmatprep.subr.mxu0 0.0
    %2802 = vmatpush1.msra.mxu0 0.0
    %2803 = vmatprep.subr.mxu0 0.0
    %2804 = vmatpush1.msra.mxu0 0.0
    %2805 = vmatprep.subr.mxu0 0.0
    %2806 = vmatpush1.msra.mxu0 0.0
    %2807 = vmatprep.subr.mxu0 0.0
    %2808 = vmatpush1.msra.mxu0 0.0
    %2809 = vmatprep.subr.mxu0 0.0
    %2810 = vmatpush1.msra.mxu0 0.0
    %2811 = vmatprep.subr.mxu0 0.0
    %2812 = vmatpush1.msra.mxu0 0.0
    %2813 = vmatprep.subr.mxu0 0.0
    %2814 = vmatpush1.msra.mxu0 0.0
    %2815 = vmatprep.subr.mxu0 0.0
    %2816 = vmatpush1.msra.mxu0 0.0
    %2817 = vmatprep.subr.mxu0 0.0
    %2818 = vmatpush1.msra.mxu0 0.0
    %2819 = vmatprep.subr.mxu0 0.0
    %2820 = vmatpush1.msra.mxu0 0.0
    %2821 = vmatprep.subr.mxu0 0.0
    %2822 = vmatpush1.msra.mxu0 0.0
    %2823 = vmatprep.subr.mxu0 0.0
    %2824 = vmatpush1.msra.mxu0 0.0
    %2825 = vmatprep.subr.mxu0 0.0
    %2826 = vmatpush1.msra.mxu0 0.0
    %2827 = vmatprep.subr.mxu0 0.0
    %2828 = vmatpush1.msra.mxu0 0.0
    %2829 = vmatprep.subr.mxu0 0.0
    %2830 = vmatpush1.msra.mxu0 0.0
    %2831 = vmatprep.subr.mxu0 0.0
    %2832 = vmatpush1.msra.mxu0 0.0
    %2833 = vmatprep.subr.mxu0 0.0
    %2834 = vmatpush1.msra.mxu0 0.0
    %2835 = vmatprep.subr.mxu0 0.0
    %2836 = vmatpush1.msra.mxu0 0.0
    %2837 = vmatprep.mubr.f32.mxu0 0.0
    %v2838 = vand.u32 %v56, 4294901760
    %v2839 = vsub.f32 %v56, %v2838
    %v2840 = vand.u32 %v2839, 4294901760
    %v2841 = vsub.f32 %v2839, %v2840
    %v2842 = vand.u32 %v2841, 4294901760
    %2843 = vmatmul.mubr.f32.gmra.mrb[0].mxu0 %v2842
    %v2844 = vpop.f32.mrb[0].mxu0
    %v2845 = vadd.f32 0.0, %v2844
    %v2846 = vpop.f32.mrb[0].mxu0
    %2847 = vmatprep.mubr.f32.mxu0 0.0
    %v2848 = vand.u32 %v59, 4294901760
    %v2849 = vsub.f32 %v59, %v2848
    %v2850 = vand.u32 %v2849, 4294901760
    %v2851 = vsub.f32 %v2849, %v2850
    %v2852 = vand.u32 %v2851, 4294901760
    %2853 = vmatmul.mubr.f32.gmra.mrb[0].mxu0 %v2852
    %v2854 = vpop.f32.mrb[0].mxu0
    %v2855 = vadd.f32 0.0, %v2854
    %v2856 = vpop.f32.mrb[0].mxu0
    %2857 = vdwg.mxu0
    %2858 = vmatprep.subr.mxu0 0.0
    %v2859 = vand.u32 %v2768, 4294901760
    %v2860 = vsub.f32 %v2768, %v2859
    %v2861 = vand.u32 %v2860, 4294901760
    %v2862 = vsub.f32 %v2860, %v2861
    %v2863 = vand.u32 %v2862, 4294901760
    %2864 = vmatpush1.msra.mxu0 %v2863
    %2865 = vmatprep.subr.mxu0 0.0
    %v2866 = vand.u32 %v2770, 4294901760
    %v2867 = vsub.f32 %v2770, %v2866
    %v2868 = vand.u32 %v2867, 4294901760
    %v2869 = vsub.f32 %v2867, %v2868
    %v2870 = vand.u32 %v2869, 4294901760
    %2871 = vmatpush1.msra.mxu0 %v2870
    %2872 = vmatprep.subr.mxu0 0.0
    %2873 = vmatpush1.msra.mxu0 0.0
    %2874 = vmatprep.subr.mxu0 0.0
    %2875 = vmatpush1.msra.mxu0 0.0
    %2876 = vmatprep.subr.mxu0 0.0
    %2877 = vmatpush1.msra.mxu0 0.0
    %2878 = vmatprep.subr.mxu0 0.0
    %2879 = vmatpush1.msra.mxu0 0.0
    %2880 = vmatprep.subr.mxu0 0.0
    %2881 = vmatpush1.msra.mxu0 0.0
    %2882 = vmatprep.subr.mxu0 0.0
    %2883 = vmatpush1.msra.mxu0 0.0
    %2884 = vmatprep.subr.mxu0 0.0
    %2885 = vmatpush1.msra.mxu0 0.0
    %2886 = vmatprep.subr.mxu0 0.0
    %2887 = vmatpush1.msra.mxu0 0.0
    %2888 = vmatprep.subr.mxu0 0.0
    %2889 = vmatpush1.msra.mxu0 0.0
    %2890 = vmatprep.subr.mxu0 0.0
    %2891 = vmatpush1.msra.mxu0 0.0
    %2892 = vmatprep.subr.mxu0 0.0
    %2893 = vmatpush1.msra.mxu0 0.0
    %2894 = vmatprep.subr.mxu0 0.0
    %2895 = vmatpush1.msra.mxu0 0.0
    %2896 = vmatprep.subr.mxu0 0.0
    %2897 = vmatpush1.msra.mxu0 0.0
    %2898 = vmatprep.subr.mxu0 0.0
    %2899 = vmatpush1.msra.mxu0 0.0
    %2900 = vmatprep.subr.mxu0 0.0
    %2901 = vmatpush1.msra.mxu0 0.0
    %2902 = vmatprep.subr.mxu0 0.0
    %2903 = vmatpush1.msra.mxu0 0.0
    %2904 = vmatprep.subr.mxu0 0.0
    %2905 = vmatpush1.msra.mxu0 0.0
    %2906 = vmatprep.subr.mxu0 0.0
    %2907 = vmatpush1.msra.mxu0 0.0
    %2908 = vmatprep.subr.mxu0 0.0
    %2909 = vmatpush1.msra.mxu0 0.0
    %2910 = vmatprep.subr.mxu0 0.0
    %2911 = vmatpush1.msra.mxu0 0.0
    %2912 = vmatprep.subr.mxu0 0.0
    %2913 = vmatpush1.msra.mxu0 0.0
    %2914 = vmatprep.subr.mxu0 0.0
    %2915 = vmatpush1.msra.mxu0 0.0
    %2916 = vmatprep.subr.mxu0 0.0
    %2917 = vmatpush1.msra.mxu0 0.0
    %2918 = vmatprep.subr.mxu0 0.0
    %2919 = vmatpush1.msra.mxu0 0.0
    %2920 = vmatprep.subr.mxu0 0.0
    %2921 = vmatpush1.msra.mxu0 0.0
    %2922 = vmatprep.subr.mxu0 0.0
    %2923 = vmatpush1.msra.mxu0 0.0
    %2924 = vmatprep.subr.mxu0 0.0
    %2925 = vmatpush1.msra.mxu0 0.0
    %2926 = vmatprep.subr.mxu0 0.0
    %2927 = vmatpush1.msra.mxu0 0.0
    %2928 = vmatprep.subr.mxu0 0.0
    %2929 = vmatpush1.msra.mxu0 0.0
    %2930 = vmatprep.subr.mxu0 0.0
    %2931 = vmatpush1.msra.mxu0 0.0
    %2932 = vmatprep.mubr.f32.mxu0 0.0
    %v2933 = vand.u32 %v56, 4294901760
    %2934 = vmatmul.mubr.f32.gmra.mrb[0].mxu0 %v2933
    %v2935 = vpop.f32.mrb[0].mxu0
    %v2936 = vadd.f32 %v2845, %v2935
    %v2937 = vpop.f32.mrb[0].mxu0
    %2938 = vmatprep.mubr.f32.mxu0 0.0
    %v2939 = vand.u32 %v59, 4294901760
    %2940 = vmatmul.mubr.f32.gmra.mrb[0].mxu0 %v2939
    %v2941 = vpop.f32.mrb[0].mxu0
    %v2942 = vadd.f32 %v2855, %v2941
    %v2943 = vpop.f32.mrb[0].mxu0
    %2944 = vdwg.mxu0
    %2945 = vmatprep.subr.mxu0 0.0
    %v2946 = vand.u32 %v2768, 4294901760
    %v2947 = vsub.f32 %v2768, %v2946
    %2948 = vmatpush1.msra.mxu0 %v2947
    %2949 = vmatprep.subr.mxu0 0.0
    %v2950 = vand.u32 %v2770, 4294901760
    %v2951 = vsub.f32 %v2770, %v2950
    %2952 = vmatpush1.msra.mxu0 %v2951
    %2953 = vmatprep.subr.mxu0 0.0
    %2954 = vmatpush1.msra.mxu0 0.0
    %2955 = vmatprep.subr.mxu0 0.0
    %2956 = vmatpush1.msra.mxu0 0.0
    %2957 = vmatprep.subr.mxu0 0.0
    %2958 = vmatpush1.msra.mxu0 0.0
    %2959 = vmatprep.subr.mxu0 0.0
    %2960 = vmatpush1.msra.mxu0 0.0
    %2961 = vmatprep.subr.mxu0 0.0
    %2962 = vmatpush1.msra.mxu0 0.0
    %2963 = vmatprep.subr.mxu0 0.0
    %2964 = vmatpush1.msra.mxu0 0.0
    %2965 = vmatprep.subr.mxu0 0.0
    %2966 = vmatpush1.msra.mxu0 0.0
    %2967 = vmatprep.subr.mxu0 0.0
    %2968 = vmatpush1.msra.mxu0 0.0
    %2969 = vmatprep.subr.mxu0 0.0
    %2970 = vmatpush1.msra.mxu0 0.0
    %2971 = vmatprep.subr.mxu0 0.0
    %2972 = vmatpush1.msra.mxu0 0.0
    %2973 = vmatprep.subr.mxu0 0.0
    %2974 = vmatpush1.msra.mxu0 0.0
    %2975 = vmatprep.subr.mxu0 0.0
    %2976 = vmatpush1.msra.mxu0 0.0
    %2977 = vmatprep.subr.mxu0 0.0
    %2978 = vmatpush1.msra.mxu0 0.0
    %2979 = vmatprep.subr.mxu0 0.0
    %2980 = vmatpush1.msra.mxu0 0.0
    %2981 = vmatprep.subr.mxu0 0.0
    %2982 = vmatpush1.msra.mxu0 0.0
    %2983 = vmatprep.subr.mxu0 0.0
    %2984 = vmatpush1.msra.mxu0 0.0
    %2985 = vmatprep.subr.mxu0 0.0
    %2986 = vmatpush1.msra.mxu0 0.0
    %2987 = vmatprep.subr.mxu0 0.0
    %2988 = vmatpush1.msra.mxu0 0.0
    %2989 = vmatprep.subr.mxu0 0.0
    %2990 = vmatpush1.msra.mxu0 0.0
    %2991 = vmatprep.subr.mxu0 0.0
    %2992 = vmatpush1.msra.mxu0 0.0
    %2993 = vmatprep.subr.mxu0 0.0
    %2994 = vmatpush1.msra.mxu0 0.0
    %2995 = vmatprep.subr.mxu0 0.0
    %2996 = vmatpush1.msra.mxu0 0.0
    %2997 = vmatprep.subr.mxu0 0.0
    %2998 = vmatpush1.msra.mxu0 0.0
    %2999 = vmatprep.subr.mxu0 0.0
    %3000 = vmatpush1.msra.mxu0 0.0
    %3001 = vmatprep.subr.mxu0 0.0
    %3002 = vmatpush1.msra.mxu0 0.0
    %3003 = vmatprep.subr.mxu0 0.0
    %3004 = vmatpush1.msra.mxu0 0.0
    %3005 = vmatprep.subr.mxu0 0.0
    %3006 = vmatpush1.msra.mxu0 0.0
    %3007 = vmatprep.subr.mxu0 0.0
    %3008 = vmatpush1.msra.mxu0 0.0
    %3009 = vmatprep.subr.mxu0 0.0
    %3010 = vmatpush1.msra.mxu0 0.0
    %3011 = vmatprep.subr.mxu0 0.0
    %3012 = vmatpush1.msra.mxu0 0.0
    %3013 = vmatprep.mubr.f32.mxu0 0.0
    %v3014 = vand.u32 %v56, 4294901760
    %v3015 = vsub.f32 %v56, %v3014
    %3016 = vmatmul.mubr.f32.gmra.mrb[0].mxu0 %v3015
    %v3017 = vpop.f32.mrb[0].mxu0
    %v3018 = vadd.f32 %v2936, %v3017
    %v3019 = vpop.f32.mrb[0].mxu0
    %3020 = vmatprep.mubr.f32.mxu0 0.0
    %v3021 = vand.u32 %v59, 4294901760
    %v3022 = vsub.f32 %v59, %v3021
    %3023 = vmatmul.mubr.f32.gmra.mrb[0].mxu0 %v3022
    %v3024 = vpop.f32.mrb[0].mxu0
    %v3025 = vadd.f32 %v2942, %v3024
    %v3026 = vpop.f32.mrb[0].mxu0
    %3027 = vdwg.mxu0
    %3028 = vmatprep.subr.mxu0 0.0
    %v3029 = vand.u32 %v2768, 4294901760
    %3030 = vmatpush1.msra.mxu0 %v3029
    %3031 = vmatprep.subr.mxu0 0.0
    %v3032 = vand.u32 %v2770, 4294901760
    %3033 = vmatpush1.msra.mxu0 %v3032
    %3034 = vmatprep.subr.mxu0 0.0
    %3035 = vmatpush1.msra.mxu0 0.0
    %3036 = vmatprep.subr.mxu0 0.0
    %3037 = vmatpush1.msra.mxu0 0.0
    %3038 = vmatprep.subr.mxu0 0.0
    %3039 = vmatpush1.msra.mxu0 0.0
    %3040 = vmatprep.subr.mxu0 0.0
    %3041 = vmatpush1.msra.mxu0 0.0
    %3042 = vmatprep.subr.mxu0 0.0
    %3043 = vmatpush1.msra.mxu0 0.0
    %3044 = vmatprep.subr.mxu0 0.0
    %3045 = vmatpush1.msra.mxu0 0.0
    %3046 = vmatprep.subr.mxu0 0.0
    %3047 = vmatpush1.msra.mxu0 0.0
    %3048 = vmatprep.subr.mxu0 0.0
    %3049 = vmatpush1.msra.mxu0 0.0
    %3050 = vmatprep.subr.mxu0 0.0
    %3051 = vmatpush1.msra.mxu0 0.0
    %3052 = vmatprep.subr.mxu0 0.0
    %3053 = vmatpush1.msra.mxu0 0.0
    %3054 = vmatprep.subr.mxu0 0.0
    %3055 = vmatpush1.msra.mxu0 0.0
    %3056 = vmatprep.subr.mxu0 0.0
    %3057 = vmatpush1.msra.mxu0 0.0
    %3058 = vmatprep.subr.mxu0 0.0
    %3059 = vmatpush1.msra.mxu0 0.0
    %3060 = vmatprep.subr.mxu0 0.0
    %3061 = vmatpush1.msra.mxu0 0.0
    %3062 = vmatprep.subr.mxu0 0.0
    %3063 = vmatpush1.msra.mxu0 0.0
    %3064 = vmatprep.subr.mxu0 0.0
    %3065 = vmatpush1.msra.mxu0 0.0
    %3066 = vmatprep.subr.mxu0 0.0
    %3067 = vmatpush1.msra.mxu0 0.0
    %3068 = vmatprep.subr.mxu0 0.0
    %3069 = vmatpush1.msra.mxu0 0.0
    %3070 = vmatprep.subr.mxu0 0.0
    %3071 = vmatpush1.msra.mxu0 0.0
    %3072 = vmatprep.subr.mxu0 0.0
    %3073 = vmatpush1.msra.mxu0 0.0
    %3074 = vmatprep.subr.mxu0 0.0
    %3075 = vmatpush1.msra.mxu0 0.0
    %3076 = vmatprep.subr.mxu0 0.0
    %3077 = vmatpush1.msra.mxu0 0.0
    %3078 = vmatprep.subr.mxu0 0.0
    %3079 = vmatpush1.msra.mxu0 0.0
    %3080 = vmatprep.subr.mxu0 0.0
    %3081 = vmatpush1.msra.mxu0 0.0
    %3082 = vmatprep.subr.mxu0 0.0
    %3083 = vmatpush1.msra.mxu0 0.0
    %3084 = vmatprep.subr.mxu0 0.0
    %3085 = vmatpush1.msra.mxu0 0.0
    %3086 = vmatprep.subr.mxu0 0.0
    %3087 = vmatpush1.msra.mxu0 0.0
    %3088 = vmatprep.subr.mxu0 0.0
    %3089 = vmatpush1.msra.mxu0 0.0
    %3090 = vmatprep.subr.mxu0 0.0
    %3091 = vmatpush1.msra.mxu0 0.0
    %3092 = vmatprep.subr.mxu0 0.0
    %3093 = vmatpush1.msra.mxu0 0.0
    %3094 = vmatprep.mubr.f32.mxu0 0.0
    %v3095 = vand.u32 %v56, 4294901760
    %v3096 = vsub.f32 %v56, %v3095
    %v3097 = vand.u32 %v3096, 4294901760
    %3098 = vmatmul.mubr.f32.gmra.mrb[0].mxu0 %v3097
    %v3099 = vpop.f32.mrb[0].mxu0
    %v3100 = vadd.f32 %v3018, %v3099
    %v3101 = vpop.f32.mrb[0].mxu0
    %3102 = vmatprep.mubr.f32.mxu0 0.0
    %v3103 = vand.u32 %v59, 4294901760
    %v3104 = vsub.f32 %v59, %v3103
    %v3105 = vand.u32 %v3104, 4294901760
    %3106 = vmatmul.mubr.f32.gmra.mrb[0].mxu0 %v3105
    %v3107 = vpop.f32.mrb[0].mxu0
    %v3108 = vadd.f32 %v3025, %v3107
    %v3109 = vpop.f32.mrb[0].mxu0
    %3110 = vdwg.mxu0
    %3111 = vmatprep.subr.mxu0 0.0
    %v3112 = vand.u32 %v2768, 4294901760
    %v3113 = vsub.f32 %v2768, %v3112
    %v3114 = vand.u32 %v3113, 4294901760
    %3115 = vmatpush1.msra.mxu0 %v3114
    %3116 = vmatprep.subr.mxu0 0.0
    %v3117 = vand.u32 %v2770, 4294901760
    %v3118 = vsub.f32 %v2770, %v3117
    %v3119 = vand.u32 %v3118, 4294901760
    %3120 = vmatpush1.msra.mxu0 %v3119
    %3121 = vmatprep.subr.mxu0 0.0
    %3122 = vmatpush1.msra.mxu0 0.0
    %3123 = vmatprep.subr.mxu0 0.0
    %3124 = vmatpush1.msra.mxu0 0.0
    %3125 = vmatprep.subr.mxu0 0.0
    %3126 = vmatpush1.msra.mxu0 0.0
    %3127 = vmatprep.subr.mxu0 0.0
    %3128 = vmatpush1.msra.mxu0 0.0
    %3129 = vmatprep.subr.mxu0 0.0
    %3130 = vmatpush1.msra.mxu0 0.0
    %3131 = vmatprep.subr.mxu0 0.0
    %3132 = vmatpush1.msra.mxu0 0.0
    %3133 = vmatprep.subr.mxu0 0.0
    %3134 = vmatpush1.msra.mxu0 0.0
    %3135 = vmatprep.subr.mxu0 0.0
    %3136 = vmatpush1.msra.mxu0 0.0
    %3137 = vmatprep.subr.mxu0 0.0
    %3138 = vmatpush1.msra.mxu0 0.0
    %3139 = vmatprep.subr.mxu0 0.0
    %3140 = vmatpush1.msra.mxu0 0.0
    %3141 = vmatprep.subr.mxu0 0.0
    %3142 = vmatpush1.msra.mxu0 0.0
    %3143 = vmatprep.subr.mxu0 0.0
    %3144 = vmatpush1.msra.mxu0 0.0
    %3145 = vmatprep.subr.mxu0 0.0
    %3146 = vmatpush1.msra.mxu0 0.0
    %3147 = vmatprep.subr.mxu0 0.0
    %3148 = vmatpush1.msra.mxu0 0.0
    %3149 = vmatprep.subr.mxu0 0.0
    %3150 = vmatpush1.msra.mxu0 0.0
    %3151 = vmatprep.subr.mxu0 0.0
    %3152 = vmatpush1.msra.mxu0 0.0
    %3153 = vmatprep.subr.mxu0 0.0
    %3154 = vmatpush1.msra.mxu0 0.0
    %3155 = vmatprep.subr.mxu0 0.0
    %3156 = vmatpush1.msra.mxu0 0.0
    %3157 = vmatprep.subr.mxu0 0.0
    %3158 = vmatpush1.msra.mxu0 0.0
    %3159 = vmatprep.subr.mxu0 0.0
    %3160 = vmatpush1.msra.mxu0 0.0
    %3161 = vmatprep.subr.mxu0 0.0
    %3162 = vmatpush1.msra.mxu0 0.0
    %3163 = vmatprep.subr.mxu0 0.0
    %3164 = vmatpush1.msra.mxu0 0.0
    %3165 = vmatprep.subr.mxu0 0.0
    %3166 = vmatpush1.msra.mxu0 0.0
    %3167 = vmatprep.subr.mxu0 0.0
    %3168 = vmatpush1.msra.mxu0 0.0
    %3169 = vmatprep.subr.mxu0 0.0
    %3170 = vmatpush1.msra.mxu0 0.0
    %3171 = vmatprep.subr.mxu0 0.0
    %3172 = vmatpush1.msra.mxu0 0.0
    %3173 = vmatprep.subr.mxu0 0.0
    %3174 = vmatpush1.msra.mxu0 0.0
    %3175 = vmatprep.subr.mxu0 0.0
    %3176 = vmatpush1.msra.mxu0 0.0
    %3177 = vmatprep.subr.mxu0 0.0
    %3178 = vmatpush1.msra.mxu0 0.0
    %3179 = vmatprep.subr.mxu0 0.0
    %3180 = vmatpush1.msra.mxu0 0.0
    %3181 = vmatprep.mubr.f32.mxu0 0.0
    %v3182 = vand.u32 %v56, 4294901760
    %3183 = vmatmul.mubr.f32.gmra.mrb[0].mxu0 %v3182
    %v3184 = vpop.f32.mrb[0].mxu0
    %v3185 = vadd.f32 %v3100, %v3184
    %v3186 = vpop.f32.mrb[0].mxu0
    %3187 = vmatprep.mubr.f32.mxu0 0.0
    %v3188 = vand.u32 %v59, 4294901760
    %3189 = vmatmul.mubr.f32.gmra.mrb[0].mxu0 %v3188
    %v3190 = vpop.f32.mrb[0].mxu0
    %v3191 = vadd.f32 %v3108, %v3190
    %v3192 = vpop.f32.mrb[0].mxu0
    %3193 = vdwg.mxu0
    %3194 = vmatprep.subr.mxu0 0.0
    %v3195 = vand.u32 %v2768, 4294901760
    %3196 = vmatpush1.msra.mxu0 %v3195
    %3197 = vmatprep.subr.mxu0 0.0
    %v3198 = vand.u32 %v2770, 4294901760
    %3199 = vmatpush1.msra.mxu0 %v3198
    %3200 = vmatprep.subr.mxu0 0.0
    %3201 = vmatpush1.msra.mxu0 0.0
    %3202 = vmatprep.subr.mxu0 0.0
    %3203 = vmatpush1.msra.mxu0 0.0
    %3204 = vmatprep.subr.mxu0 0.0
    %3205 = vmatpush1.msra.mxu0 0.0
    %3206 = vmatprep.subr.mxu0 0.0
    %3207 = vmatpush1.msra.mxu0 0.0
    %3208 = vmatprep.subr.mxu0 0.0
    %3209 = vmatpush1.msra.mxu0 0.0
    %3210 = vmatprep.subr.mxu0 0.0
    %3211 = vmatpush1.msra.mxu0 0.0
    %3212 = vmatprep.subr.mxu0 0.0
    %3213 = vmatpush1.msra.mxu0 0.0
    %3214 = vmatprep.subr.mxu0 0.0
    %3215 = vmatpush1.msra.mxu0 0.0
    %3216 = vmatprep.subr.mxu0 0.0
    %3217 = vmatpush1.msra.mxu0 0.0
    %3218 = vmatprep.subr.mxu0 0.0
    %3219 = vmatpush1.msra.mxu0 0.0
    %3220 = vmatprep.subr.mxu0 0.0
    %3221 = vmatpush1.msra.mxu0 0.0
    %3222 = vmatprep.subr.mxu0 0.0
    %3223 = vmatpush1.msra.mxu0 0.0
    %3224 = vmatprep.subr.mxu0 0.0
    %3225 = vmatpush1.msra.mxu0 0.0
    %3226 = vmatprep.subr.mxu0 0.0
    %3227 = vmatpush1.msra.mxu0 0.0
    %3228 = vmatprep.subr.mxu0 0.0
    %3229 = vmatpush1.msra.mxu0 0.0
    %3230 = vmatprep.subr.mxu0 0.0
    %3231 = vmatpush1.msra.mxu0 0.0
    %3232 = vmatprep.subr.mxu0 0.0
    %3233 = vmatpush1.msra.mxu0 0.0
    %3234 = vmatprep.subr.mxu0 0.0
    %3235 = vmatpush1.msra.mxu0 0.0
    %3236 = vmatprep.subr.mxu0 0.0
    %3237 = vmatpush1.msra.mxu0 0.0
    %3238 = vmatprep.subr.mxu0 0.0
    %3239 = vmatpush1.msra.mxu0 0.0
    %3240 = vmatprep.subr.mxu0 0.0
    %3241 = vmatpush1.msra.mxu0 0.0
    %3242 = vmatprep.subr.mxu0 0.0
    %3243 = vmatpush1.msra.mxu0 0.0
    %3244 = vmatprep.subr.mxu0 0.0
    %3245 = vmatpush1.msra.mxu0 0.0
    %3246 = vmatprep.subr.mxu0 0.0
    %3247 = vmatpush1.msra.mxu0 0.0
    %3248 = vmatprep.subr.mxu0 0.0
    %3249 = vmatpush1.msra.mxu0 0.0
    %3250 = vmatprep.subr.mxu0 0.0
    %3251 = vmatpush1.msra.mxu0 0.0
    %3252 = vmatprep.subr.mxu0 0.0
    %3253 = vmatpush1.msra.mxu0 0.0
    %3254 = vmatprep.subr.mxu0 0.0
    %3255 = vmatpush1.msra.mxu0 0.0
    %3256 = vmatprep.subr.mxu0 0.0
    %3257 = vmatpush1.msra.mxu0 0.0
    %3258 = vmatprep.subr.mxu0 0.0
    %3259 = vmatpush1.msra.mxu0 0.0
    %3260 = vmatprep.mubr.f32.mxu0 0.0
    %v3261 = vand.u32 %v56, 4294901760
    %3262 = vmatmul.mubr.f32.gmra.mrb[0].mxu0 %v3261
    %v3263 = vpop.f32.mrb[0].mxu0
    %v3264 = vadd.f32 %v3185, %v3263
    %v3265 = vpop.f32.mrb[0].mxu0
    %3266 = vmatprep.mubr.f32.mxu0 0.0
    %v3267 = vand.u32 %v59, 4294901760
    %3268 = vmatmul.mubr.f32.gmra.mrb[0].mxu0 %v3267
    %v3269 = vpop.f32.mrb[0].mxu0
    %v3270 = vadd.f32 %v3191, %v3269
    %v3271 = vpop.f32.mrb[0].mxu0
    %3272 = vdwg.mxu0
    %v3273 = vlog2.pop %v3264
    %v3274 = vmul.f32 %v3273, 0.6931472
    %v3275 = vlog2.pop %v3270
    %v3276 = vmul.f32 %v3275, 0.6931472
    %v3277 = vadd.f32 %v3274, %v2764
    %v3278 = vadd.f32 %v3276, %v2764
    %v3279 = vadd.f32 %v3277, %v2752
    %v3280 = vadd.f32 %v3278, %v2753
    %v3281 = vsel %vm2755, 1, 0
    %v3282 = vlaneseq
    %v3283 = vshrl.u32 %v3282, 7
    %v3284 = vsub.s32 0, %v3283
    %v3285 = vrot.slane %v3281, %v3284
    %vm3286 = vcmp.eq.s32.totalorder %v3285, 1
    %v3287 = vsel %vm3286, %v2749, %v3279
    %v3288 = vsel %vm3286, %v2750, %v3280
    %3289 = vst.msk [vmem:[#allocation2] sm:$0xff] %vm38, %v3287
    %3290 = vst.msk [vmem:[#allocation2 + $0x8] sm:$0xff] %vm38, %v3288
    %v3291 = vld [vmem:[#allocation2] sm:$0xff]
    %v3292 = vld [vmem:[#allocation2 + $0x8] sm:$0xff]
    %s3293 = scalar_lea.vmem %s1, 96
    %v3294 = vld [vmem:[%s3293] sm:$0xff]
    %v3295 = vld [vmem:[%s3293 + $0x8] sm:$0xff]
    %v3296 = vld [vmem:[%s2 + $0x6] sm:$0x1]
    %vm3297 = vcmp.gt.f32.partialorder %v3296, 0.5
    %v3298 = vsel %vm38, %v3291, -inf
    %v3299 = vsel %vm38, %v3292, -inf
    %v3300 = vmax.f32 %v3298, %v3299
    %v3301 = vrot.slane %v3300, 4
    %v3302 = vmax.f32 %v3300, %v3301
    %v3303 = vrot.slane %v3302, 2
    %v3304 = vmax.f32 %v3302, %v3303
    %v3305 = vrot.slane %v3304, 1
    %v3306 = vmax.f32 %v3304, %v3305
    %v3307 = vsub.f32 %v3291, %v3306
    %v3308 = vsub.f32 %v3292, %v3306
    %v3309 = vmul.f32 %v3307, 1.442695
    %v3310 = vpow.pop %v3309
    %v3311 = vmul.f32 %v3308, 1.442695
    %v3312 = vpow.pop %v3311
    %3313 = vmatprep.subr.mxu0 0.0
    %v3314 = vand.u32 %v3310, 4294901760
    %3315 = vmatpush1.msra.mxu0 %v3314
    %3316 = vmatprep.subr.mxu0 0.0
    %v3317 = vand.u32 %v3312, 4294901760
    %3318 = vmatpush1.msra.mxu0 %v3317
    %3319 = vmatprep.subr.mxu0 0.0
    %3320 = vmatpush1.msra.mxu0 0.0
    %3321 = vmatprep.subr.mxu0 0.0
    %3322 = vmatpush1.msra.mxu0 0.0
    %3323 = vmatprep.subr.mxu0 0.0
    %3324 = vmatpush1.msra.mxu0 0.0
    %3325 = vmatprep.subr.mxu0 0.0
    %3326 = vmatpush1.msra.mxu0 0.0
    %3327 = vmatprep.subr.mxu0 0.0
    %3328 = vmatpush1.msra.mxu0 0.0
    %3329 = vmatprep.subr.mxu0 0.0
    %3330 = vmatpush1.msra.mxu0 0.0
    %3331 = vmatprep.subr.mxu0 0.0
    %3332 = vmatpush1.msra.mxu0 0.0
    %3333 = vmatprep.subr.mxu0 0.0
    %3334 = vmatpush1.msra.mxu0 0.0
    %3335 = vmatprep.subr.mxu0 0.0
    %3336 = vmatpush1.msra.mxu0 0.0
    %3337 = vmatprep.subr.mxu0 0.0
    %3338 = vmatpush1.msra.mxu0 0.0
    %3339 = vmatprep.subr.mxu0 0.0
    %3340 = vmatpush1.msra.mxu0 0.0
    %3341 = vmatprep.subr.mxu0 0.0
    %3342 = vmatpush1.msra.mxu0 0.0
    %3343 = vmatprep.subr.mxu0 0.0
    %3344 = vmatpush1.msra.mxu0 0.0
    %3345 = vmatprep.subr.mxu0 0.0
    %3346 = vmatpush1.msra.mxu0 0.0
    %3347 = vmatprep.subr.mxu0 0.0
    %3348 = vmatpush1.msra.mxu0 0.0
    %3349 = vmatprep.subr.mxu0 0.0
    %3350 = vmatpush1.msra.mxu0 0.0
    %3351 = vmatprep.subr.mxu0 0.0
    %3352 = vmatpush1.msra.mxu0 0.0
    %3353 = vmatprep.subr.mxu0 0.0
    %3354 = vmatpush1.msra.mxu0 0.0
    %3355 = vmatprep.subr.mxu0 0.0
    %3356 = vmatpush1.msra.mxu0 0.0
    %3357 = vmatprep.subr.mxu0 0.0
    %3358 = vmatpush1.msra.mxu0 0.0
    %3359 = vmatprep.subr.mxu0 0.0
    %3360 = vmatpush1.msra.mxu0 0.0
    %3361 = vmatprep.subr.mxu0 0.0
    %3362 = vmatpush1.msra.mxu0 0.0
    %3363 = vmatprep.subr.mxu0 0.0
    %3364 = vmatpush1.msra.mxu0 0.0
    %3365 = vmatprep.subr.mxu0 0.0
    %3366 = vmatpush1.msra.mxu0 0.0
    %3367 = vmatprep.subr.mxu0 0.0
    %3368 = vmatpush1.msra.mxu0 0.0
    %3369 = vmatprep.subr.mxu0 0.0
    %3370 = vmatpush1.msra.mxu0 0.0
    %3371 = vmatprep.subr.mxu0 0.0
    %3372 = vmatpush1.msra.mxu0 0.0
    %3373 = vmatprep.subr.mxu0 0.0
    %3374 = vmatpush1.msra.mxu0 0.0
    %3375 = vmatprep.subr.mxu0 0.0
    %3376 = vmatpush1.msra.mxu0 0.0
    %3377 = vmatprep.subr.mxu0 0.0
    %3378 = vmatpush1.msra.mxu0 0.0
    %3379 = vmatprep.mubr.f32.mxu0 0.0
    %v3380 = vand.u32 %v56, 4294901760
    %v3381 = vsub.f32 %v56, %v3380
    %v3382 = vand.u32 %v3381, 4294901760
    %v3383 = vsub.f32 %v3381, %v3382
    %v3384 = vand.u32 %v3383, 4294901760
    %3385 = vmatmul.mubr.f32.gmra.mrb[0].mxu0 %v3384
    %v3386 = vpop.f32.mrb[0].mxu0
    %v3387 = vadd.f32 0.0, %v3386
    %v3388 = vpop.f32.mrb[0].mxu0
    %3389 = vmatprep.mubr.f32.mxu0 0.0
    %v3390 = vand.u32 %v59, 4294901760
    %v3391 = vsub.f32 %v59, %v3390
    %v3392 = vand.u32 %v3391, 4294901760
    %v3393 = vsub.f32 %v3391, %v3392
    %v3394 = vand.u32 %v3393, 4294901760
    %3395 = vmatmul.mubr.f32.gmra.mrb[0].mxu0 %v3394
    %v3396 = vpop.f32.mrb[0].mxu0
    %v3397 = vadd.f32 0.0, %v3396
    %v3398 = vpop.f32.mrb[0].mxu0
    %3399 = vdwg.mxu0
    %3400 = vmatprep.subr.mxu0 0.0
    %v3401 = vand.u32 %v3310, 4294901760
    %v3402 = vsub.f32 %v3310, %v3401
    %v3403 = vand.u32 %v3402, 4294901760
    %v3404 = vsub.f32 %v3402, %v3403
    %v3405 = vand.u32 %v3404, 4294901760
    %3406 = vmatpush1.msra.mxu0 %v3405
    %3407 = vmatprep.subr.mxu0 0.0
    %v3408 = vand.u32 %v3312, 4294901760
    %v3409 = vsub.f32 %v3312, %v3408
    %v3410 = vand.u32 %v3409, 4294901760
    %v3411 = vsub.f32 %v3409, %v3410
    %v3412 = vand.u32 %v3411, 4294901760
    %3413 = vmatpush1.msra.mxu0 %v3412
    %3414 = vmatprep.subr.mxu0 0.0
    %3415 = vmatpush1.msra.mxu0 0.0
    %3416 = vmatprep.subr.mxu0 0.0
    %3417 = vmatpush1.msra.mxu0 0.0
    %3418 = vmatprep.subr.mxu0 0.0
    %3419 = vmatpush1.msra.mxu0 0.0
    %3420 = vmatprep.subr.mxu0 0.0
    %3421 = vmatpush1.msra.mxu0 0.0
    %3422 = vmatprep.subr.mxu0 0.0
    %3423 = vmatpush1.msra.mxu0 0.0
    %3424 = vmatprep.subr.mxu0 0.0
    %3425 = vmatpush1.msra.mxu0 0.0
    %3426 = vmatprep.subr.mxu0 0.0
    %3427 = vmatpush1.msra.mxu0 0.0
    %3428 = vmatprep.subr.mxu0 0.0
    %3429 = vmatpush1.msra.mxu0 0.0
    %3430 = vmatprep.subr.mxu0 0.0
    %3431 = vmatpush1.msra.mxu0 0.0
    %3432 = vmatprep.subr.mxu0 0.0
    %3433 = vmatpush1.msra.mxu0 0.0
    %3434 = vmatprep.subr.mxu0 0.0
    %3435 = vmatpush1.msra.mxu0 0.0
    %3436 = vmatprep.subr.mxu0 0.0
    %3437 = vmatpush1.msra.mxu0 0.0
    %3438 = vmatprep.subr.mxu0 0.0
    %3439 = vmatpush1.msra.mxu0 0.0
    %3440 = vmatprep.subr.mxu0 0.0
    %3441 = vmatpush1.msra.mxu0 0.0
    %3442 = vmatprep.subr.mxu0 0.0
    %3443 = vmatpush1.msra.mxu0 0.0
    %3444 = vmatprep.subr.mxu0 0.0
    %3445 = vmatpush1.msra.mxu0 0.0
    %3446 = vmatprep.subr.mxu0 0.0
    %3447 = vmatpush1.msra.mxu0 0.0
    %3448 = vmatprep.subr.mxu0 0.0
    %3449 = vmatpush1.msra.mxu0 0.0
    %3450 = vmatprep.subr.mxu0 0.0
    %3451 = vmatpush1.msra.mxu0 0.0
    %3452 = vmatprep.subr.mxu0 0.0
    %3453 = vmatpush1.msra.mxu0 0.0
    %3454 = vmatprep.subr.mxu0 0.0
    %3455 = vmatpush1.msra.mxu0 0.0
    %3456 = vmatprep.subr.mxu0 0.0
    %3457 = vmatpush1.msra.mxu0 0.0
    %3458 = vmatprep.subr.mxu0 0.0
    %3459 = vmatpush1.msra.mxu0 0.0
    %3460 = vmatprep.subr.mxu0 0.0
    %3461 = vmatpush1.msra.mxu0 0.0
    %3462 = vmatprep.subr.mxu0 0.0
    %3463 = vmatpush1.msra.mxu0 0.0
    %3464 = vmatprep.subr.mxu0 0.0
    %3465 = vmatpush1.msra.mxu0 0.0
    %3466 = vmatprep.subr.mxu0 0.0
    %3467 = vmatpush1.msra.mxu0 0.0
    %3468 = vmatprep.subr.mxu0 0.0
    %3469 = vmatpush1.msra.mxu0 0.0
    %3470 = vmatprep.subr.mxu0 0.0
    %3471 = vmatpush1.msra.mxu0 0.0
    %3472 = vmatprep.subr.mxu0 0.0
    %3473 = vmatpush1.msra.mxu0 0.0
    %3474 = vmatprep.mubr.f32.mxu0 0.0
    %v3475 = vand.u32 %v56, 4294901760
    %3476 = vmatmul.mubr.f32.gmra.mrb[0].mxu0 %v3475
    %v3477 = vpop.f32.mrb[0].mxu0
    %v3478 = vadd.f32 %v3387, %v3477
    %v3479 = vpop.f32.mrb[0].mxu0
    %3480 = vmatprep.mubr.f32.mxu0 0.0
    %v3481 = vand.u32 %v59, 4294901760
    %3482 = vmatmul.mubr.f32.gmra.mrb[0].mxu0 %v3481
    %v3483 = vpop.f32.mrb[0].mxu0
    %v3484 = vadd.f32 %v3397, %v3483
    %v3485 = vpop.f32.mrb[0].mxu0
    %3486 = vdwg.mxu0
    %3487 = vmatprep.subr.mxu0 0.0
    %v3488 = vand.u32 %v3310, 4294901760
    %v3489 = vsub.f32 %v3310, %v3488
    %3490 = vmatpush1.msra.mxu0 %v3489
    %3491 = vmatprep.subr.mxu0 0.0
    %v3492 = vand.u32 %v3312, 4294901760
    %v3493 = vsub.f32 %v3312, %v3492
    %3494 = vmatpush1.msra.mxu0 %v3493
    %3495 = vmatprep.subr.mxu0 0.0
    %3496 = vmatpush1.msra.mxu0 0.0
    %3497 = vmatprep.subr.mxu0 0.0
    %3498 = vmatpush1.msra.mxu0 0.0
    %3499 = vmatprep.subr.mxu0 0.0
    %3500 = vmatpush1.msra.mxu0 0.0
    %3501 = vmatprep.subr.mxu0 0.0
    %3502 = vmatpush1.msra.mxu0 0.0
    %3503 = vmatprep.subr.mxu0 0.0
    %3504 = vmatpush1.msra.mxu0 0.0
    %3505 = vmatprep.subr.mxu0 0.0
    %3506 = vmatpush1.msra.mxu0 0.0
    %3507 = vmatprep.subr.mxu0 0.0
    %3508 = vmatpush1.msra.mxu0 0.0
    %3509 = vmatprep.subr.mxu0 0.0
    %3510 = vmatpush1.msra.mxu0 0.0
    %3511 = vmatprep.subr.mxu0 0.0
    %3512 = vmatpush1.msra.mxu0 0.0
    %3513 = vmatprep.subr.mxu0 0.0
    %3514 = vmatpush1.msra.mxu0 0.0
    %3515 = vmatprep.subr.mxu0 0.0
    %3516 = vmatpush1.msra.mxu0 0.0
    %3517 = vmatprep.subr.mxu0 0.0
    %3518 = vmatpush1.msra.mxu0 0.0
    %3519 = vmatprep.subr.mxu0 0.0
    %3520 = vmatpush1.msra.mxu0 0.0
    %3521 = vmatprep.subr.mxu0 0.0
    %3522 = vmatpush1.msra.mxu0 0.0
    %3523 = vmatprep.subr.mxu0 0.0
    %3524 = vmatpush1.msra.mxu0 0.0
    %3525 = vmatprep.subr.mxu0 0.0
    %3526 = vmatpush1.msra.mxu0 0.0
    %3527 = vmatprep.subr.mxu0 0.0
    %3528 = vmatpush1.msra.mxu0 0.0
    %3529 = vmatprep.subr.mxu0 0.0
    %3530 = vmatpush1.msra.mxu0 0.0
    %3531 = vmatprep.subr.mxu0 0.0
    %3532 = vmatpush1.msra.mxu0 0.0
    %3533 = vmatprep.subr.mxu0 0.0
    %3534 = vmatpush1.msra.mxu0 0.0
    %3535 = vmatprep.subr.mxu0 0.0
    %3536 = vmatpush1.msra.mxu0 0.0
    %3537 = vmatprep.subr.mxu0 0.0
    %3538 = vmatpush1.msra.mxu0 0.0
    %3539 = vmatprep.subr.mxu0 0.0
    %3540 = vmatpush1.msra.mxu0 0.0
    %3541 = vmatprep.subr.mxu0 0.0
    %3542 = vmatpush1.msra.mxu0 0.0
    %3543 = vmatprep.subr.mxu0 0.0
    %3544 = vmatpush1.msra.mxu0 0.0
    %3545 = vmatprep.subr.mxu0 0.0
    %3546 = vmatpush1.msra.mxu0 0.0
    %3547 = vmatprep.subr.mxu0 0.0
    %3548 = vmatpush1.msra.mxu0 0.0
    %3549 = vmatprep.subr.mxu0 0.0
    %3550 = vmatpush1.msra.mxu0 0.0
    %3551 = vmatprep.subr.mxu0 0.0
    %3552 = vmatpush1.msra.mxu0 0.0
    %3553 = vmatprep.subr.mxu0 0.0
    %3554 = vmatpush1.msra.mxu0 0.0
    %3555 = vmatprep.mubr.f32.mxu0 0.0
    %v3556 = vand.u32 %v56, 4294901760
    %v3557 = vsub.f32 %v56, %v3556
    %3558 = vmatmul.mubr.f32.gmra.mrb[0].mxu0 %v3557
    %v3559 = vpop.f32.mrb[0].mxu0
    %v3560 = vadd.f32 %v3478, %v3559
    %v3561 = vpop.f32.mrb[0].mxu0
    %3562 = vmatprep.mubr.f32.mxu0 0.0
    %v3563 = vand.u32 %v59, 4294901760
    %v3564 = vsub.f32 %v59, %v3563
    %3565 = vmatmul.mubr.f32.gmra.mrb[0].mxu0 %v3564
    %v3566 = vpop.f32.mrb[0].mxu0
    %v3567 = vadd.f32 %v3484, %v3566
    %v3568 = vpop.f32.mrb[0].mxu0
    %3569 = vdwg.mxu0
    %3570 = vmatprep.subr.mxu0 0.0
    %v3571 = vand.u32 %v3310, 4294901760
    %3572 = vmatpush1.msra.mxu0 %v3571
    %3573 = vmatprep.subr.mxu0 0.0
    %v3574 = vand.u32 %v3312, 4294901760
    %3575 = vmatpush1.msra.mxu0 %v3574
    %3576 = vmatprep.subr.mxu0 0.0
    %3577 = vmatpush1.msra.mxu0 0.0
    %3578 = vmatprep.subr.mxu0 0.0
    %3579 = vmatpush1.msra.mxu0 0.0
    %3580 = vmatprep.subr.mxu0 0.0
    %3581 = vmatpush1.msra.mxu0 0.0
    %3582 = vmatprep.subr.mxu0 0.0
    %3583 = vmatpush1.msra.mxu0 0.0
    %3584 = vmatprep.subr.mxu0 0.0
    %3585 = vmatpush1.msra.mxu0 0.0
    %3586 = vmatprep.subr.mxu0 0.0
    %3587 = vmatpush1.msra.mxu0 0.0
    %3588 = vmatprep.subr.mxu0 0.0
    %3589 = vmatpush1.msra.mxu0 0.0
    %3590 = vmatprep.subr.mxu0 0.0
    %3591 = vmatpush1.msra.mxu0 0.0
    %3592 = vmatprep.subr.mxu0 0.0
    %3593 = vmatpush1.msra.mxu0 0.0
    %3594 = vmatprep.subr.mxu0 0.0
    %3595 = vmatpush1.msra.mxu0 0.0
    %3596 = vmatprep.subr.mxu0 0.0
    %3597 = vmatpush1.msra.mxu0 0.0
    %3598 = vmatprep.subr.mxu0 0.0
    %3599 = vmatpush1.msra.mxu0 0.0
    %3600 = vmatprep.subr.mxu0 0.0
    %3601 = vmatpush1.msra.mxu0 0.0
    %3602 = vmatprep.subr.mxu0 0.0
    %3603 = vmatpush1.msra.mxu0 0.0
    %3604 = vmatprep.subr.mxu0 0.0
    %3605 = vmatpush1.msra.mxu0 0.0
    %3606 = vmatprep.subr.mxu0 0.0
    %3607 = vmatpush1.msra.mxu0 0.0
    %3608 = vmatprep.subr.mxu0 0.0
    %3609 = vmatpush1.msra.mxu0 0.0
    %3610 = vmatprep.subr.mxu0 0.0
    %3611 = vmatpush1.msra.mxu0 0.0
    %3612 = vmatprep.subr.mxu0 0.0
    %3613 = vmatpush1.msra.mxu0 0.0
    %3614 = vmatprep.subr.mxu0 0.0
    %3615 = vmatpush1.msra.mxu0 0.0
    %3616 = vmatprep.subr.mxu0 0.0
    %3617 = vmatpush1.msra.mxu0 0.0
    %3618 = vmatprep.subr.mxu0 0.0
    %3619 = vmatpush1.msra.mxu0 0.0
    %3620 = vmatprep.subr.mxu0 0.0
    %3621 = vmatpush1.msra.mxu0 0.0
    %3622 = vmatprep.subr.mxu0 0.0
    %3623 = vmatpush1.msra.mxu0 0.0
    %3624 = vmatprep.subr.mxu0 0.0
    %3625 = vmatpush1.msra.mxu0 0.0
    %3626 = vmatprep.subr.mxu0 0.0
    %3627 = vmatpush1.msra.mxu0 0.0
    %3628 = vmatprep.subr.mxu0 0.0
    %3629 = vmatpush1.msra.mxu0 0.0
    %3630 = vmatprep.subr.mxu0 0.0
    %3631 = vmatpush1.msra.mxu0 0.0
    %3632 = vmatprep.subr.mxu0 0.0
    %3633 = vmatpush1.msra.mxu0 0.0
    %3634 = vmatprep.subr.mxu0 0.0
    %3635 = vmatpush1.msra.mxu0 0.0
    %3636 = vmatprep.mubr.f32.mxu0 0.0
    %v3637 = vand.u32 %v56, 4294901760
    %v3638 = vsub.f32 %v56, %v3637
    %v3639 = vand.u32 %v3638, 4294901760
    %3640 = vmatmul.mubr.f32.gmra.mrb[0].mxu0 %v3639
    %v3641 = vpop.f32.mrb[0].mxu0
    %v3642 = vadd.f32 %v3560, %v3641
    %v3643 = vpop.f32.mrb[0].mxu0
    %3644 = vmatprep.mubr.f32.mxu0 0.0
    %v3645 = vand.u32 %v59, 4294901760
    %v3646 = vsub.f32 %v59, %v3645
    %v3647 = vand.u32 %v3646, 4294901760
    %3648 = vmatmul.mubr.f32.gmra.mrb[0].mxu0 %v3647
    %v3649 = vpop.f32.mrb[0].mxu0
    %v3650 = vadd.f32 %v3567, %v3649
    %v3651 = vpop.f32.mrb[0].mxu0
    %3652 = vdwg.mxu0
    %3653 = vmatprep.subr.mxu0 0.0
    %v3654 = vand.u32 %v3310, 4294901760
    %v3655 = vsub.f32 %v3310, %v3654
    %v3656 = vand.u32 %v3655, 4294901760
    %3657 = vmatpush1.msra.mxu0 %v3656
    %3658 = vmatprep.subr.mxu0 0.0
    %v3659 = vand.u32 %v3312, 4294901760
    %v3660 = vsub.f32 %v3312, %v3659
    %v3661 = vand.u32 %v3660, 4294901760
    %3662 = vmatpush1.msra.mxu0 %v3661
    %3663 = vmatprep.subr.mxu0 0.0
    %3664 = vmatpush1.msra.mxu0 0.0
    %3665 = vmatprep.subr.mxu0 0.0
    %3666 = vmatpush1.msra.mxu0 0.0
    %3667 = vmatprep.subr.mxu0 0.0
    %3668 = vmatpush1.msra.mxu0 0.0
    %3669 = vmatprep.subr.mxu0 0.0
    %3670 = vmatpush1.msra.mxu0 0.0
    %3671 = vmatprep.subr.mxu0 0.0
    %3672 = vmatpush1.msra.mxu0 0.0
    %3673 = vmatprep.subr.mxu0 0.0
    %3674 = vmatpush1.msra.mxu0 0.0
    %3675 = vmatprep.subr.mxu0 0.0
    %3676 = vmatpush1.msra.mxu0 0.0
    %3677 = vmatprep.subr.mxu0 0.0
    %3678 = vmatpush1.msra.mxu0 0.0
    %3679 = vmatprep.subr.mxu0 0.0
    %3680 = vmatpush1.msra.mxu0 0.0
    %3681 = vmatprep.subr.mxu0 0.0
    %3682 = vmatpush1.msra.mxu0 0.0
    %3683 = vmatprep.subr.mxu0 0.0
    %3684 = vmatpush1.msra.mxu0 0.0
    %3685 = vmatprep.subr.mxu0 0.0
    %3686 = vmatpush1.msra.mxu0 0.0
    %3687 = vmatprep.subr.mxu0 0.0
    %3688 = vmatpush1.msra.mxu0 0.0
    %3689 = vmatprep.subr.mxu0 0.0
    %3690 = vmatpush1.msra.mxu0 0.0
    %3691 = vmatprep.subr.mxu0 0.0
    %3692 = vmatpush1.msra.mxu0 0.0
    %3693 = vmatprep.subr.mxu0 0.0
    %3694 = vmatpush1.msra.mxu0 0.0
    %3695 = vmatprep.subr.mxu0 0.0
    %3696 = vmatpush1.msra.mxu0 0.0
    %3697 = vmatprep.subr.mxu0 0.0
    %3698 = vmatpush1.msra.mxu0 0.0
    %3699 = vmatprep.subr.mxu0 0.0
    %3700 = vmatpush1.msra.mxu0 0.0
    %3701 = vmatprep.subr.mxu0 0.0
    %3702 = vmatpush1.msra.mxu0 0.0
    %3703 = vmatprep.subr.mxu0 0.0
    %3704 = vmatpush1.msra.mxu0 0.0
    %3705 = vmatprep.subr.mxu0 0.0
    %3706 = vmatpush1.msra.mxu0 0.0
    %3707 = vmatprep.subr.mxu0 0.0
    %3708 = vmatpush1.msra.mxu0 0.0
    %3709 = vmatprep.subr.mxu0 0.0
    %3710 = vmatpush1.msra.mxu0 0.0
    %3711 = vmatprep.subr.mxu0 0.0
    %3712 = vmatpush1.msra.mxu0 0.0
    %3713 = vmatprep.subr.mxu0 0.0
    %3714 = vmatpush1.msra.mxu0 0.0
    %3715 = vmatprep.subr.mxu0 0.0
    %3716 = vmatpush1.msra.mxu0 0.0
    %3717 = vmatprep.subr.mxu0 0.0
    %3718 = vmatpush1.msra.mxu0 0.0
    %3719 = vmatprep.subr.mxu0 0.0
    %3720 = vmatpush1.msra.mxu0 0.0
    %3721 = vmatprep.subr.mxu0 0.0
    %3722 = vmatpush1.msra.mxu0 0.0
    %3723 = vmatprep.mubr.f32.mxu0 0.0
    %v3724 = vand.u32 %v56, 4294901760
    %3725 = vmatmul.mubr.f32.gmra.mrb[0].mxu0 %v3724
    %v3726 = vpop.f32.mrb[0].mxu0
    %v3727 = vadd.f32 %v3642, %v3726
    %v3728 = vpop.f32.mrb[0].mxu0
    %3729 = vmatprep.mubr.f32.mxu0 0.0
    %v3730 = vand.u32 %v59, 4294901760
    %3731 = vmatmul.mubr.f32.gmra.mrb[0].mxu0 %v3730
    %v3732 = vpop.f32.mrb[0].mxu0
    %v3733 = vadd.f32 %v3650, %v3732
    %v3734 = vpop.f32.mrb[0].mxu0
    %3735 = vdwg.mxu0
    %3736 = vmatprep.subr.mxu0 0.0
    %v3737 = vand.u32 %v3310, 4294901760
    %3738 = vmatpush1.msra.mxu0 %v3737
    %3739 = vmatprep.subr.mxu0 0.0
    %v3740 = vand.u32 %v3312, 4294901760
    %3741 = vmatpush1.msra.mxu0 %v3740
    %3742 = vmatprep.subr.mxu0 0.0
    %3743 = vmatpush1.msra.mxu0 0.0
    %3744 = vmatprep.subr.mxu0 0.0
    %3745 = vmatpush1.msra.mxu0 0.0
    %3746 = vmatprep.subr.mxu0 0.0
    %3747 = vmatpush1.msra.mxu0 0.0
    %3748 = vmatprep.subr.mxu0 0.0
    %3749 = vmatpush1.msra.mxu0 0.0
    %3750 = vmatprep.subr.mxu0 0.0
    %3751 = vmatpush1.msra.mxu0 0.0
    %3752 = vmatprep.subr.mxu0 0.0
    %3753 = vmatpush1.msra.mxu0 0.0
    %3754 = vmatprep.subr.mxu0 0.0
    %3755 = vmatpush1.msra.mxu0 0.0
    %3756 = vmatprep.subr.mxu0 0.0
    %3757 = vmatpush1.msra.mxu0 0.0
    %3758 = vmatprep.subr.mxu0 0.0
    %3759 = vmatpush1.msra.mxu0 0.0
    %3760 = vmatprep.subr.mxu0 0.0
    %3761 = vmatpush1.msra.mxu0 0.0
    %3762 = vmatprep.subr.mxu0 0.0
    %3763 = vmatpush1.msra.mxu0 0.0
    %3764 = vmatprep.subr.mxu0 0.0
    %3765 = vmatpush1.msra.mxu0 0.0
    %3766 = vmatprep.subr.mxu0 0.0
    %3767 = vmatpush1.msra.mxu0 0.0
    %3768 = vmatprep.subr.mxu0 0.0
    %3769 = vmatpush1.msra.mxu0 0.0
    %3770 = vmatprep.subr.mxu0 0.0
    %3771 = vmatpush1.msra.mxu0 0.0
    %3772 = vmatprep.subr.mxu0 0.0
    %3773 = vmatpush1.msra.mxu0 0.0
    %3774 = vmatprep.subr.mxu0 0.0
    %3775 = vmatpush1.msra.mxu0 0.0
    %3776 = vmatprep.subr.mxu0 0.0
    %3777 = vmatpush1.msra.mxu0 0.0
    %3778 = vmatprep.subr.mxu0 0.0
    %3779 = vmatpush1.msra.mxu0 0.0
    %3780 = vmatprep.subr.mxu0 0.0
    %3781 = vmatpush1.msra.mxu0 0.0
    %3782 = vmatprep.subr.mxu0 0.0
    %3783 = vmatpush1.msra.mxu0 0.0
    %3784 = vmatprep.subr.mxu0 0.0
    %3785 = vmatpush1.msra.mxu0 0.0
    %3786 = vmatprep.subr.mxu0 0.0
    %3787 = vmatpush1.msra.mxu0 0.0
    %3788 = vmatprep.subr.mxu0 0.0
    %3789 = vmatpush1.msra.mxu0 0.0
    %3790 = vmatprep.subr.mxu0 0.0
    %3791 = vmatpush1.msra.mxu0 0.0
    %3792 = vmatprep.subr.mxu0 0.0
    %3793 = vmatpush1.msra.mxu0 0.0
    %3794 = vmatprep.subr.mxu0 0.0
    %3795 = vmatpush1.msra.mxu0 0.0
    %3796 = vmatprep.subr.mxu0 0.0
    %3797 = vmatpush1.msra.mxu0 0.0
    %3798 = vmatprep.subr.mxu0 0.0
    %3799 = vmatpush1.msra.mxu0 0.0
    %3800 = vmatprep.subr.mxu0 0.0
    %3801 = vmatpush1.msra.mxu0 0.0
    %3802 = vmatprep.mubr.f32.mxu0 0.0
    %v3803 = vand.u32 %v56, 4294901760
    %3804 = vmatmul.mubr.f32.gmra.mrb[0].mxu0 %v3803
    %v3805 = vpop.f32.mrb[0].mxu0
    %v3806 = vadd.f32 %v3727, %v3805
    %v3807 = vpop.f32.mrb[0].mxu0
    %3808 = vmatprep.mubr.f32.mxu0 0.0
    %v3809 = vand.u32 %v59, 4294901760
    %3810 = vmatmul.mubr.f32.gmra.mrb[0].mxu0 %v3809
    %v3811 = vpop.f32.mrb[0].mxu0
    %v3812 = vadd.f32 %v3733, %v3811
    %v3813 = vpop.f32.mrb[0].mxu0
    %3814 = vdwg.mxu0
    %v3815 = vlog2.pop %v3806
    %v3816 = vmul.f32 %v3815, 0.6931472
    %v3817 = vlog2.pop %v3812
    %v3818 = vmul.f32 %v3817, 0.6931472
    %v3819 = vadd.f32 %v3816, %v3306
    %v3820 = vadd.f32 %v3818, %v3306
    %v3821 = vadd.f32 %v3819, %v3294
    %v3822 = vadd.f32 %v3820, %v3295
    %v3823 = vsel %vm3297, 1, 0
    %v3824 = vlaneseq
    %v3825 = vshrl.u32 %v3824, 7
    %v3826 = vsub.s32 0, %v3825
    %v3827 = vrot.slane %v3823, %v3826
    %vm3828 = vcmp.eq.s32.totalorder %v3827, 1
    %v3829 = vsel %vm3828, %v3291, %v3821
    %v3830 = vsel %vm3828, %v3292, %v3822
    %3831 = vst.msk [vmem:[#allocation2] sm:$0xff] %vm38, %v3829
    %3832 = vst.msk [vmem:[#allocation2 + $0x8] sm:$0xff] %vm38, %v3830
    %v3833 = vld [vmem:[#allocation2] sm:$0xff]
    %v3834 = vld [vmem:[#allocation2 + $0x8] sm:$0xff]
    %s3835 = scalar_lea.vmem %s1, 112
    %v3836 = vld [vmem:[%s3835] sm:$0xff]
    %v3837 = vld [vmem:[%s3835 + $0x8] sm:$0xff]
    %v3838 = vld [vmem:[%s2 + $0x7] sm:$0x1]
    %vm3839 = vcmp.gt.f32.partialorder %v3838, 0.5
    %v3840 = vsel %vm38, %v3833, -inf
    %v3841 = vsel %vm38, %v3834, -inf
    %v3842 = vmax.f32 %v3840, %v3841
    %v3843 = vrot.slane %v3842, 4
    %v3844 = vmax.f32 %v3842, %v3843
    %v3845 = vrot.slane %v3844, 2
    %v3846 = vmax.f32 %v3844, %v3845
    %v3847 = vrot.slane %v3846, 1
    %v3848 = vmax.f32 %v3846, %v3847
    %v3849 = vsub.f32 %v3833, %v3848
    %v3850 = vsub.f32 %v3834, %v3848
    %v3851 = vmul.f32 %v3849, 1.442695
    %v3852 = vpow.pop %v3851
    %v3853 = vmul.f32 %v3850, 1.442695
    %v3854 = vpow.pop %v3853
    %3855 = vmatprep.subr.mxu0 0.0
    %v3856 = vand.u32 %v3852, 4294901760
    %3857 = vmatpush1.msra.mxu0 %v3856
    %3858 = vmatprep.subr.mxu0 0.0
    %v3859 = vand.u32 %v3854, 4294901760
    %3860 = vmatpush1.msra.mxu0 %v3859
    %3861 = vmatprep.subr.mxu0 0.0
    %3862 = vmatpush1.msra.mxu0 0.0
    %3863 = vmatprep.subr.mxu0 0.0
    %3864 = vmatpush1.msra.mxu0 0.0
    %3865 = vmatprep.subr.mxu0 0.0
    %3866 = vmatpush1.msra.mxu0 0.0
    %3867 = vmatprep.subr.mxu0 0.0
    %3868 = vmatpush1.msra.mxu0 0.0
    %3869 = vmatprep.subr.mxu0 0.0
    %3870 = vmatpush1.msra.mxu0 0.0
    %3871 = vmatprep.subr.mxu0 0.0
    %3872 = vmatpush1.msra.mxu0 0.0
    %3873 = vmatprep.subr.mxu0 0.0
    %3874 = vmatpush1.msra.mxu0 0.0
    %3875 = vmatprep.subr.mxu0 0.0
    %3876 = vmatpush1.msra.mxu0 0.0
    %3877 = vmatprep.subr.mxu0 0.0
    %3878 = vmatpush1.msra.mxu0 0.0
    %3879 = vmatprep.subr.mxu0 0.0
    %3880 = vmatpush1.msra.mxu0 0.0
    %3881 = vmatprep.subr.mxu0 0.0
    %3882 = vmatpush1.msra.mxu0 0.0
    %3883 = vmatprep.subr.mxu0 0.0
    %3884 = vmatpush1.msra.mxu0 0.0
    %3885 = vmatprep.subr.mxu0 0.0
    %3886 = vmatpush1.msra.mxu0 0.0
    %3887 = vmatprep.subr.mxu0 0.0
    %3888 = vmatpush1.msra.mxu0 0.0
    %3889 = vmatprep.subr.mxu0 0.0
    %3890 = vmatpush1.msra.mxu0 0.0
    %3891 = vmatprep.subr.mxu0 0.0
    %3892 = vmatpush1.msra.mxu0 0.0
    %3893 = vmatprep.subr.mxu0 0.0
    %3894 = vmatpush1.msra.mxu0 0.0
    %3895 = vmatprep.subr.mxu0 0.0
    %3896 = vmatpush1.msra.mxu0 0.0
    %3897 = vmatprep.subr.mxu0 0.0
    %3898 = vmatpush1.msra.mxu0 0.0
    %3899 = vmatprep.subr.mxu0 0.0
    %3900 = vmatpush1.msra.mxu0 0.0
    %3901 = vmatprep.subr.mxu0 0.0
    %3902 = vmatpush1.msra.mxu0 0.0
    %3903 = vmatprep.subr.mxu0 0.0
    %3904 = vmatpush1.msra.mxu0 0.0
    %3905 = vmatprep.subr.mxu0 0.0
    %3906 = vmatpush1.msra.mxu0 0.0
    %3907 = vmatprep.subr.mxu0 0.0
    %3908 = vmatpush1.msra.mxu0 0.0
    %3909 = vmatprep.subr.mxu0 0.0
    %3910 = vmatpush1.msra.mxu0 0.0
    %3911 = vmatprep.subr.mxu0 0.0
    %3912 = vmatpush1.msra.mxu0 0.0
    %3913 = vmatprep.subr.mxu0 0.0
    %3914 = vmatpush1.msra.mxu0 0.0
    %3915 = vmatprep.subr.mxu0 0.0
    %3916 = vmatpush1.msra.mxu0 0.0
    %3917 = vmatprep.subr.mxu0 0.0
    %3918 = vmatpush1.msra.mxu0 0.0
    %3919 = vmatprep.subr.mxu0 0.0
    %3920 = vmatpush1.msra.mxu0 0.0
    %3921 = vmatprep.mubr.f32.mxu0 0.0
    %v3922 = vand.u32 %v56, 4294901760
    %v3923 = vsub.f32 %v56, %v3922
    %v3924 = vand.u32 %v3923, 4294901760
    %v3925 = vsub.f32 %v3923, %v3924
    %v3926 = vand.u32 %v3925, 4294901760
    %3927 = vmatmul.mubr.f32.gmra.mrb[0].mxu0 %v3926
    %v3928 = vpop.f32.mrb[0].mxu0
    %v3929 = vadd.f32 0.0, %v3928
    %v3930 = vpop.f32.mrb[0].mxu0
    %3931 = vmatprep.mubr.f32.mxu0 0.0
    %v3932 = vand.u32 %v59, 4294901760
    %v3933 = vsub.f32 %v59, %v3932
    %v3934 = vand.u32 %v3933, 4294901760
    %v3935 = vsub.f32 %v3933, %v3934
    %v3936 = vand.u32 %v3935, 4294901760
    %3937 = vmatmul.mubr.f32.gmra.mrb[0].mxu0 %v3936
    %v3938 = vpop.f32.mrb[0].mxu0
    %v3939 = vadd.f32 0.0, %v3938
    %v3940 = vpop.f32.mrb[0].mxu0
    %3941 = vdwg.mxu0
    %3942 = vmatprep.subr.mxu0 0.0
    %v3943 = vand.u32 %v3852, 4294901760
    %v3944 = vsub.f32 %v3852, %v3943
    %v3945 = vand.u32 %v3944, 4294901760
    %v3946 = vsub.f32 %v3944, %v3945
    %v3947 = vand.u32 %v3946, 4294901760
    %3948 = vmatpush1.msra.mxu0 %v3947
    %3949 = vmatprep.subr.mxu0 0.0
    %v3950 = vand.u32 %v3854, 4294901760
    %v3951 = vsub.f32 %v3854, %v3950
    %v3952 = vand.u32 %v3951, 4294901760
    %v3953 = vsub.f32 %v3951, %v3952
    %v3954 = vand.u32 %v3953, 4294901760
    %3955 = vmatpush1.msra.mxu0 %v3954
    %3956 = vmatprep.subr.mxu0 0.0
    %3957 = vmatpush1.msra.mxu0 0.0
    %3958 = vmatprep.subr.mxu0 0.0
    %3959 = vmatpush1.msra.mxu0 0.0
    %3960 = vmatprep.subr.mxu0 0.0
    %3961 = vmatpush1.msra.mxu0 0.0
    %3962 = vmatprep.subr.mxu0 0.0
    %3963 = vmatpush1.msra.mxu0 0.0
    %3964 = vmatprep.subr.mxu0 0.0
    %3965 = vmatpush1.msra.mxu0 0.0
    %3966 = vmatprep.subr.mxu0 0.0
    %3967 = vmatpush1.msra.mxu0 0.0
    %3968 = vmatprep.subr.mxu0 0.0
    %3969 = vmatpush1.msra.mxu0 0.0
    %3970 = vmatprep.subr.mxu0 0.0
    %3971 = vmatpush1.msra.mxu0 0.0
    %3972 = vmatprep.subr.mxu0 0.0
    %3973 = vmatpush1.msra.mxu0 0.0
    %3974 = vmatprep.subr.mxu0 0.0
    %3975 = vmatpush1.msra.mxu0 0.0
    %3976 = vmatprep.subr.mxu0 0.0
    %3977 = vmatpush1.msra.mxu0 0.0
    %3978 = vmatprep.subr.mxu0 0.0
    %3979 = vmatpush1.msra.mxu0 0.0
    %3980 = vmatprep.subr.mxu0 0.0
    %3981 = vmatpush1.msra.mxu0 0.0
    %3982 = vmatprep.subr.mxu0 0.0
    %3983 = vmatpush1.msra.mxu0 0.0
    %3984 = vmatprep.subr.mxu0 0.0
    %3985 = vmatpush1.msra.mxu0 0.0
    %3986 = vmatprep.subr.mxu0 0.0
    %3987 = vmatpush1.msra.mxu0 0.0
    %3988 = vmatprep.subr.mxu0 0.0
    %3989 = vmatpush1.msra.mxu0 0.0
    %3990 = vmatprep.subr.mxu0 0.0
    %3991 = vmatpush1.msra.mxu0 0.0
    %3992 = vmatprep.subr.mxu0 0.0
    %3993 = vmatpush1.msra.mxu0 0.0
    %3994 = vmatprep.subr.mxu0 0.0
    %3995 = vmatpush1.msra.mxu0 0.0
    %3996 = vmatprep.subr.mxu0 0.0
    %3997 = vmatpush1.msra.mxu0 0.0
    %3998 = vmatprep.subr.mxu0 0.0
    %3999 = vmatpush1.msra.mxu0 0.0
    %4000 = vmatprep.subr.mxu0 0.0
    %4001 = vmatpush1.msra.mxu0 0.0
    %4002 = vmatprep.subr.mxu0 0.0
    %4003 = vmatpush1.msra.mxu0 0.0
    %4004 = vmatprep.subr.mxu0 0.0
    %4005 = vmatpush1.msra.mxu0 0.0
    %4006 = vmatprep.subr.mxu0 0.0
    %4007 = vmatpush1.msra.mxu0 0.0
    %4008 = vmatprep.subr.mxu0 0.0
    %4009 = vmatpush1.msra.mxu0 0.0
    %4010 = vmatprep.subr.mxu0 0.0
    %4011 = vmatpush1.msra.mxu0 0.0
    %4012 = vmatprep.subr.mxu0 0.0
    %4013 = vmatpush1.msra.mxu0 0.0
    %4014 = vmatprep.subr.mxu0 0.0
    %4015 = vmatpush1.msra.mxu0 0.0
    %4016 = vmatprep.mubr.f32.mxu0 0.0
    %v4017 = vand.u32 %v56, 4294901760
    %4018 = vmatmul.mubr.f32.gmra.mrb[0].mxu0 %v4017
    %v4019 = vpop.f32.mrb[0].mxu0
    %v4020 = vadd.f32 %v3929, %v4019
    %v4021 = vpop.f32.mrb[0].mxu0
    %4022 = vmatprep.mubr.f32.mxu0 0.0
    %v4023 = vand.u32 %v59, 4294901760
    %4024 = vmatmul.mubr.f32.gmra.mrb[0].mxu0 %v4023
    %v4025 = vpop.f32.mrb[0].mxu0
    %v4026 = vadd.f32 %v3939, %v4025
    %v4027 = vpop.f32.mrb[0].mxu0
    %4028 = vdwg.mxu0
    %4029 = vmatprep.subr.mxu0 0.0
    %v4030 = vand.u32 %v3852, 4294901760
    %v4031 = vsub.f32 %v3852, %v4030
    %4032 = vmatpush1.msra.mxu0 %v4031
    %4033 = vmatprep.subr.mxu0 0.0
    %v4034 = vand.u32 %v3854, 4294901760
    %v4035 = vsub.f32 %v3854, %v4034
    %4036 = vmatpush1.msra.mxu0 %v4035
    %4037 = vmatprep.subr.mxu0 0.0
    %4038 = vmatpush1.msra.mxu0 0.0
    %4039 = vmatprep.subr.mxu0 0.0
    %4040 = vmatpush1.msra.mxu0 0.0
    %4041 = vmatprep.subr.mxu0 0.0
    %4042 = vmatpush1.msra.mxu0 0.0
    %4043 = vmatprep.subr.mxu0 0.0
    %4044 = vmatpush1.msra.mxu0 0.0
    %4045 = vmatprep.subr.mxu0 0.0
    %4046 = vmatpush1.msra.mxu0 0.0
    %4047 = vmatprep.subr.mxu0 0.0
    %4048 = vmatpush1.msra.mxu0 0.0
    %4049 = vmatprep.subr.mxu0 0.0
    %4050 = vmatpush1.msra.mxu0 0.0
    %4051 = vmatprep.subr.mxu0 0.0
    %4052 = vmatpush1.msra.mxu0 0.0
    %4053 = vmatprep.subr.mxu0 0.0
    %4054 = vmatpush1.msra.mxu0 0.0
    %4055 = vmatprep.subr.mxu0 0.0
    %4056 = vmatpush1.msra.mxu0 0.0
    %4057 = vmatprep.subr.mxu0 0.0
    %4058 = vmatpush1.msra.mxu0 0.0
    %4059 = vmatprep.subr.mxu0 0.0
    %4060 = vmatpush1.msra.mxu0 0.0
    %4061 = vmatprep.subr.mxu0 0.0
    %4062 = vmatpush1.msra.mxu0 0.0
    %4063 = vmatprep.subr.mxu0 0.0
    %4064 = vmatpush1.msra.mxu0 0.0
    %4065 = vmatprep.subr.mxu0 0.0
    %4066 = vmatpush1.msra.mxu0 0.0
    %4067 = vmatprep.subr.mxu0 0.0
    %4068 = vmatpush1.msra.mxu0 0.0
    %4069 = vmatprep.subr.mxu0 0.0
    %4070 = vmatpush1.msra.mxu0 0.0
    %4071 = vmatprep.subr.mxu0 0.0
    %4072 = vmatpush1.msra.mxu0 0.0
    %4073 = vmatprep.subr.mxu0 0.0
    %4074 = vmatpush1.msra.mxu0 0.0
    %4075 = vmatprep.subr.mxu0 0.0
    %4076 = vmatpush1.msra.mxu0 0.0
    %4077 = vmatprep.subr.mxu0 0.0
    %4078 = vmatpush1.msra.mxu0 0.0
    %4079 = vmatprep.subr.mxu0 0.0
    %4080 = vmatpush1.msra.mxu0 0.0
    %4081 = vmatprep.subr.mxu0 0.0
    %4082 = vmatpush1.msra.mxu0 0.0
    %4083 = vmatprep.subr.mxu0 0.0
    %4084 = vmatpush1.msra.mxu0 0.0
    %4085 = vmatprep.subr.mxu0 0.0
    %4086 = vmatpush1.msra.mxu0 0.0
    %4087 = vmatprep.subr.mxu0 0.0
    %4088 = vmatpush1.msra.mxu0 0.0
    %4089 = vmatprep.subr.mxu0 0.0
    %4090 = vmatpush1.msra.mxu0 0.0
    %4091 = vmatprep.subr.mxu0 0.0
    %4092 = vmatpush1.msra.mxu0 0.0
    %4093 = vmatprep.subr.mxu0 0.0
    %4094 = vmatpush1.msra.mxu0 0.0
    %4095 = vmatprep.subr.mxu0 0.0
    %4096 = vmatpush1.msra.mxu0 0.0
    %4097 = vmatprep.mubr.f32.mxu0 0.0
    %v4098 = vand.u32 %v56, 4294901760
    %v4099 = vsub.f32 %v56, %v4098
    %4100 = vmatmul.mubr.f32.gmra.mrb[0].mxu0 %v4099
    %v4101 = vpop.f32.mrb[0].mxu0
    %v4102 = vadd.f32 %v4020, %v4101
    %v4103 = vpop.f32.mrb[0].mxu0
    %4104 = vmatprep.mubr.f32.mxu0 0.0
    %v4105 = vand.u32 %v59, 4294901760
    %v4106 = vsub.f32 %v59, %v4105
    %4107 = vmatmul.mubr.f32.gmra.mrb[0].mxu0 %v4106
    %v4108 = vpop.f32.mrb[0].mxu0
    %v4109 = vadd.f32 %v4026, %v4108
    %v4110 = vpop.f32.mrb[0].mxu0
    %4111 = vdwg.mxu0
    %4112 = vmatprep.subr.mxu0 0.0
    %v4113 = vand.u32 %v3852, 4294901760
    %4114 = vmatpush1.msra.mxu0 %v4113
    %4115 = vmatprep.subr.mxu0 0.0
    %v4116 = vand.u32 %v3854, 4294901760
    %4117 = vmatpush1.msra.mxu0 %v4116
    %4118 = vmatprep.subr.mxu0 0.0
    %4119 = vmatpush1.msra.mxu0 0.0
    %4120 = vmatprep.subr.mxu0 0.0
    %4121 = vmatpush1.msra.mxu0 0.0
    %4122 = vmatprep.subr.mxu0 0.0
    %4123 = vmatpush1.msra.mxu0 0.0
    %4124 = vmatprep.subr.mxu0 0.0
    %4125 = vmatpush1.msra.mxu0 0.0
    %4126 = vmatprep.subr.mxu0 0.0
    %4127 = vmatpush1.msra.mxu0 0.0
    %4128 = vmatprep.subr.mxu0 0.0
    %4129 = vmatpush1.msra.mxu0 0.0
    %4130 = vmatprep.subr.mxu0 0.0
    %4131 = vmatpush1.msra.mxu0 0.0
    %4132 = vmatprep.subr.mxu0 0.0
    %4133 = vmatpush1.msra.mxu0 0.0
    %4134 = vmatprep.subr.mxu0 0.0
    %4135 = vmatpush1.msra.mxu0 0.0
    %4136 = vmatprep.subr.mxu0 0.0
    %4137 = vmatpush1.msra.mxu0 0.0
    %4138 = vmatprep.subr.mxu0 0.0
    %4139 = vmatpush1.msra.mxu0 0.0
    %4140 = vmatprep.subr.mxu0 0.0
    %4141 = vmatpush1.msra.mxu0 0.0
    %4142 = vmatprep.subr.mxu0 0.0
    %4143 = vmatpush1.msra.mxu0 0.0
    %4144 = vmatprep.subr.mxu0 0.0
    %4145 = vmatpush1.msra.mxu0 0.0
    %4146 = vmatprep.subr.mxu0 0.0
    %4147 = vmatpush1.msra.mxu0 0.0
    %4148 = vmatprep.subr.mxu0 0.0
    %4149 = vmatpush1.msra.mxu0 0.0
    %4150 = vmatprep.subr.mxu0 0.0
    %4151 = vmatpush1.msra.mxu0 0.0
    %4152 = vmatprep.subr.mxu0 0.0
    %4153 = vmatpush1.msra.mxu0 0.0
    %4154 = vmatprep.subr.mxu0 0.0
    %4155 = vmatpush1.msra.mxu0 0.0
    %4156 = vmatprep.subr.mxu0 0.0
    %4157 = vmatpush1.msra.mxu0 0.0
    %4158 = vmatprep.subr.mxu0 0.0
    %4159 = vmatpush1.msra.mxu0 0.0
    %4160 = vmatprep.subr.mxu0 0.0
    %4161 = vmatpush1.msra.mxu0 0.0
    %4162 = vmatprep.subr.mxu0 0.0
    %4163 = vmatpush1.msra.mxu0 0.0
    %4164 = vmatprep.subr.mxu0 0.0
    %4165 = vmatpush1.msra.mxu0 0.0
    %4166 = vmatprep.subr.mxu0 0.0
    %4167 = vmatpush1.msra.mxu0 0.0
    %4168 = vmatprep.subr.mxu0 0.0
    %4169 = vmatpush1.msra.mxu0 0.0
    %4170 = vmatprep.subr.mxu0 0.0
    %4171 = vmatpush1.msra.mxu0 0.0
    %4172 = vmatprep.subr.mxu0 0.0
    %4173 = vmatpush1.msra.mxu0 0.0
    %4174 = vmatprep.subr.mxu0 0.0
    %4175 = vmatpush1.msra.mxu0 0.0
    %4176 = vmatprep.subr.mxu0 0.0
    %4177 = vmatpush1.msra.mxu0 0.0
    %4178 = vmatprep.mubr.f32.mxu0 0.0
    %v4179 = vand.u32 %v56, 4294901760
    %v4180 = vsub.f32 %v56, %v4179
    %v4181 = vand.u32 %v4180, 4294901760
    %4182 = vmatmul.mubr.f32.gmra.mrb[0].mxu0 %v4181
    %v4183 = vpop.f32.mrb[0].mxu0
    %v4184 = vadd.f32 %v4102, %v4183
    %v4185 = vpop.f32.mrb[0].mxu0
    %4186 = vmatprep.mubr.f32.mxu0 0.0
    %v4187 = vand.u32 %v59, 4294901760
    %v4188 = vsub.f32 %v59, %v4187
    %v4189 = vand.u32 %v4188, 4294901760
    %4190 = vmatmul.mubr.f32.gmra.mrb[0].mxu0 %v4189
    %v4191 = vpop.f32.mrb[0].mxu0
    %v4192 = vadd.f32 %v4109, %v4191
    %v4193 = vpop.f32.mrb[0].mxu0
    %4194 = vdwg.mxu0
    %4195 = vmatprep.subr.mxu0 0.0
    %v4196 = vand.u32 %v3852, 4294901760
    %v4197 = vsub.f32 %v3852, %v4196
    %v4198 = vand.u32 %v4197, 4294901760
    %4199 = vmatpush1.msra.mxu0 %v4198
    %4200 = vmatprep.subr.mxu0 0.0
    %v4201 = vand.u32 %v3854, 4294901760
    %v4202 = vsub.f32 %v3854, %v4201
    %v4203 = vand.u32 %v4202, 4294901760
    %4204 = vmatpush1.msra.mxu0 %v4203
    %4205 = vmatprep.subr.mxu0 0.0
    %4206 = vmatpush1.msra.mxu0 0.0
    %4207 = vmatprep.subr.mxu0 0.0
    %4208 = vmatpush1.msra.mxu0 0.0
    %4209 = vmatprep.subr.mxu0 0.0
    %4210 = vmatpush1.msra.mxu0 0.0
    %4211 = vmatprep.subr.mxu0 0.0
    %4212 = vmatpush1.msra.mxu0 0.0
    %4213 = vmatprep.subr.mxu0 0.0
    %4214 = vmatpush1.msra.mxu0 0.0
    %4215 = vmatprep.subr.mxu0 0.0
    %4216 = vmatpush1.msra.mxu0 0.0
    %4217 = vmatprep.subr.mxu0 0.0
    %4218 = vmatpush1.msra.mxu0 0.0
    %4219 = vmatprep.subr.mxu0 0.0
    %4220 = vmatpush1.msra.mxu0 0.0
    %4221 = vmatprep.subr.mxu0 0.0
    %4222 = vmatpush1.msra.mxu0 0.0
    %4223 = vmatprep.subr.mxu0 0.0
    %4224 = vmatpush1.msra.mxu0 0.0
    %4225 = vmatprep.subr.mxu0 0.0
    %4226 = vmatpush1.msra.mxu0 0.0
    %4227 = vmatprep.subr.mxu0 0.0
    %4228 = vmatpush1.msra.mxu0 0.0
    %4229 = vmatprep.subr.mxu0 0.0
    %4230 = vmatpush1.msra.mxu0 0.0
    %4231 = vmatprep.subr.mxu0 0.0
    %4232 = vmatpush1.msra.mxu0 0.0
    %4233 = vmatprep.subr.mxu0 0.0
    %4234 = vmatpush1.msra.mxu0 0.0
    %4235 = vmatprep.subr.mxu0 0.0
    %4236 = vmatpush1.msra.mxu0 0.0
    %4237 = vmatprep.subr.mxu0 0.0
    %4238 = vmatpush1.msra.mxu0 0.0
    %4239 = vmatprep.subr.mxu0 0.0
    %4240 = vmatpush1.msra.mxu0 0.0
    %4241 = vmatprep.subr.mxu0 0.0
    %4242 = vmatpush1.msra.mxu0 0.0
    %4243 = vmatprep.subr.mxu0 0.0
    %4244 = vmatpush1.msra.mxu0 0.0
    %4245 = vmatprep.subr.mxu0 0.0
    %4246 = vmatpush1.msra.mxu0 0.0
    %4247 = vmatprep.subr.mxu0 0.0
    %4248 = vmatpush1.msra.mxu0 0.0
    %4249 = vmatprep.subr.mxu0 0.0
    %4250 = vmatpush1.msra.mxu0 0.0
    %4251 = vmatprep.subr.mxu0 0.0
    %4252 = vmatpush1.msra.mxu0 0.0
    %4253 = vmatprep.subr.mxu0 0.0
    %4254 = vmatpush1.msra.mxu0 0.0
    %4255 = vmatprep.subr.mxu0 0.0
    %4256 = vmatpush1.msra.mxu0 0.0
    %4257 = vmatprep.subr.mxu0 0.0
    %4258 = vmatpush1.msra.mxu0 0.0
    %4259 = vmatprep.subr.mxu0 0.0
    %4260 = vmatpush1.msra.mxu0 0.0
    %4261 = vmatprep.subr.mxu0 0.0
    %4262 = vmatpush1.msra.mxu0 0.0
    %4263 = vmatprep.subr.mxu0 0.0
    %4264 = vmatpush1.msra.mxu0 0.0
    %4265 = vmatprep.mubr.f32.mxu0 0.0
    %v4266 = vand.u32 %v56, 4294901760
    %4267 = vmatmul.mubr.f32.gmra.mrb[0].mxu0 %v4266
    %v4268 = vpop.f32.mrb[0].mxu0
    %v4269 = vadd.f32 %v4184, %v4268
    %v4270 = vpop.f32.mrb[0].mxu0
    %4271 = vmatprep.mubr.f32.mxu0 0.0
    %v4272 = vand.u32 %v59, 4294901760
    %4273 = vmatmul.mubr.f32.gmra.mrb[0].mxu0 %v4272
    %v4274 = vpop.f32.mrb[0].mxu0
    %v4275 = vadd.f32 %v4192, %v4274
    %v4276 = vpop.f32.mrb[0].mxu0
    %4277 = vdwg.mxu0
    %4278 = vmatprep.subr.mxu0 0.0
    %v4279 = vand.u32 %v3852, 4294901760
    %4280 = vmatpush1.msra.mxu0 %v4279
    %4281 = vmatprep.subr.mxu0 0.0
    %v4282 = vand.u32 %v3854, 4294901760
    %4283 = vmatpush1.msra.mxu0 %v4282
    %4284 = vmatprep.subr.mxu0 0.0
    %4285 = vmatpush1.msra.mxu0 0.0
    %4286 = vmatprep.subr.mxu0 0.0
    %4287 = vmatpush1.msra.mxu0 0.0
    %4288 = vmatprep.subr.mxu0 0.0
    %4289 = vmatpush1.msra.mxu0 0.0
    %4290 = vmatprep.subr.mxu0 0.0
    %4291 = vmatpush1.msra.mxu0 0.0
    %4292 = vmatprep.subr.mxu0 0.0
    %4293 = vmatpush1.msra.mxu0 0.0
    %4294 = vmatprep.subr.mxu0 0.0
    %4295 = vmatpush1.msra.mxu0 0.0
    %4296 = vmatprep.subr.mxu0 0.0
    %4297 = vmatpush1.msra.mxu0 0.0
    %4298 = vmatprep.subr.mxu0 0.0
    %4299 = vmatpush1.msra.mxu0 0.0
    %4300 = vmatprep.subr.mxu0 0.0
    %4301 = vmatpush1.msra.mxu0 0.0
    %4302 = vmatprep.subr.mxu0 0.0
    %4303 = vmatpush1.msra.mxu0 0.0
    %4304 = vmatprep.subr.mxu0 0.0
    %4305 = vmatpush1.msra.mxu0 0.0
    %4306 = vmatprep.subr.mxu0 0.0
    %4307 = vmatpush1.msra.mxu0 0.0
    %4308 = vmatprep.subr.mxu0 0.0
    %4309 = vmatpush1.msra.mxu0 0.0
    %4310 = vmatprep.subr.mxu0 0.0
    %4311 = vmatpush1.msra.mxu0 0.0
    %4312 = vmatprep.subr.mxu0 0.0
    %4313 = vmatpush1.msra.mxu0 0.0
    %4314 = vmatprep.subr.mxu0 0.0
    %4315 = vmatpush1.msra.mxu0 0.0
    %4316 = vmatprep.subr.mxu0 0.0
    %4317 = vmatpush1.msra.mxu0 0.0
    %4318 = vmatprep.subr.mxu0 0.0
    %4319 = vmatpush1.msra.mxu0 0.0
    %4320 = vmatprep.subr.mxu0 0.0
    %4321 = vmatpush1.msra.mxu0 0.0
    %4322 = vmatprep.subr.mxu0 0.0
    %4323 = vmatpush1.msra.mxu0 0.0
    %4324 = vmatprep.subr.mxu0 0.0
    %4325 = vmatpush1.msra.mxu0 0.0
    %4326 = vmatprep.subr.mxu0 0.0
    %4327 = vmatpush1.msra.mxu0 0.0
    %4328 = vmatprep.subr.mxu0 0.0
    %4329 = vmatpush1.msra.mxu0 0.0
    %4330 = vmatprep.subr.mxu0 0.0
    %4331 = vmatpush1.msra.mxu0 0.0
    %4332 = vmatprep.subr.mxu0 0.0
    %4333 = vmatpush1.msra.mxu0 0.0
    %4334 = vmatprep.subr.mxu0 0.0
    %4335 = vmatpush1.msra.mxu0 0.0
    %4336 = vmatprep.subr.mxu0 0.0
    %4337 = vmatpush1.msra.mxu0 0.0
    %4338 = vmatprep.subr.mxu0 0.0
    %4339 = vmatpush1.msra.mxu0 0.0
    %4340 = vmatprep.subr.mxu0 0.0
    %4341 = vmatpush1.msra.mxu0 0.0
    %4342 = vmatprep.subr.mxu0 0.0
    %4343 = vmatpush1.msra.mxu0 0.0
    %4344 = vmatprep.mubr.f32.mxu0 0.0
    %v4345 = vand.u32 %v56, 4294901760
    %4346 = vmatmul.mubr.f32.gmra.mrb[0].mxu0 %v4345
    %v4347 = vpop.f32.mrb[0].mxu0
    %v4348 = vadd.f32 %v4269, %v4347
    %v4349 = vpop.f32.mrb[0].mxu0
    %4350 = vmatprep.mubr.f32.mxu0 0.0
    %v4351 = vand.u32 %v59, 4294901760
    %4352 = vmatmul.mubr.f32.gmra.mrb[0].mxu0 %v4351
    %v4353 = vpop.f32.mrb[0].mxu0
    %v4354 = vadd.f32 %v4275, %v4353
    %v4355 = vpop.f32.mrb[0].mxu0
    %4356 = vdwg.mxu0
    %v4357 = vlog2.pop %v4348
    %v4358 = vmul.f32 %v4357, 0.6931472
    %v4359 = vlog2.pop %v4354
    %v4360 = vmul.f32 %v4359, 0.6931472
    %v4361 = vadd.f32 %v4358, %v3848
    %v4362 = vadd.f32 %v4360, %v3848
    %v4363 = vadd.f32 %v4361, %v3836
    %v4364 = vadd.f32 %v4362, %v3837
    %v4365 = vsel %vm3839, 1, 0
    %v4366 = vlaneseq
    %v4367 = vshrl.u32 %v4366, 7
    %v4368 = vsub.s32 0, %v4367
    %v4369 = vrot.slane %v4365, %v4368
    %vm4370 = vcmp.eq.s32.totalorder %v4369, 1
    %v4371 = vsel %vm4370, %v3833, %v4363
    %v4372 = vsel %vm4370, %v3834, %v4364
    %4373 = vst.msk [vmem:[#allocation2] sm:$0xff] %vm38, %v4371
    %4374 = vst.msk [vmem:[#allocation2 + $0x8] sm:$0xff] %vm38, %v4372
    // Predicated region
    $region26: #{crf_nll.1} parent=1 // pred_check
      %p4375 = pneg %p21
    $region27: #{crf_nll.1} parent=1 // pred_check_branch
      %4377 = sbr.rel (%p4375) target = $region29
    $region28: #{crf_nll.1} parent=1 // pred_region
      %v4378 = vld [vmem:[#allocation2] sm:$0xff]
      %v4379 = vld [vmem:[#allocation2 + $0x8] sm:$0xff]
      %v4380 = vld [vmem:[%s4] sm:$0xff]
      %v4381 = vld [vmem:[%s4 + $0x8] sm:$0xff]
      %4383 = vset.pattern.permute.xlu0 0
      %4384 = vperm.xlu0 %4383, %v4380
      %v4385 = vpop.permute.xlu0 %4384
      %4388 = vset.pattern.permute.xlu0 0
      %4389 = vperm.xlu0 %4388, %v4381
      %v4390 = vpop.permute.xlu0 %4389
      %v4392 = vadd.f32 %v4378, %v4385
      %v4393 = vadd.f32 %v4379, %v4390
      %v4394 = vsel %vm38, %v4392, -inf
      %v4395 = vsel %vm38, %v4393, -inf
      %v4396 = vmax.f32 %v4394, %v4395
      %v4397 = vrot.slane %v4396, 4
      %v4398 = vmax.f32 %v4396, %v4397
      %v4399 = vrot.slane %v4398, 2
      %v4400 = vmax.f32 %v4398, %v4399
      %v4401 = vrot.slane %v4400, 1
      %v4402 = vmax.f32 %v4400, %v4401
      %v4403 = vsub.f32 %v4392, %v4402
      %v4404 = vsub.f32 %v4393, %v4402
      %v4405 = vmul.f32 %v4403, 1.442695
      %v4406 = vpow.pop %v4405
      %v4407 = vmul.f32 %v4404, 1.442695
      %v4408 = vpow.pop %v4407
      %v4409 = vsel %vm38, %v4406, 0.0
      %v4410 = vsel %vm38, %v4408, 0.0
      %v4411 = vadd.f32 %v4409, %v4410
      %v4412 = vrot.slane %v4411, 4
      %v4413 = vadd.f32 %v4411, %v4412
      %v4414 = vrot.slane %v4413, 2
      %v4415 = vadd.f32 %v4413, %v4414
      %v4416 = vrot.slane %v4415, 1
      %v4417 = vadd.f32 %v4415, %v4416
      %v4418 = vlog2.pop %v4417
      %v4419 = vmul.f32 %v4418, 0.6931472
      %v4420 = vadd.f32 %v4419, %v4402
      %v4421 = vld [vmem:[%s0] sm:$0x1]
      %v4422 = vsub.f32 %v4420, %v4421
      %vm4423 = vcmask 24576
      %4424 = vst.msk [vmem:[#allocation3] sm:$0x1] %vm4423, %v4422
    $region29: #{crf_nll.1} parent=1 // pred_fallthru
      _
    // Predicated region
    $region30: #{crf_nll.1} parent=1 // pred_check
      _
    $region31: #{crf_nll.1} parent=1 // pred_check_branch
      %4426 = sbr.rel (0) target = $region33
    $region32: #{crf_nll.1} parent=1 // pred_region
      %s4428 = ssub.s32 16, 16
      %4429 = vsyncadd [#allocation4], %s4428
      %s4431 = sshll.u32 [#allocation3], 4
      %s4432 = int_to_ptr.vmem [resolvable:$true] %s4431
      %4434 = dma.vmem_to_hbm [thread:$0]  %s4432, 16, %s5, [#allocation4]
    $region33: #{crf_nll.1} parent=1 // pred_fallthru
      _
    // Predicated region
    $region34: #{crf_nll.1} parent=1 // pred_check
      _
    $region35: #{crf_nll.1} parent=1 // pred_check_branch
      %4436 = sbr.rel (0) target = $region37
    $region36: #{crf_nll.1} parent=1 // pred_region
      %4437 = dma.done [#allocation4], 16
    $region37: #{crf_nll.1} parent=1 // pred_fallthru
      _
    %4438 = vsyncpa [#allocation4], 1

</llo_original>
